<compile_context>
chip_gen: v7x
topology: tpu7x:2x2x1
jax: 0.10.0
libtpu: 0.0.40
codegen_flags: <defaults>
</compile_context>

<pallas_src>
import functools

import jax
import jax.numpy as jnp
from jax import lax
from jax.experimental import pallas as pl
from jax.experimental.pallas import tpu as pltpu

_NEG_LARGE = -1e30   # finite "-inf": exp(m_prev - m_new) can never hit inf-inf = NaN


def _round_up(x, m):
    return (x + m - 1) // m * m


def _vmem_capacity_bytes():
    try:
        return int(pltpu.get_tpu_info().vmem_capacity_bytes)
    except Exception:
        return 64 << 20            # conservative fallback: v7x per-TensorCore VMEM


def _estimate_vmem_bytes(tile_n, din, hidden, attn_d, c):
    f4, b2 = 4, 2
    h_stream = 2 * tile_n * din * f4                      # double-buffered native-f32 h tiles
    araw_out = 2 * c * tile_n * f4                        # double-buffered A_raw block
    weights = 2 * ((din * hidden + 2 * hidden * attn_d + c * attn_d) * b2
                   + (hidden + 2 * attn_d + c) * f4)      # resident weights/biases
    temps = tile_n * (din * b2                            # h bf16
                      + hidden * (f4 + b2)                # x f32 + x bf16
                      + 2 * attn_d * f4                   # a, b
                      + attn_d * b2                       # gated
                      + 3 * c * f4)                       # scores / p / mask temps
    accum = 3 * c * (hidden + 2) * f4                     # resident output accumulators
    return h_stream + araw_out + weights + temps + accum


def _auto_tile_n(din, hidden, attn_d, c, capacity):
    """Largest tile whose estimated footprint fits the chip's VMEM with headroom."""
    budget = int(capacity * 0.72)
    for cand in (4096, 2048, 1024, 512, 256):
        if int(_estimate_vmem_bytes(cand, din, hidden, attn_d, c) * 1.2) <= budget:
            return cand
    return 256


def _vmem_limit_bytes(tile_n, din, hidden, attn_d, c, capacity):
    need = _estimate_vmem_bytes(tile_n, din, hidden, attn_d, c)
    return int(min(max(int(need * 1.4), 16 << 20), int(capacity * 0.75)))


def _clam_mb_kernel(h_ref, w1_ref, b1_ref, wa_ref, ba_ref, wb_ref, bb_ref,
                    wct_ref, bc_ref,
                    araw_ref, max_ref, den_ref, acc_ref,
                    *, n_total, tile_n, tiles_per_split, has_pad):
    i = pl.program_id(1)
    tile_idx = pl.program_id(0) * tiles_per_split + i
    off = tile_idx * tile_n

    # per-split online-softmax state lives in the (resident) output blocks
    @pl.when(i == 0)
    def _init():
        max_ref[...] = jnp.full_like(max_ref, _NEG_LARGE)
        den_ref[...] = jnp.zeros_like(den_ref)
        acc_ref[...] = jnp.zeros_like(acc_ref)

    # ---- in-kernel bf16 cast of the streamed (native dtype) h tile ----
    h_bf = h_ref[...].astype(jnp.bfloat16)
    if has_pad:
        # zero padded/OOB instance rows at the input (cheaper than masking x,
        # still guards against garbage in the OOB region of the last block)
        row = lax.broadcasted_iota(jnp.int32, (tile_n, 1), 0)
        h_bf = jnp.where(off + row < n_total, h_bf, 0).astype(jnp.bfloat16)

    # ---- fc: x = ReLU(h @ W1 + b1)  (Dropout = identity in eval) ----
    x = jnp.dot(h_bf, w1_ref[...], preferred_element_type=jnp.float32) + b1_ref[...]
    x = jnp.maximum(x, 0.0)
    x_bf = x.astype(jnp.bfloat16)

    # ---- gated attention (element-wise math in f32, MXU operands bf16) ----
    a = jnp.tanh(jnp.dot(x_bf, wa_ref[...],
                         preferred_element_type=jnp.float32) + ba_ref[...])
    b = jax.nn.sigmoid(jnp.dot(x_bf, wb_ref[...],
                               preferred_element_type=jnp.float32) + bb_ref[...])
    gated = (a * b).astype(jnp.bfloat16)                               # (T, D)

    # scores directly in (C, T) orientation: Wc (C, D) contracted against gated (T, D)
    scores = lax.dot_general(
        wct_ref[...], gated,
        dimension_numbers=(((1,), (1,)), ((), ())),
        preferred_element_type=jnp.float32) + bc_ref[...]              # (C, T) f32

    araw_ref[...] = scores                 # raw attention, lane-dense along N

    if has_pad:
        col = lax.broadcasted_iota(jnp.int32, scores.shape, 1)
        scores = jnp.where(off + col < n_total, scores, _NEG_LARGE)

    # ---- online softmax over instances + unnormalized M accumulation ----
    m_prev = max_ref[...]                                              # (C, 1)
    m_new = jnp.maximum(m_prev, jnp.max(scores, axis=1, keepdims=True))
    corr = jnp.exp(m_prev - m_new)
    p = jnp.exp(scores - m_new)                                        # (C, T) f32
    den_ref[...] = corr * den_ref[...] + jnp.sum(p, axis=1, keepdims=True)
    acc_ref[...] = corr * acc_ref[...] + jnp.dot(
        p.astype(jnp.bfloat16), x_bf, preferred_element_type=jnp.float32)
    max_ref[...] = m_new


def clam_mb_forward(h, params, *, tile_n=None, num_splits=2):
    n, din = h.shape
    hidden = params["w1"].shape[1]
    attn_d = params["wa"].shape[1]
    c = params["wct"].shape[0]

    capacity = _vmem_capacity_bytes()
    if tile_n is None:
        tile_n = _auto_tile_n(din, hidden, attn_d, c, capacity)
    tile_n = min(_round_up(tile_n, 128), _round_up(n, 128))

    num_tiles = -(-n // tile_n)
    splits = max(1, min(num_splits, num_tiles))          # dual-TC split of the N axis
    tiles_per_split = -(-num_tiles // splits)
    pad_n = splits * tiles_per_split * tile_n
    has_pad = pad_n > n
    grid = (splits, tiles_per_split)

    kernel = functools.partial(_clam_mb_kernel, n_total=n, tile_n=tile_n,
                               tiles_per_split=tiles_per_split, has_pad=has_pad)

    const = lambda p, i: (0, 0)
    last_blk = num_tiles - 1
    h_map = lambda p, i: (jnp.minimum(p * tiles_per_split + i, last_blk), 0)
    araw_map = lambda p, i: (0, p * tiles_per_split + i)
    part_map = lambda p, i: (p, 0, 0)

    flops = 2 * n * (din * hidden + 2 * hidden * attn_d + attn_d * c + c * hidden)
    transcendentals = n * (2 * attn_d + 3 * c)
    bytes_accessed = (n * din * h.dtype.itemsize
                      + 2 * (din * hidden + 2 * hidden * attn_d + c * attn_d)
                      + 4 * (pad_n * c + splits * c * (hidden + 2) + hidden + 2 * attn_d + c))

    a_raw_pad, m_part, d_part, a_part = pl.pallas_call(
        kernel,
        out_shape=(
            jax.ShapeDtypeStruct((c, pad_n), jnp.float32),              # A_raw (padded N)
            jax.ShapeDtypeStruct((splits, c, 1), jnp.float32),          # per-split running max
            jax.ShapeDtypeStruct((splits, c, 1), jnp.float32),          # per-split denom
            jax.ShapeDtypeStruct((splits, c, hidden), jnp.float32),     # per-split unnormalized M
        ),
        grid_spec=pltpu.PrefetchScalarGridSpec(
            num_scalar_prefetch=0,
            grid=grid,
            in_specs=[
                pl.BlockSpec((tile_n, din), h_map),      # streamed h tiles (native dtype)
                pl.BlockSpec((din, hidden), const),      # resident weights below
                pl.BlockSpec((1, hidden), const),
                pl.BlockSpec((hidden, attn_d), const),
                pl.BlockSpec((1, attn_d), const),
                pl.BlockSpec((hidden, attn_d), const),
                pl.BlockSpec((1, attn_d), const),
                pl.BlockSpec((c, attn_d), const),
                pl.BlockSpec((c, 1), const),
            ],
            out_specs=(
                pl.BlockSpec((c, tile_n), araw_map),     # A_raw, lane-dense in N
                pl.BlockSpec((None, c, 1), part_map),
                pl.BlockSpec((None, c, 1), part_map),
                pl.BlockSpec((None, c, hidden), part_map),
            ),
        ),
        compiler_params=pltpu.CompilerParams(
            dimension_semantics=("parallel", "arbitrary"),
            vmem_limit_bytes=_vmem_limit_bytes(tile_n, din, hidden, attn_d, c, capacity),
        ),
        cost_estimate=pl.CostEstimate(
            flops=flops, transcendentals=transcendentals,
            bytes_accessed=bytes_accessed),
    )(h, params["w1"], params["b1"], params["wa"], params["ba"],
      params["wb"], params["bb"], params["wct"], params["bc"])

    a_raw = a_raw_pad[:, :n] if pad_n != n else a_raw_pad

    # cross-split log-sum-exp combine + exact divide (O(splits*C*hidden), in-jit)
    m_run = jnp.max(m_part, axis=0)                      # (C, 1)
    w = jnp.exp(m_part - m_run[None])                    # (S, C, 1); empty splits weight 0
    den = jnp.sum(w * d_part, axis=0)                    # (C, 1)
    M = jnp.sum(w * a_part, axis=0) / den                # (C, hidden)

    # tiny per-class bag classifiers + softmax/argmax epilogue (O(C*512))
    logits = jnp.sum(M * params["wcls"].astype(jnp.float32), axis=1)[None, :] + params["bcls"]
    y_prob = jax.nn.softmax(logits, axis=1)
    y_hat = jnp.argmax(logits, axis=1)[:, None]          # torch.topk(..., 1)[1] -> (1, 1)
    results = {"features": M}
    return logits, y_prob, y_hat, a_raw, results


def init_params(key, input_dim, hidden, attn_dim, num_classes):
    ks = jax.random.split(key, 10)
    s = 0.02
    f32, bf16 = jnp.float32, jnp.bfloat16
    return {
        # MXU weights stored bf16 in HBM (accumulation stays f32); biases f32.
        "w1":   (s * jax.random.normal(ks[0], (input_dim, hidden), f32)).astype(bf16),
        "b1":    s * jax.random.normal(ks[1], (1, hidden), f32),
        "wa":   (s * jax.random.normal(ks[2], (hidden, attn_dim), f32)).astype(bf16),
        "ba":    s * jax.random.normal(ks[3], (1, attn_dim), f32),
        "wb":   (s * jax.random.normal(ks[4], (hidden, attn_dim), f32)).astype(bf16),
        "bb":    s * jax.random.normal(ks[5], (1, attn_dim), f32),
        # attention_c kept in PyTorch (C, D) layout -> scores come out as (C, N)
        "wct":  (s * jax.random.normal(ks[6], (num_classes, attn_dim), f32)).astype(bf16),
        "bc":    s * jax.random.normal(ks[7], (num_classes, 1), f32),
        "wcls":  s * jax.random.normal(ks[8], (num_classes, hidden), f32),
        "bcls":  s * jax.random.normal(ks[9], (1, num_classes), f32),
    }


def reference_forward(h, p):
    """Pure-JAX f32 reference (PyTorch semantics)."""
    f32 = jnp.float32
    w1, wa, wb, wct = (p[k].astype(f32) for k in ("w1", "wa", "wb", "wct"))
    x = jnp.maximum(h @ w1 + p["b1"], 0.0)
    a = jnp.tanh(x @ wa + p["ba"])
    b = jax.nn.sigmoid(x @ wb + p["bb"])
    A = ((a * b) @ wct.T + p["bc"].T).T                       # (C, N)
    A_raw = A
    A_soft = jax.nn.softmax(A, axis=1)
    M = A_soft @ x
    logits = jnp.sum(M * p["wcls"], axis=1)[None, :] + p["bcls"]
    return logits, A_raw, M


if __name__ == "__main__":
    # Small synthetic problem: 300 instances (non-multiple of the tile, to exercise
    # masked tails + the padded last split), input_dim=256; hidden=512 / attn=256
    # follow the module's size_dict['small']; 2 classes.
    N, INPUT_DIM, HIDDEN, ATTN_D, NUM_CLASSES = 300, 256, 512, 256, 2

    key = jax.random.PRNGKey(0)
    k_h, k_p = jax.random.split(key)
    h = jax.random.normal(k_h, (N, INPUT_DIM), jnp.float32)
    params = init_params(k_p, INPUT_DIM, HIDDEN, ATTN_D, NUM_CLASSES)

    ref_logits, ref_araw, ref_M = reference_forward(h, params)

    # Run 1: small tile + 2-way split -> exercises tail masking, padded A_raw,
    # fully-out-of-range tiles and the cross-split LSE combine.
    fwd_small = jax.jit(functools.partial(clam_mb_forward, tile_n=128, num_splits=2))
    logits, y_prob, y_hat, a_raw, results = jax.block_until_ready(fwd_small(h, params))

    assert logits.shape == (1, NUM_CLASSES)
    assert y_prob.shape == (1, NUM_CLASSES)
    assert y_hat.shape == (1, 1)
    assert a_raw.shape == (NUM_CLASSES, N)
    assert results["features"].shape == (NUM_CLASSES, HIDDEN)
    # bf16 MXU operands => wider tolerance than pure-f32
    assert jnp.allclose(logits, ref_logits, atol=5e-3, rtol=5e-2)
    assert jnp.allclose(a_raw, ref_araw, atol=5e-3, rtol=5e-2)
    assert jnp.allclose(results["features"], ref_M, atol=5e-3, rtol=5e-2)

    # Run 2: generation-aware auto tile / VMEM budget (default arguments).
    fwd_auto = jax.jit(clam_mb_forward)
    logits2, _, _, a_raw2, results2 = jax.block_until_ready(fwd_auto(h, params))
    assert jnp.allclose(logits2, ref_logits, atol=5e-3, rtol=5e-2)
    assert jnp.allclose(a_raw2, ref_araw, atol=5e-3, rtol=5e-2)
    assert jnp.allclose(results2["features"], ref_M, atol=5e-3, rtol=5e-2)

    print("KERNEL_OK")
</pallas_src>

<mosaic_0001>
module attributes {stable_mosaic.version = 11 : i64} {
  func.func @_clam_mb_kernel(%arg0: i32, %arg1: i32, %arg2: memref<128x256xf32, #tpu.memory_space<vmem>>, %arg3: memref<256x512xbf16, #tpu.memory_space<vmem>>, %arg4: memref<1x512xf32, #tpu.memory_space<vmem>>, %arg5: memref<512x256xbf16, #tpu.memory_space<vmem>>, %arg6: memref<1x256xf32, #tpu.memory_space<vmem>>, %arg7: memref<512x256xbf16, #tpu.memory_space<vmem>>, %arg8: memref<1x256xf32, #tpu.memory_space<vmem>>, %arg9: memref<2x256xbf16, #tpu.memory_space<vmem>>, %arg10: memref<2x1xf32, #tpu.memory_space<vmem>>, %arg11: memref<2x128xf32, #tpu.memory_space<vmem>>, %arg12: memref<1x2x1xf32, #tpu.memory_space<vmem>>, %arg13: memref<1x2x1xf32, #tpu.memory_space<vmem>>, %arg14: memref<1x2x512xf32, #tpu.memory_space<vmem>>) attributes {dimension_semantics = [#tpu.dimension_semantics<parallel>, #tpu.dimension_semantics<arbitrary>], iteration_bounds = array<i64: 2, 2>, scalar_prefetch = 0 : i64, scratch_operands = 0 : i64, tpu.core_type = #tpu.core_type<tc>, window_params = [{transform_indices = @transform_0, window_bounds = array<i64: 128, 256>}, {pipeline_mode = #tpu.pipeline_mode<synchronous>, transform_indices = @transform_1, window_bounds = array<i64: 256, 512>}, {pipeline_mode = #tpu.pipeline_mode<synchronous>, transform_indices = @transform_2, window_bounds = array<i64: 1, 512>}, {pipeline_mode = #tpu.pipeline_mode<synchronous>, transform_indices = @transform_3, window_bounds = array<i64: 512, 256>}, {pipeline_mode = #tpu.pipeline_mode<synchronous>, transform_indices = @transform_4, window_bounds = array<i64: 1, 256>}, {pipeline_mode = #tpu.pipeline_mode<synchronous>, transform_indices = @transform_5, window_bounds = array<i64: 512, 256>}, {pipeline_mode = #tpu.pipeline_mode<synchronous>, transform_indices = @transform_6, window_bounds = array<i64: 1, 256>}, {pipeline_mode = #tpu.pipeline_mode<synchronous>, transform_indices = @transform_7, window_bounds = array<i64: 2, 256>}, {pipeline_mode = #tpu.pipeline_mode<synchronous>, transform_indices = @transform_8, window_bounds = array<i64: 2, 1>}, {transform_indices = @transform_9, window_bounds = array<i64: 2, 128>}, {transform_indices = @transform_10, window_bounds = array<i64: 1, 2, 1>}, {transform_indices = @transform_11, window_bounds = array<i64: 1, 2, 1>}, {transform_indices = @transform_12, window_bounds = array<i64: 1, 2, 512>}]} {
    %c2_i32 = arith.constant 2 : i32
    %0 = arith.muli %arg0, %c2_i32 : i32
    %1 = arith.addi %0, %arg1 : i32
    %c128_i32 = arith.constant 128 : i32
    %2 = arith.muli %1, %c128_i32 : i32
    %c0_i32 = arith.constant 0 : i32
    %3 = arith.cmpi eq, %arg1, %c0_i32 : i32
    %4 = arith.extui %3 : i1 to i32
    %c0_i32_0 = arith.constant 0 : i32
    %5 = arith.cmpi ne, %4, %c0_i32_0 : i32
    scf.if %5 {
      %cst_49 = arith.constant -1.000000e+30 : f32
      %89 = vector.broadcast %cst_49 : f32 to vector<2x1xf32>
      %c0_50 = arith.constant 0 : index
      %c0_51 = arith.constant 0 : index
      %c0_52 = arith.constant 0 : index
      %90 = vector.load %arg12[%c0_50, %c0_51, %c0_52] : memref<1x2x1xf32, #tpu.memory_space<vmem>>, vector<1x2x1xf32>
      %91 = vector.shape_cast %90 : vector<1x2x1xf32> to vector<2x1xf32>
      %92 = vector.shape_cast %89 : vector<2x1xf32> to vector<1x2x1xf32>
      tpu.vector_store %arg12[%c0_50, %c0_51, %c0_52], %92 {strides = array<i32>} : memref<1x2x1xf32, #tpu.memory_space<vmem>>, vector<1x2x1xf32>,
      %cst_53 = arith.constant 0.000000e+00 : f32
      %93 = vector.broadcast %cst_53 : f32 to vector<2x1xf32>
      %c0_54 = arith.constant 0 : index
      %c0_55 = arith.constant 0 : index
      %c0_56 = arith.constant 0 : index
      %94 = vector.load %arg13[%c0_54, %c0_55, %c0_56] : memref<1x2x1xf32, #tpu.memory_space<vmem>>, vector<1x2x1xf32>
      %95 = vector.shape_cast %94 : vector<1x2x1xf32> to vector<2x1xf32>
      %96 = vector.shape_cast %93 : vector<2x1xf32> to vector<1x2x1xf32>
      tpu.vector_store %arg13[%c0_54, %c0_55, %c0_56], %96 {strides = array<i32>} : memref<1x2x1xf32, #tpu.memory_space<vmem>>, vector<1x2x1xf32>,
      %cst_57 = arith.constant 0.000000e+00 : f32
      %97 = vector.broadcast %cst_57 : f32 to vector<2x512xf32>
      %c0_58 = arith.constant 0 : index
      %c0_59 = arith.constant 0 : index
      %c0_60 = arith.constant 0 : index
      %98 = vector.load %arg14[%c0_58, %c0_59, %c0_60] : memref<1x2x512xf32, #tpu.memory_space<vmem>>, vector<1x2x512xf32>
      %99 = vector.shape_cast %98 : vector<1x2x512xf32> to vector<2x512xf32>
      %100 = vector.shape_cast %97 : vector<2x512xf32> to vector<1x2x512xf32>
      tpu.vector_store %arg14[%c0_58, %c0_59, %c0_60], %100 {strides = array<i32>} : memref<1x2x512xf32, #tpu.memory_space<vmem>>, vector<1x2x512xf32>,
    } else {
    }
    %c0 = arith.constant 0 : index
    %c0_1 = arith.constant 0 : index
    %6 = vector.load %arg2[%c0, %c0_1] : memref<128x256xf32, #tpu.memory_space<vmem>>, vector<128x256xf32>
    %7 = arith.truncf %6 : vector<128x256xf32> to vector<128x256xbf16>
    %8 = tpu.iota {dimensions = array<i32: 0>} : vector<128x1xi32>
    %9 = vector.broadcast %2 : i32 to vector<128x1xi32>
    %10 = arith.addi %9, %8 : vector<128x1xi32>
    %c300_i32 = arith.constant 300 : i32
    %11 = vector.broadcast %c300_i32 : i32 to vector<128x1xi32>
    %12 = arith.cmpi slt, %10, %11 : vector<128x1xi32>
    %c0_i32_2 = arith.constant 0 : i32
    %13 = arith.sitofp %c0_i32_2 : i32 to bf16
    %14 = vector.shape_cast %12 : vector<128x1xi1> to vector<128x1xi1>
    %15 = vector.broadcast %14 : vector<128x1xi1> to vector<128x256xi1>
    %16 = vector.broadcast %13 : bf16 to vector<128x256xbf16>
    %17 = arith.select %15, %7, %16 : vector<128x256xi1>, vector<128x256xbf16>
    %c0_3 = arith.constant 0 : index
    %c0_4 = arith.constant 0 : index
    %18 = vector.load %arg3[%c0_3, %c0_4] : memref<256x512xbf16, #tpu.memory_space<vmem>>, vector<256x512xbf16>
    %cst = arith.constant dense<0.000000e+00> : vector<128x512xf32>
    %19 = tpu.matmul %17, %18, %cst {dimension_numbers = #tpu.dot_dimension_numbers<[1], [0], [0], [1], [0, 0, 1, 1], [], []>} : vector<128x256xbf16>, vector<256x512xbf16>, vector<128x512xf32> -> vector<128x512xf32>
    %c0_5 = arith.constant 0 : index
    %c0_6 = arith.constant 0 : index
    %20 = vector.load %arg4[%c0_5, %c0_6] : memref<1x512xf32, #tpu.memory_space<vmem>>, vector<1x512xf32>
    %21 = vector.broadcast %20 : vector<1x512xf32> to vector<128x512xf32>
    %22 = arith.addf %19, %21 : vector<128x512xf32>
    %cst_7 = arith.constant 0.000000e+00 : f32
    %23 = vector.broadcast %cst_7 : f32 to vector<128x512xf32>
    %24 = arith.maximumf %22, %23 : vector<128x512xf32>
    %25 = arith.truncf %24 : vector<128x512xf32> to vector<128x512xbf16>
    %c0_8 = arith.constant 0 : index
    %c0_9 = arith.constant 0 : index
    %26 = vector.load %arg5[%c0_8, %c0_9] : memref<512x256xbf16, #tpu.memory_space<vmem>>, vector<512x256xbf16>
    %cst_10 = arith.constant dense<0.000000e+00> : vector<128x256xf32>
    %27 = tpu.matmul %25, %26, %cst_10 {dimension_numbers = #tpu.dot_dimension_numbers<[1], [0], [0], [1], [0, 0, 1, 1], [], []>} : vector<128x512xbf16>, vector<512x256xbf16>, vector<128x256xf32> -> vector<128x256xf32>
    %c0_11 = arith.constant 0 : index
    %c0_12 = arith.constant 0 : index
    %28 = vector.load %arg6[%c0_11, %c0_12] : memref<1x256xf32, #tpu.memory_space<vmem>>, vector<1x256xf32>
    %29 = vector.broadcast %28 : vector<1x256xf32> to vector<128x256xf32>
    %30 = arith.addf %27, %29 : vector<128x256xf32>
    %31 = math.tanh %30 : vector<128x256xf32>
    %c0_13 = arith.constant 0 : index
    %c0_14 = arith.constant 0 : index
    %32 = vector.load %arg7[%c0_13, %c0_14] : memref<512x256xbf16, #tpu.memory_space<vmem>>, vector<512x256xbf16>
    %cst_15 = arith.constant dense<0.000000e+00> : vector<128x256xf32>
    %33 = tpu.matmul %25, %32, %cst_15 {dimension_numbers = #tpu.dot_dimension_numbers<[1], [0], [0], [1], [0, 0, 1, 1], [], []>} : vector<128x512xbf16>, vector<512x256xbf16>, vector<128x256xf32> -> vector<128x256xf32>
    %c0_16 = arith.constant 0 : index
    %c0_17 = arith.constant 0 : index
    %34 = vector.load %arg8[%c0_16, %c0_17] : memref<1x256xf32, #tpu.memory_space<vmem>>, vector<1x256xf32>
    %35 = vector.broadcast %34 : vector<1x256xf32> to vector<128x256xf32>
    %36 = arith.addf %33, %35 : vector<128x256xf32>
    %37 = arith.negf %36 : vector<128x256xf32>
    %38 = math.exp %37 : vector<128x256xf32>
    %cst_18 = arith.constant 1.000000e+00 : f32
    %39 = vector.broadcast %cst_18 : f32 to vector<128x256xf32>
    %40 = arith.addf %39, %38 : vector<128x256xf32>
    %41 = arith.divf %39, %40 : vector<128x256xf32>
    %42 = arith.mulf %31, %41 : vector<128x256xf32>
    %43 = arith.truncf %42 : vector<128x256xf32> to vector<128x256xbf16>
    %c0_19 = arith.constant 0 : index
    %c0_20 = arith.constant 0 : index
    %44 = vector.load %arg9[%c0_19, %c0_20] : memref<2x256xbf16, #tpu.memory_space<vmem>>, vector<2x256xbf16>
    %cst_21 = arith.constant dense<0.000000e+00> : vector<2x128xf32>
    %45 = tpu.matmul %44, %43, %cst_21 {dimension_numbers = #tpu.dot_dimension_numbers<[1], [1], [0], [0], [0, 0, 1, 0], [], []>} : vector<2x256xbf16>, vector<128x256xbf16>, vector<2x128xf32> -> vector<2x128xf32>
    %c0_22 = arith.constant 0 : index
    %c0_23 = arith.constant 0 : index
    %46 = vector.load %arg10[%c0_22, %c0_23] : memref<2x1xf32, #tpu.memory_space<vmem>>, vector<2x1xf32>
    %47 = vector.broadcast %46 : vector<2x1xf32> to vector<2x128xf32>
    %48 = arith.addf %45, %47 : vector<2x128xf32>
    %c0_24 = arith.constant 0 : index
    %c0_25 = arith.constant 0 : index
    %49 = vector.load %arg11[%c0_24, %c0_25] : memref<2x128xf32, #tpu.memory_space<vmem>>, vector<2x128xf32>
    tpu.vector_store %arg11[%c0_24, %c0_25], %48 {strides = array<i32>} : memref<2x128xf32, #tpu.memory_space<vmem>>, vector<2x128xf32>,
    %50 = tpu.iota {dimensions = array<i32: 1>} : vector<2x128xi32>
    %51 = vector.broadcast %2 : i32 to vector<2x128xi32>
    %52 = arith.addi %51, %50 : vector<2x128xi32>
    %c300_i32_26 = arith.constant 300 : i32
    %53 = vector.broadcast %c300_i32_26 : i32 to vector<2x128xi32>
    %54 = arith.cmpi slt, %52, %53 : vector<2x128xi32>
    %cst_27 = arith.constant -1.000000e+30 : f32
    %55 = vector.broadcast %cst_27 : f32 to vector<2x128xf32>
    %56 = arith.select %54, %48, %55 : vector<2x128xi1>, vector<2x128xf32>
    %c0_28 = arith.constant 0 : index
    %c0_29 = arith.constant 0 : index
    %c0_30 = arith.constant 0 : index
    %57 = vector.load %arg12[%c0_28, %c0_29, %c0_30] : memref<1x2x1xf32, #tpu.memory_space<vmem>>, vector<1x2x1xf32>
    %58 = vector.shape_cast %57 : vector<1x2x1xf32> to vector<2x1xf32>
    %cst_31 = arith.constant dense<0xFF800000> : vector<2xf32>
    %59 = vector.multi_reduction <maximumf>, %56, %cst_31 [1] : vector<2x128xf32> to vector<2xf32>
    %60 = vector.shape_cast %59 : vector<2xf32> to vector<2x1xf32>
    %61 = arith.maximumf %58, %60 : vector<2x1xf32>
    %62 = arith.subf %58, %61 : vector<2x1xf32>
    %63 = math.exp %62 : vector<2x1xf32>
    %64 = vector.broadcast %61 : vector<2x1xf32> to vector<2x128xf32>
    %65 = arith.subf %56, %64 : vector<2x128xf32>
    %66 = math.exp %65 : vector<2x128xf32>
    %c0_32 = arith.constant 0 : index
    %c0_33 = arith.constant 0 : index
    %c0_34 = arith.constant 0 : index
    %67 = vector.load %arg13[%c0_32, %c0_33, %c0_34] : memref<1x2x1xf32, #tpu.memory_space<vmem>>, vector<1x2x1xf32>
    %68 = vector.shape_cast %67 : vector<1x2x1xf32> to vector<2x1xf32>
    %69 = arith.mulf %63, %68 : vector<2x1xf32>
    %cst_35 = arith.constant dense<0.000000e+00> : vector<2xf32>
    %70 = vector.multi_reduction <add>, %66, %cst_35 [1] : vector<2x128xf32> to vector<2xf32>
    %71 = vector.shape_cast %70 : vector<2xf32> to vector<2x1xf32>
    %72 = arith.addf %69, %71 : vector<2x1xf32>
    %c0_36 = arith.constant 0 : index
    %c0_37 = arith.constant 0 : index
    %c0_38 = arith.constant 0 : index
    %73 = vector.load %arg13[%c0_36, %c0_37, %c0_38] : memref<1x2x1xf32, #tpu.memory_space<vmem>>, vector<1x2x1xf32>
    %74 = vector.shape_cast %73 : vector<1x2x1xf32> to vector<2x1xf32>
    %75 = vector.shape_cast %72 : vector<2x1xf32> to vector<1x2x1xf32>
    tpu.vector_store %arg13[%c0_36, %c0_37, %c0_38], %75 {strides = array<i32>} : memref<1x2x1xf32, #tpu.memory_space<vmem>>, vector<1x2x1xf32>,
    %c0_39 = arith.constant 0 : index
    %c0_40 = arith.constant 0 : index
    %c0_41 = arith.constant 0 : index
    %76 = vector.load %arg14[%c0_39, %c0_40, %c0_41] : memref<1x2x512xf32, #tpu.memory_space<vmem>>, vector<1x2x512xf32>
    %77 = vector.shape_cast %76 : vector<1x2x512xf32> to vector<2x512xf32>
    %78 = vector.broadcast %63 : vector<2x1xf32> to vector<2x512xf32>
    %79 = arith.mulf %78, %77 : vector<2x512xf32>
    %80 = arith.truncf %66 : vector<2x128xf32> to vector<2x128xbf16>
    %cst_42 = arith.constant dense<0.000000e+00> : vector<2x512xf32>
    %81 = tpu.matmul %80, %25, %cst_42 {dimension_numbers = #tpu.dot_dimension_numbers<[1], [0], [0], [1], [0, 0, 1, 1], [], []>} : vector<2x128xbf16>, vector<128x512xbf16>, vector<2x512xf32> -> vector<2x512xf32>
    %82 = arith.addf %79, %81 : vector<2x512xf32>
    %c0_43 = arith.constant 0 : index
    %c0_44 = arith.constant 0 : index
    %c0_45 = arith.constant 0 : index
    %83 = vector.load %arg14[%c0_43, %c0_44, %c0_45] : memref<1x2x512xf32, #tpu.memory_space<vmem>>, vector<1x2x512xf32>
    %84 = vector.shape_cast %83 : vector<1x2x512xf32> to vector<2x512xf32>
    %85 = vector.shape_cast %82 : vector<2x512xf32> to vector<1x2x512xf32>
    tpu.vector_store %arg14[%c0_43, %c0_44, %c0_45], %85 {strides = array<i32>} : memref<1x2x512xf32, #tpu.memory_space<vmem>>, vector<1x2x512xf32>,
    %c0_46 = arith.constant 0 : index
    %c0_47 = arith.constant 0 : index
    %c0_48 = arith.constant 0 : index
    %86 = vector.load %arg12[%c0_46, %c0_47, %c0_48] : memref<1x2x1xf32, #tpu.memory_space<vmem>>, vector<1x2x1xf32>
    %87 = vector.shape_cast %86 : vector<1x2x1xf32> to vector<2x1xf32>
    %88 = vector.shape_cast %61 : vector<2x1xf32> to vector<1x2x1xf32>
    tpu.vector_store %arg12[%c0_46, %c0_47, %c0_48], %88 {strides = array<i32>} : memref<1x2x1xf32, #tpu.memory_space<vmem>>, vector<1x2x1xf32>,
    return
  }
  func.func @transform_0(%arg0: i32, %arg1: i32) -> (i32, i32) {
    %c2_i32 = arith.constant 2 : i32
    %0 = arith.muli %arg0, %c2_i32 : i32
    %1 = arith.addi %0, %arg1 : i32
    %c2_i32_0 = arith.constant 2 : i32
    %2 = arith.minsi %1, %c2_i32_0 : i32
    %c0_i32 = arith.constant 0 : i32
    %c0_i32_1 = arith.constant 0 : i32
    return %2, %c0_i32 : i32, i32
  }
  func.func @transform_1(%arg0: i32, %arg1: i32) -> (i32, i32) {
    %c0_i32 = arith.constant 0 : i32
    %c0_i32_0 = arith.constant 0 : i32
    %c0_i32_1 = arith.constant 0 : i32
    return %c0_i32, %c0_i32_0 : i32, i32
  }
  func.func @transform_2(%arg0: i32, %arg1: i32) -> (i32, i32) {
    %c0_i32 = arith.constant 0 : i32
    %c0_i32_0 = arith.constant 0 : i32
    %c0_i32_1 = arith.constant 0 : i32
    return %c0_i32, %c0_i32_0 : i32, i32
  }
  func.func @transform_3(%arg0: i32, %arg1: i32) -> (i32, i32) {
    %c0_i32 = arith.constant 0 : i32
    %c0_i32_0 = arith.constant 0 : i32
    %c0_i32_1 = arith.constant 0 : i32
    return %c0_i32, %c0_i32_0 : i32, i32
  }
  func.func @transform_4(%arg0: i32, %arg1: i32) -> (i32, i32) {
    %c0_i32 = arith.constant 0 : i32
    %c0_i32_0 = arith.constant 0 : i32
    %c0_i32_1 = arith.constant 0 : i32
    return %c0_i32, %c0_i32_0 : i32, i32
  }
  func.func @transform_5(%arg0: i32, %arg1: i32) -> (i32, i32) {
    %c0_i32 = arith.constant 0 : i32
    %c0_i32_0 = arith.constant 0 : i32
    %c0_i32_1 = arith.constant 0 : i32
    return %c0_i32, %c0_i32_0 : i32, i32
  }
  func.func @transform_6(%arg0: i32, %arg1: i32) -> (i32, i32) {
    %c0_i32 = arith.constant 0 : i32
    %c0_i32_0 = arith.constant 0 : i32
    %c0_i32_1 = arith.constant 0 : i32
    return %c0_i32, %c0_i32_0 : i32, i32
  }
  func.func @transform_7(%arg0: i32, %arg1: i32) -> (i32, i32) {
    %c0_i32 = arith.constant 0 : i32
    %c0_i32_0 = arith.constant 0 : i32
    %c0_i32_1 = arith.constant 0 : i32
    return %c0_i32, %c0_i32_0 : i32, i32
  }
  func.func @transform_8(%arg0: i32, %arg1: i32) -> (i32, i32) {
    %c0_i32 = arith.constant 0 : i32
    %c0_i32_0 = arith.constant 0 : i32
    %c0_i32_1 = arith.constant 0 : i32
    return %c0_i32, %c0_i32_0 : i32, i32
  }
  func.func @transform_9(%arg0: i32, %arg1: i32) -> (i32, i32) {
    %c2_i32 = arith.constant 2 : i32
    %0 = arith.muli %arg0, %c2_i32 : i32
    %1 = arith.addi %0, %arg1 : i32
    %c0_i32 = arith.constant 0 : i32
    %c0_i32_0 = arith.constant 0 : i32
    return %c0_i32, %1 : i32, i32
  }
  func.func @transform_10(%arg0: i32, %arg1: i32) -> (i32, i32, i32) {
    %c0_i32 = arith.constant 0 : i32
    %c0_i32_0 = arith.constant 0 : i32
    %c0_i32_1 = arith.constant 0 : i32
    return %arg0, %c0_i32, %c0_i32_0 : i32, i32, i32
  }
  func.func @transform_11(%arg0: i32, %arg1: i32) -> (i32, i32, i32) {
    %c0_i32 = arith.constant 0 : i32
    %c0_i32_0 = arith.constant 0 : i32
    %c0_i32_1 = arith.constant 0 : i32
    return %arg0, %c0_i32, %c0_i32_0 : i32, i32, i32
  }
  func.func @transform_12(%arg0: i32, %arg1: i32) -> (i32, i32, i32) {
    %c0_i32 = arith.constant 0 : i32
    %c0_i32_0 = arith.constant 0 : i32
    %c0_i32_1 = arith.constant 0 : i32
    return %arg0, %c0_i32, %c0_i32_0 : i32, i32, i32
  }
}

</mosaic_0001>

<llo_original>
// kernel: clam_mb_forward.1
$region0: #{clam_mb_forward.1}
  #allocation0 [shape = 'u32[]', space=smem, size = 0x4, offset = 0x4, fixed_abs, tag = 'smem constant byte address 0x4 - core index']
  #allocation1 [shape = 'u32[144,128]{1,0:T(1,128)}', space=vmem, size = 0x12000, scoped, tag = 'internal scratch']
  %s0 = inlined_call_operand.hbm [shape: f32[300,256], index: 0, kind: input, shape index: {}]
  %s1 = inlined_call_operand.hbm [shape: bf16[256,512], index: 1, kind: input, shape index: {}]
  %s2 = inlined_call_operand.vmem [shape: f32[1,512], index: 2, kind: input, shape index: {}]
  %s3 = inlined_call_operand.hbm [shape: bf16[512,256], index: 3, kind: input, shape index: {}]
  %s4 = inlined_call_operand.vmem [shape: f32[1,256], index: 4, kind: input, shape index: {}]
  %s5 = inlined_call_operand.hbm [shape: bf16[512,256], index: 5, kind: input, shape index: {}]
  %s6 = inlined_call_operand.vmem [shape: f32[1,256], index: 6, kind: input, shape index: {}]
  %s7 = inlined_call_operand.vmem [shape: bf16[2,256], index: 7, kind: input, shape index: {}]
  %s8 = inlined_call_operand.vmem [shape: f32[2,1], index: 8, kind: input, shape index: {}]
  %s9 = inlined_call_operand.vmem [shape: f32[2,512], index: 9, kind: output, shape index: {0}]
  %s10 = inlined_call_operand.vmem [shape: f32[2,2,1], index: 10, kind: output, shape index: {1}]
  %s11 = inlined_call_operand.vmem [shape: f32[2,2,1], index: 11, kind: output, shape index: {2}]
  %s12 = inlined_call_operand.vmem [shape: f32[2,2,512], index: 12, kind: output, shape index: {3}]
  %13 = xla_tuple %s9, %s10, %s11, %s12
  %s14 = sld [smem:[#allocation0]]
  $region113: #{clam_mb_forward.1} parent=0
    _
  %s16 = ssub.s32 1, %s14
  %s17 = scalar_select 0, %s16, %s14
  $region1: #{clam_mb_forward.1} parent=0
    #allocation2 [shape = 'u8[262144]{0}', space=vmem, size = 0x40000, scoped, tag = 'input window, operand 0']
    #allocation3 [shape = 's32[2]{0}', space=sflag, size = 0x8, scoped, tag = 'scoped memory for clam_mb_forward.1']
    #allocation4 [shape = 'u8[262144]{0}', space=vmem, size = 0x40000, scoped, tag = 'input window, operand 1, single buffered']
    #allocation5 [shape = 's32[1]{0}', space=sflag, size = 0x4, scoped, tag = 'scoped memory for clam_mb_forward.1']
    #allocation6 [shape = 'u8[262144]{0}', space=vmem, size = 0x40000, scoped, tag = 'input window, operand 3, single buffered']
    #allocation7 [shape = 'u8[262144]{0}', space=vmem, size = 0x40000, scoped, tag = 'input window, operand 5, single buffered']
    #allocation8 [shape = 's32[1]{0}', space=sflag, size = 0x4, scoped, tag = 'scoped memory for clam_mb_forward.1']
    %18 = vsyncpa [#allocation3], 0
    %s19 = scalar_lea.sflag [#allocation3], 1
    %20 = vsyncpa %s19, 0
    %21 = vsyncpa [#allocation5], 0
    %22 = vsyncpa [#allocation8], 0
    loop: start=0, step=1, limit=6
    $region2: #{clam_mb_forward.1} parent=1 // loop_pre_header
      _
    $region3: #{clam_mb_forward.1} parent=1 // loop_header
      %s24 = sphi 0, %s28
      %p25 = scmp.ge.s32.totalorder %s24, 6
      %s31 = sphi 0, %s43
      %s32 = sphi 0, %s39
      %s33 = sphi 0, %s31
      %s34 = sphi 0, %s32
      %s35 = sphi 0, %s33
      %s36 = sphi 0, %s34
      %s54 = sphi 0, %s56
      %s57 = sphi 0, %s54
      %s58 = sphi 0, %s57
      %s74 = sphi 0, %s58
      %s78 = sphi 0, %s78
      %s80 = sphi 0, %s78
      %s81 = sphi 0, %s80
      %s95 = sphi 0, %s81
      %s99 = sphi 0, %s99
      %s101 = sphi 0, %s99
      %s102 = sphi 0, %s101
      %s116 = sphi 0, %s102
      %s120 = sphi 0, %s120
      %s122 = sphi 0, %s120
      %s123 = sphi 0, %s122
      %s137 = sphi 0, %s123
      %s141 = sphi 0, %s141
      %s143 = sphi 0, %s141
      %s144 = sphi 0, %s143
      %s158 = sphi 0, %s144
      %s162 = sphi 0, %s162
      %s164 = sphi 0, %s162
      %s165 = sphi 0, %s164
      %s179 = sphi 0, %s165
      %s183 = sphi 0, %s183
      %s185 = sphi 0, %s183
      %s186 = sphi 0, %s185
      %s200 = sphi 0, %s186
      %s204 = sphi 0, %s204
      %s206 = sphi 0, %s204
      %s207 = sphi 0, %s206
      %s221 = sphi 0, %s207
      %s225 = sphi 0, %s225
      %s227 = sphi 0, %s225
      %s228 = sphi 0, %s227
      %s242 = sphi 0, %s228
      %s252 = sphi 0, %s254
      %s255 = sphi 0, %s252
      %s256 = sphi 0, %s255
      %s272 = sphi 0, %s256
      %s278 = sphi 0, %s280
      %s281 = sphi 0, %s278
      %s282 = sphi 0, %s281
      %s298 = sphi 0, %s282
      %s304 = sphi 0, %s306
      %s307 = sphi 0, %s304
      %s308 = sphi 0, %s307
      %s324 = sphi 0, %s308
      %s330 = sphi 0, %s332
      %s333 = sphi 0, %s330
      %s334 = sphi 0, %s333
      %s350 = sphi 0, %s334
    $region4: #{clam_mb_forward.1} parent=1 // loop_header_branch
      %27 = sbr.rel (%p25) target = $region8
    $region5: #{clam_mb_forward.1} parent=1 // loop_body
      %s29 = ssub.s32 %s24, 1
      %s30 = ssub.s32 %s24, 2
      %s37 = sadd.s32 1, %s32
      %p38 = scmp.ge.s32.totalorder %s37, 2
      %s39 = scalar_select %p38, 0, %s37
      %s40 = sadd.s32 1, %s31
      %s41 = scalar_select %p38, %s40, %s31
      %p42 = scmp.ge.s32.totalorder %s41, 2
      %s43 = scalar_select %p42, 0, %s41
      %s44 = smul.u32 %s31, 2
      %s45 = sadd.s32 %s44, %s32
      %p46 = scmp.lt.s32.totalorder %s45, 2
      %s47 = scalar_select %p46, %s45, 2
      %s48 = smul.u32 %s43, 2
      %s49 = sadd.s32 %s48, %s39
      %p50 = scmp.lt.s32.totalorder %s49, 2
      %s51 = scalar_select %p50, %s49, 2
      %s52 = ssub.s32 %s47, %s51
      %p53 = scmp.eq.s32.totalorder %s52, 0
      %s55 = sadd.s32 %s54, 1
      %s56 = scalar_select %p53, %s54, %s55
      %p59 = pneg %p53
      %p60 = scmp.eq.s32.totalorder %s24, 3
      %p61 = por %p59, %p60
      %p62 = scmp.ne.s32.totalorder %s54, %s57
      %p63 = scmp.eq.s32.totalorder %s24, 0
      %p64 = por %p62, %p63
      %p65 = scmp.ne.s32.totalorder %s54, %s57
      %p66 = scmp.eq.s32.totalorder %s29, 3
      %p67 = por %p65, %p66
      %p68 = scmp.ne.s32.totalorder %s57, %s58
      %p69 = scmp.eq.s32.totalorder %s29, 0
      %p70 = por %p68, %p69
      %p71 = scmp.ne.s32.totalorder %s57, %s58
      %p72 = scmp.eq.s32.totalorder %s30, 3
      %p73 = por %p71, %p72
      %p75 = scmp.ne.s32.totalorder %s58, %s74
      %p76 = scmp.eq.s32.totalorder %s30, 0
      %p77 = por %p75, %p76
      %s79 = sadd.s32 %s78, 1
      %p82 = scmp.eq.s32.totalorder %s24, 3
      %p83 = scmp.ne.s32.totalorder %s78, %s80
      %p84 = scmp.eq.s32.totalorder %s24, 0
      %p85 = por %p83, %p84
      %p86 = scmp.ne.s32.totalorder %s78, %s80
      %p87 = scmp.eq.s32.totalorder %s29, 3
      %p88 = por %p86, %p87
      %p89 = scmp.ne.s32.totalorder %s80, %s81
      %p90 = scmp.eq.s32.totalorder %s29, 0
      %p91 = por %p89, %p90
      %p92 = scmp.ne.s32.totalorder %s80, %s81
      %p93 = scmp.eq.s32.totalorder %s30, 3
      %p94 = por %p92, %p93
      %p96 = scmp.ne.s32.totalorder %s81, %s95
      %p97 = scmp.eq.s32.totalorder %s30, 0
      %p98 = por %p96, %p97
      %s100 = sadd.s32 %s99, 1
      %p103 = scmp.eq.s32.totalorder %s24, 3
      %p104 = scmp.ne.s32.totalorder %s99, %s101
      %p105 = scmp.eq.s32.totalorder %s24, 0
      %p106 = por %p104, %p105
      %p107 = scmp.ne.s32.totalorder %s99, %s101
      %p108 = scmp.eq.s32.totalorder %s29, 3
      %p109 = por %p107, %p108
      %p110 = scmp.ne.s32.totalorder %s101, %s102
      %p111 = scmp.eq.s32.totalorder %s29, 0
      %p112 = por %p110, %p111
      %p113 = scmp.ne.s32.totalorder %s101, %s102
      %p114 = scmp.eq.s32.totalorder %s30, 3
      %p115 = por %p113, %p114
      %p117 = scmp.ne.s32.totalorder %s102, %s116
      %p118 = scmp.eq.s32.totalorder %s30, 0
      %p119 = por %p117, %p118
      %s121 = sadd.s32 %s120, 1
      %p124 = scmp.eq.s32.totalorder %s24, 3
      %p125 = scmp.ne.s32.totalorder %s120, %s122
      %p126 = scmp.eq.s32.totalorder %s24, 0
      %p127 = por %p125, %p126
      %p128 = scmp.ne.s32.totalorder %s120, %s122
      %p129 = scmp.eq.s32.totalorder %s29, 3
      %p130 = por %p128, %p129
      %p131 = scmp.ne.s32.totalorder %s122, %s123
      %p132 = scmp.eq.s32.totalorder %s29, 0
      %p133 = por %p131, %p132
      %p134 = scmp.ne.s32.totalorder %s122, %s123
      %p135 = scmp.eq.s32.totalorder %s30, 3
      %p136 = por %p134, %p135
      %p138 = scmp.ne.s32.totalorder %s123, %s137
      %p139 = scmp.eq.s32.totalorder %s30, 0
      %p140 = por %p138, %p139
      %s142 = sadd.s32 %s141, 1
      %p145 = scmp.eq.s32.totalorder %s24, 3
      %p146 = scmp.ne.s32.totalorder %s141, %s143
      %p147 = scmp.eq.s32.totalorder %s24, 0
      %p148 = por %p146, %p147
      %p149 = scmp.ne.s32.totalorder %s141, %s143
      %p150 = scmp.eq.s32.totalorder %s29, 3
      %p151 = por %p149, %p150
      %p152 = scmp.ne.s32.totalorder %s143, %s144
      %p153 = scmp.eq.s32.totalorder %s29, 0
      %p154 = por %p152, %p153
      %p155 = scmp.ne.s32.totalorder %s143, %s144
      %p156 = scmp.eq.s32.totalorder %s30, 3
      %p157 = por %p155, %p156
      %p159 = scmp.ne.s32.totalorder %s144, %s158
      %p160 = scmp.eq.s32.totalorder %s30, 0
      %p161 = por %p159, %p160
      %s163 = sadd.s32 %s162, 1
      %p166 = scmp.eq.s32.totalorder %s24, 3
      %p167 = scmp.ne.s32.totalorder %s162, %s164
      %p168 = scmp.eq.s32.totalorder %s24, 0
      %p169 = por %p167, %p168
      %p170 = scmp.ne.s32.totalorder %s162, %s164
      %p171 = scmp.eq.s32.totalorder %s29, 3
      %p172 = por %p170, %p171
      %p173 = scmp.ne.s32.totalorder %s164, %s165
      %p174 = scmp.eq.s32.totalorder %s29, 0
      %p175 = por %p173, %p174
      %p176 = scmp.ne.s32.totalorder %s164, %s165
      %p177 = scmp.eq.s32.totalorder %s30, 3
      %p178 = por %p176, %p177
      %p180 = scmp.ne.s32.totalorder %s165, %s179
      %p181 = scmp.eq.s32.totalorder %s30, 0
      %p182 = por %p180, %p181
      %s184 = sadd.s32 %s183, 1
      %p187 = scmp.eq.s32.totalorder %s24, 3
      %p188 = scmp.ne.s32.totalorder %s183, %s185
      %p189 = scmp.eq.s32.totalorder %s24, 0
      %p190 = por %p188, %p189
      %p191 = scmp.ne.s32.totalorder %s183, %s185
      %p192 = scmp.eq.s32.totalorder %s29, 3
      %p193 = por %p191, %p192
      %p194 = scmp.ne.s32.totalorder %s185, %s186
      %p195 = scmp.eq.s32.totalorder %s29, 0
      %p196 = por %p194, %p195
      %p197 = scmp.ne.s32.totalorder %s185, %s186
      %p198 = scmp.eq.s32.totalorder %s30, 3
      %p199 = por %p197, %p198
      %p201 = scmp.ne.s32.totalorder %s186, %s200
      %p202 = scmp.eq.s32.totalorder %s30, 0
      %p203 = por %p201, %p202
      %s205 = sadd.s32 %s204, 1
      %p208 = scmp.eq.s32.totalorder %s24, 3
      %p209 = scmp.ne.s32.totalorder %s204, %s206
      %p210 = scmp.eq.s32.totalorder %s24, 0
      %p211 = por %p209, %p210
      %p212 = scmp.ne.s32.totalorder %s204, %s206
      %p213 = scmp.eq.s32.totalorder %s29, 3
      %p214 = por %p212, %p213
      %p215 = scmp.ne.s32.totalorder %s206, %s207
      %p216 = scmp.eq.s32.totalorder %s29, 0
      %p217 = por %p215, %p216
      %p218 = scmp.ne.s32.totalorder %s206, %s207
      %p219 = scmp.eq.s32.totalorder %s30, 3
      %p220 = por %p218, %p219
      %p222 = scmp.ne.s32.totalorder %s207, %s221
      %p223 = scmp.eq.s32.totalorder %s30, 0
      %p224 = por %p222, %p223
      %s226 = sadd.s32 %s225, 1
      %p229 = scmp.eq.s32.totalorder %s24, 3
      %p230 = scmp.ne.s32.totalorder %s225, %s227
      %p231 = scmp.eq.s32.totalorder %s24, 0
      %p232 = por %p230, %p231
      %p233 = scmp.ne.s32.totalorder %s225, %s227
      %p234 = scmp.eq.s32.totalorder %s29, 3
      %p235 = por %p233, %p234
      %p236 = scmp.ne.s32.totalorder %s227, %s228
      %p237 = scmp.eq.s32.totalorder %s29, 0
      %p238 = por %p236, %p237
      %p239 = scmp.ne.s32.totalorder %s227, %s228
      %p240 = scmp.eq.s32.totalorder %s30, 3
      %p241 = por %p239, %p240
      %p243 = scmp.ne.s32.totalorder %s228, %s242
      %p244 = scmp.eq.s32.totalorder %s30, 0
      %p245 = por %p243, %p244
      %s246 = smul.u32 %s31, 2
      %s247 = sadd.s32 %s246, %s32
      %s248 = smul.u32 %s43, 2
      %s249 = sadd.s32 %s248, %s39
      %s250 = ssub.s32 %s247, %s249
      %p251 = scmp.eq.s32.totalorder %s250, 0
      %s253 = sadd.s32 %s252, 1
      %s254 = scalar_select %p251, %s252, %s253
      %p257 = pneg %p251
      %p258 = scmp.eq.s32.totalorder %s24, 3
      %p259 = por %p257, %p258
      %p260 = scmp.ne.s32.totalorder %s252, %s255
      %p261 = scmp.eq.s32.totalorder %s24, 0
      %p262 = por %p260, %p261
      %p263 = scmp.ne.s32.totalorder %s252, %s255
      %p264 = scmp.eq.s32.totalorder %s29, 3
      %p265 = por %p263, %p264
      %p266 = scmp.ne.s32.totalorder %s255, %s256
      %p267 = scmp.eq.s32.totalorder %s29, 0
      %p268 = por %p266, %p267
      %p269 = scmp.ne.s32.totalorder %s255, %s256
      %p270 = scmp.eq.s32.totalorder %s30, 3
      %p271 = por %p269, %p270
      %p273 = scmp.ne.s32.totalorder %s256, %s272
      %p274 = scmp.eq.s32.totalorder %s30, 0
      %p275 = por %p273, %p274
      %s276 = ssub.s32 %s31, %s43
      %p277 = scmp.eq.s32.totalorder %s276, 0
      %s279 = sadd.s32 %s278, 1
      %s280 = scalar_select %p277, %s278, %s279
      %p283 = pneg %p277
      %p284 = scmp.eq.s32.totalorder %s24, 3
      %p285 = por %p283, %p284
      %p286 = scmp.ne.s32.totalorder %s278, %s281
      %p287 = scmp.eq.s32.totalorder %s24, 0
      %p288 = por %p286, %p287
      %p289 = scmp.ne.s32.totalorder %s278, %s281
      %p290 = scmp.eq.s32.totalorder %s29, 3
      %p291 = por %p289, %p290
      %p292 = scmp.ne.s32.totalorder %s281, %s282
      %p293 = scmp.eq.s32.totalorder %s29, 0
      %p294 = por %p292, %p293
      %p295 = scmp.ne.s32.totalorder %s281, %s282
      %p296 = scmp.eq.s32.totalorder %s30, 3
      %p297 = por %p295, %p296
      %p299 = scmp.ne.s32.totalorder %s282, %s298
      %p300 = scmp.eq.s32.totalorder %s30, 0
      %p301 = por %p299, %p300
      %s302 = ssub.s32 %s31, %s43
      %p303 = scmp.eq.s32.totalorder %s302, 0
      %s305 = sadd.s32 %s304, 1
      %s306 = scalar_select %p303, %s304, %s305
      %p309 = pneg %p303
      %p310 = scmp.eq.s32.totalorder %s24, 3
      %p311 = por %p309, %p310
      %p312 = scmp.ne.s32.totalorder %s304, %s307
      %p313 = scmp.eq.s32.totalorder %s24, 0
      %p314 = por %p312, %p313
      %p315 = scmp.ne.s32.totalorder %s304, %s307
      %p316 = scmp.eq.s32.totalorder %s29, 3
      %p317 = por %p315, %p316
      %p318 = scmp.ne.s32.totalorder %s307, %s308
      %p319 = scmp.eq.s32.totalorder %s29, 0
      %p320 = por %p318, %p319
      %p321 = scmp.ne.s32.totalorder %s307, %s308
      %p322 = scmp.eq.s32.totalorder %s30, 3
      %p323 = por %p321, %p322
      %p325 = scmp.ne.s32.totalorder %s308, %s324
      %p326 = scmp.eq.s32.totalorder %s30, 0
      %p327 = por %p325, %p326
      %s328 = ssub.s32 %s31, %s43
      %p329 = scmp.eq.s32.totalorder %s328, 0
      %s331 = sadd.s32 %s330, 1
      %s332 = scalar_select %p329, %s330, %s331
      %p335 = pneg %p329
      %p336 = scmp.eq.s32.totalorder %s24, 3
      %p337 = por %p335, %p336
      %p338 = scmp.ne.s32.totalorder %s330, %s333
      %p339 = scmp.eq.s32.totalorder %s24, 0
      %p340 = por %p338, %p339
      %p341 = scmp.ne.s32.totalorder %s330, %s333
      %p342 = scmp.eq.s32.totalorder %s29, 3
      %p343 = por %p341, %p342
      %p344 = scmp.ne.s32.totalorder %s333, %s334
      %p345 = scmp.eq.s32.totalorder %s29, 0
      %p346 = por %p344, %p345
      %p347 = scmp.ne.s32.totalorder %s333, %s334
      %p348 = scmp.eq.s32.totalorder %s30, 3
      %p349 = por %p347, %p348
      %p351 = scmp.ne.s32.totalorder %s334, %s350
      %p352 = scmp.eq.s32.totalorder %s30, 0
      %p353 = por %p351, %p352
      %p354 = scmp.le.s32.totalorder 1, %s24
      %p355 = scmp.lt.s32.totalorder %s24, 5
      %p356 = pnand %p354, %p355
      %p357 = pneg %p356
      // Predicated region
      $region9: #{clam_mb_forward.1} parent=5 // pred_check
        _
      $region10: #{clam_mb_forward.1} parent=5 // pred_check_branch
        %359 = sbr.rel (%p356) target = $region12
      $region11: #{clam_mb_forward.1} parent=5 // pred_region
        %s360 = ssub.s32 %s24, 1
        // Predicated region
        $region13: #{clam_mb_forward.1} parent=11 // pred_check
          %p361 = pneg %p91
        $region14: #{clam_mb_forward.1} parent=11 // pred_check_branch
          %363 = sbr.rel (%p361) target = $region16
        $region15: #{clam_mb_forward.1} parent=11 // pred_region
          %s365 = ssub.s32 8192, 8192
          %366 = vsyncadd [#allocation5], %s365
          %s367 = sshll.u32 [#allocation4], 4
          %s368 = int_to_ptr.vmem [resolvable:$true] %s367
          %373 = dma.hbm_to_vmem [thread:$0]  %s1, 8192, %s368, [#allocation5], 256, 256, 16
        $region16: #{clam_mb_forward.1} parent=11 // pred_fallthru
          _
        // Predicated region
        $region17: #{clam_mb_forward.1} parent=11 // pred_check
          %p374 = pneg %p112
        $region18: #{clam_mb_forward.1} parent=11 // pred_check_branch
          %376 = sbr.rel (%p374) target = $region20
        $region19: #{clam_mb_forward.1} parent=11 // pred_region
          _
        $region20: #{clam_mb_forward.1} parent=11 // pred_fallthru
          _
        // Predicated region
        $region21: #{clam_mb_forward.1} parent=11 // pred_check
          %p377 = pneg %p133
        $region22: #{clam_mb_forward.1} parent=11 // pred_check_branch
          %379 = sbr.rel (%p377) target = $region24
        $region23: #{clam_mb_forward.1} parent=11 // pred_region
          %s381 = ssub.s32 8192, 8192
          %382 = vsyncadd [#allocation5], %s381
          %s383 = sshll.u32 [#allocation6], 4
          %s384 = int_to_ptr.vmem [resolvable:$true] %s383
          %389 = dma.hbm_to_vmem [thread:$0]  %s3, 8192, %s384, [#allocation5], 128, 128, 8
        $region24: #{clam_mb_forward.1} parent=11 // pred_fallthru
          _
        // Predicated region
        $region25: #{clam_mb_forward.1} parent=11 // pred_check
          %p390 = pneg %p154
        $region26: #{clam_mb_forward.1} parent=11 // pred_check_branch
          %392 = sbr.rel (%p390) target = $region28
        $region27: #{clam_mb_forward.1} parent=11 // pred_region
          _
        $region28: #{clam_mb_forward.1} parent=11 // pred_fallthru
          _
        // Predicated region
        $region29: #{clam_mb_forward.1} parent=11 // pred_check
          %p393 = pneg %p175
        $region30: #{clam_mb_forward.1} parent=11 // pred_check_branch
          %395 = sbr.rel (%p393) target = $region32
        $region31: #{clam_mb_forward.1} parent=11 // pred_region
          %s397 = ssub.s32 8192, 8192
          %398 = vsyncadd [#allocation8], %s397
          %s399 = sshll.u32 [#allocation7], 4
          %s400 = int_to_ptr.vmem [resolvable:$true] %s399
          %405 = dma.hbm_to_vmem [thread:$0]  %s5, 8192, %s400, [#allocation8], 128, 128, 8
        $region32: #{clam_mb_forward.1} parent=11 // pred_fallthru
          _
        // Predicated region
        $region33: #{clam_mb_forward.1} parent=11 // pred_check
          %p406 = pneg %p196
        $region34: #{clam_mb_forward.1} parent=11 // pred_check_branch
          %408 = sbr.rel (%p406) target = $region36
        $region35: #{clam_mb_forward.1} parent=11 // pred_region
          _
        $region36: #{clam_mb_forward.1} parent=11 // pred_fallthru
          _
        // Predicated region
        $region37: #{clam_mb_forward.1} parent=11 // pred_check
          %p409 = pneg %p217
        $region38: #{clam_mb_forward.1} parent=11 // pred_check_branch
          %411 = sbr.rel (%p409) target = $region40
        $region39: #{clam_mb_forward.1} parent=11 // pred_region
          _
        $region40: #{clam_mb_forward.1} parent=11 // pred_fallthru
          _
        // Predicated region
        $region41: #{clam_mb_forward.1} parent=11 // pred_check
          %p412 = pneg %p238
        $region42: #{clam_mb_forward.1} parent=11 // pred_check_branch
          %414 = sbr.rel (%p412) target = $region44
        $region43: #{clam_mb_forward.1} parent=11 // pred_region
          _
        $region44: #{clam_mb_forward.1} parent=11 // pred_fallthru
          _
      $region12: #{clam_mb_forward.1} parent=5 // pred_fallthru
        _
      %p415 = scmp.lt.s32.totalorder %s24, 4
      // Predicated region
      $region45: #{clam_mb_forward.1} parent=5 // pred_check
        %p416 = pneg %p415
      $region46: #{clam_mb_forward.1} parent=5 // pred_check_branch
        %418 = sbr.rel (%p416) target = $region48
      $region47: #{clam_mb_forward.1} parent=5 // pred_region
        // Predicated region
        $region49: #{clam_mb_forward.1} parent=47 // pred_check
          %p419 = pneg %p64
        $region50: #{clam_mb_forward.1} parent=47 // pred_check_branch
          %421 = sbr.rel (%p419) target = $region52
        $region51: #{clam_mb_forward.1} parent=47 // pred_region
          %s422 = sand.u32 %s54, 1
          %s423 = scalar_lea.sflag [#allocation3], %s422
          %s424 = sand.u32 %s54, 1
          %s425 = smul.addr %s424, 256
          %s426 = scalar_lea.vmem [#allocation2], %s425
          %s427 = smul.u32 %s31, 2
          %s428 = sadd.s32 %s427, %s32
          %p429 = scmp.lt.s32.totalorder %s428, 2
          %s430 = scalar_select %p429, %s428, 2
          %s431 = smul.u32 16, %s430
          %s432 = ssub.s32 38, %s431
          %p433 = scmp.lt.s32.totalorder %s432, 16
          %s434 = scalar_select %p433, %s432, 16
          %s435 = smul.u32 128, %s434
          %s436 = smul.u32 %s435, 2
          %s438 = ssub.s32 4096, %s436
          %439 = vsyncadd %s423, %s438
          %p440 = scmp.ne.s32.totalorder 0, %s436
          %s441 = smul.addr %s431, 2
          %s442 = smul.addr %s441, 128
          %s443 = scalar_lea.hbm %s0, %s442
          %s444 = smul.u32 16, %s434
          %s445 = sshll.u32 %s426, 4
          %s446 = int_to_ptr.vmem [resolvable:$true] %s445
          %s447 = sshll.u32 %s444, 4
          %451 = dma.hbm_to_vmem [thread:$0]  (%p440), %s443, %s447, %s446, %s423, 256, 256, 16
        $region52: #{clam_mb_forward.1} parent=47 // pred_fallthru
          _
      $region48: #{clam_mb_forward.1} parent=5 // pred_fallthru
        _
      %p452 = scmp.le.s32.totalorder 1, %s24
      %p453 = scmp.lt.s32.totalorder %s24, 5
      %p454 = pnand %p452, %p453
      %p455 = pneg %p454
      // Predicated region
      $region53: #{clam_mb_forward.1} parent=5 // pred_check
        _
      $region54: #{clam_mb_forward.1} parent=5 // pred_check_branch
        %457 = sbr.rel (%p454) target = $region56
      $region55: #{clam_mb_forward.1} parent=5 // pred_region
        %s458 = ssub.s32 %s24, 1
        %s459 = sand.u32 %s57, 1
        %s460 = scalar_lea.sflag [#allocation3], %s459
        %s461 = sand.u32 %s57, 1
        %s462 = smul.addr %s461, 256
        %s463 = scalar_lea.vmem [#allocation2], %s462
        // Predicated region
        $region57: #{clam_mb_forward.1} parent=55 // pred_check
          %p464 = pneg %p70
        $region58: #{clam_mb_forward.1} parent=55 // pred_check_branch
          %466 = sbr.rel (%p464) target = $region60
        $region59: #{clam_mb_forward.1} parent=55 // pred_region
          %467 = dma.done %s460, 4096
        $region60: #{clam_mb_forward.1} parent=55 // pred_fallthru
          _
        // Predicated region
        $region61: #{clam_mb_forward.1} parent=55 // pred_check
          %p468 = pneg %p91
        $region62: #{clam_mb_forward.1} parent=55 // pred_check_branch
          %470 = sbr.rel (%p468) target = $region64
        $region63: #{clam_mb_forward.1} parent=55 // pred_region
          %471 = dma.done [#allocation5], 8192
        $region64: #{clam_mb_forward.1} parent=55 // pred_fallthru
          _
        // Predicated region
        $region65: #{clam_mb_forward.1} parent=55 // pred_check
          %p472 = pneg %p133
        $region66: #{clam_mb_forward.1} parent=55 // pred_check_branch
          %474 = sbr.rel (%p472) target = $region68
        $region67: #{clam_mb_forward.1} parent=55 // pred_region
          %475 = dma.done [#allocation5], 8192
        $region68: #{clam_mb_forward.1} parent=55 // pred_fallthru
          _
        // Predicated region
        $region69: #{clam_mb_forward.1} parent=55 // pred_check
          %p476 = pneg %p175
        $region70: #{clam_mb_forward.1} parent=55 // pred_check_branch
          %478 = sbr.rel (%p476) target = $region72
        $region71: #{clam_mb_forward.1} parent=55 // pred_region
          %479 = dma.done [#allocation8], 8192
        $region72: #{clam_mb_forward.1} parent=55 // pred_fallthru
          _
        %s480 = sand.u32 %s57, 1
        %s481 = scalar_lea.sflag [#allocation3], %s480
        %s482 = sand.u32 %s57, 1
        %s483 = smul.addr %s482, 256
        %s484 = scalar_lea.vmem [#allocation2], %s483
        %p485 = pneg %p70
        %p486 = pneg %p67
        %p487 = pneg %p91
        %p488 = pneg %p88
        %p489 = pneg %p112
        %p490 = pneg %p109
        %p491 = pneg %p133
        %p492 = pneg %p130
        %p493 = pneg %p154
        %p494 = pneg %p151
        %p495 = pneg %p175
        %p496 = pneg %p172
        %p497 = pneg %p196
        %p498 = pneg %p193
        %p499 = pneg %p217
        %p500 = pneg %p214
        %p501 = pneg %p238
        %p502 = pneg %p235
        %p503 = pneg %p268
        %p504 = pneg %p265
        %s505 = smul.u32 %s33, 2
        %s506 = sadd.s32 %s505, %s34
        %p507 = scmp.lt.s32.totalorder %s506, 3
        %s508 = scalar_select %p507, %s506, 3
        %s509 = smul.addr %s508, 2
        %s510 = scalar_lea.vmem %s9, %s509
        %p511 = pneg %p294
        %p512 = pneg %p291
        %p513 = scmp.lt.s32.totalorder %s33, 1
        %s514 = scalar_select %p513, %s33, 1
        %s515 = smul.addr %s514, 2
        %s516 = scalar_lea.vmem %s10, %s515
        %p517 = pneg %p320
        %p518 = pneg %p317
        %p519 = scmp.lt.s32.totalorder %s33, 1
        %s520 = scalar_select %p519, %s33, 1
        %s521 = smul.addr %s520, 2
        %s522 = scalar_lea.vmem %s11, %s521
        %p523 = pneg %p346
        %p524 = pneg %p343
        %p525 = scmp.lt.s32.totalorder %s33, 1
        %s526 = scalar_select %p525, %s33, 1
        %s527 = smul.addr %s526, 4
        %s528 = smul.addr %s527, 2
        %s529 = scalar_lea.vmem %s12, %s528
        %s530 = smul.u32 %s33, 2
        %s531 = sadd.s32 %s530, %s34
        %p532 = scmp.lt.s32.totalorder %s531, 2
        %s533 = scalar_select %p532, %s531, 2
        %s534 = smul.u32 16, %s533
        %s535 = ssub.s32 38, %s534
        %p536 = scmp.lt.s32.totalorder %s535, 16
        %s537 = scalar_select %p536, %s535, 16
        %s538 = smul.u32 128, %s537
        %s539 = smul.u32 %s538, 2
        %s540 = smul.u32 %s33, 2
        %s541 = sadd.s32 %s540, %s34
        %p542 = scmp.lt.s32.totalorder %s541, 3
        %s543 = scalar_select %p542, %s541, 3
        %s544 = smul.addr %s543, 2
        %s545 = scalar_lea.vmem %s9, %s544
        %s546 = smul.u32 %s33, 2
        %s547 = sadd.s32 %s546, %s34
        %p548 = scmp.lt.s32.totalorder %s33, 1
        %s549 = scalar_select %p548, %s33, 1
        %s550 = smul.addr %s549, 2
        %s551 = scalar_lea.vmem %s10, %s550
        %p552 = scmp.lt.s32.totalorder %s33, 1
        %s553 = scalar_select %p552, %s33, 1
        %s554 = smul.addr %s553, 2
        %s555 = scalar_lea.vmem %s11, %s554
        %p556 = scmp.lt.s32.totalorder %s33, 1
        %s557 = scalar_select %p556, %s33, 1
        %s558 = smul.addr %s557, 4
        %s559 = smul.addr %s558, 2
        %s560 = scalar_lea.vmem %s12, %s559
        %s564 = smul.u32 %s33, 2
        %s565 = sadd.s32 %s564, %s34
        %s566 = smul.u32 %s565, 128
        %p567 = scmp.eq.s32.totalorder %s34, 0
        // Predicated region
        $region73: #{clam_mb_forward.1} parent=55 // pred_check
          %p568 = pneg %p567
        $region74: #{clam_mb_forward.1} parent=55 // pred_check_branch
          %570 = sbr.rel (%p568) target = $region76
        $region75: #{clam_mb_forward.1} parent=55 // pred_region
          %vm571 = vcmask 1024
          %572 = vst.msk [vmem:[%s551] sm:$0x3] %vm571, -1e+30
          %573 = vst.msk [vmem:[%s555] sm:$0x3] %vm571, 0.0
          %574 = vst [vmem:[%s560] sm:$0xff] 0.0
        $region76: #{clam_mb_forward.1} parent=55 // pred_fallthru
          _
        %v575 = vld [vmem:[%s463] sm:$0xff]
        %v576 = vld [vmem:[%s463 + $0x8] sm:$0xff]
        %v577 = vld [vmem:[%s463 + $0x10] sm:$0xff]
        %v578 = vld [vmem:[%s463 + $0x18] sm:$0xff]
        %v579 = vld [vmem:[%s463 + $0x20] sm:$0xff]
        %v580 = vld [vmem:[%s463 + $0x28] sm:$0xff]
        %v581 = vld [vmem:[%s463 + $0x30] sm:$0xff]
        %v582 = vld [vmem:[%s463 + $0x38] sm:$0xff]
        %v583 = vld [vmem:[%s463 + $0x40] sm:$0xff]
        %v584 = vld [vmem:[%s463 + $0x48] sm:$0xff]
        %v585 = vld [vmem:[%s463 + $0x50] sm:$0xff]
        %v586 = vld [vmem:[%s463 + $0x58] sm:$0xff]
        %v587 = vld [vmem:[%s463 + $0x60] sm:$0xff]
        %v588 = vld [vmem:[%s463 + $0x68] sm:$0xff]
        %v589 = vld [vmem:[%s463 + $0x70] sm:$0xff]
        %v590 = vld [vmem:[%s463 + $0x78] sm:$0xff]
        %v591 = vld [vmem:[%s463 + $0x80] sm:$0xff]
        %v592 = vld [vmem:[%s463 + $0x88] sm:$0xff]
        %v593 = vld [vmem:[%s463 + $0x90] sm:$0xff]
        %v594 = vld [vmem:[%s463 + $0x98] sm:$0xff]
        %v595 = vld [vmem:[%s463 + $0xa0] sm:$0xff]
        %v596 = vld [vmem:[%s463 + $0xa8] sm:$0xff]
        %v597 = vld [vmem:[%s463 + $0xb0] sm:$0xff]
        %v598 = vld [vmem:[%s463 + $0xb8] sm:$0xff]
        %v599 = vld [vmem:[%s463 + $0xc0] sm:$0xff]
        %v600 = vld [vmem:[%s463 + $0xc8] sm:$0xff]
        %v601 = vld [vmem:[%s463 + $0xd0] sm:$0xff]
        %v602 = vld [vmem:[%s463 + $0xd8] sm:$0xff]
        %v603 = vld [vmem:[%s463 + $0xe0] sm:$0xff]
        %v604 = vld [vmem:[%s463 + $0xe8] sm:$0xff]
        %v605 = vld [vmem:[%s463 + $0xf0] sm:$0xff]
        %v606 = vld [vmem:[%s463 + $0xf8] sm:$0xff]
        %v607 = vpack.c.bf16 %v577, %v575
        %v608 = vpack.c.bf16 %v578, %v576
        %v609 = vpack.c.bf16 %v581, %v579
        %v610 = vpack.c.bf16 %v582, %v580
        %v611 = vpack.c.bf16 %v585, %v583
        %v612 = vpack.c.bf16 %v586, %v584
        %v613 = vpack.c.bf16 %v589, %v587
        %v614 = vpack.c.bf16 %v590, %v588
        %v615 = vpack.c.bf16 %v593, %v591
        %v616 = vpack.c.bf16 %v594, %v592
        %v617 = vpack.c.bf16 %v597, %v595
        %v618 = vpack.c.bf16 %v598, %v596
        %v619 = vpack.c.bf16 %v601, %v599
        %v620 = vpack.c.bf16 %v602, %v600
        %v621 = vpack.c.bf16 %v605, %v603
        %v622 = vpack.c.bf16 %v606, %v604
        %v623 = vlaneseq
        %v624 = vshrl.u32 %v623, 7
        %v625 = vadd.s32 %v624, 8
        %v626 = vadd.s32 %v624, 16
        %v627 = vadd.s32 %v624, 24
        %v628 = vadd.s32 %v624, 32
        %v629 = vadd.s32 %v624, 40
        %v630 = vadd.s32 %v624, 48
        %v631 = vadd.s32 %v624, 56
        %v632 = vadd.s32 %v624, 64
        %v633 = vadd.s32 %v624, 72
        %v634 = vadd.s32 %v624, 80
        %v635 = vadd.s32 %v624, 88
        %v636 = vadd.s32 %v624, 96
        %v637 = vadd.s32 %v624, 104
        %v638 = vadd.s32 %v624, 112
        %v639 = vadd.s32 %v624, 120
        %v640 = vstv %s566
        %v641 = vadd.s32 %v640, %v624
        %v642 = vadd.s32 %v640, %v625
        %v643 = vadd.s32 %v640, %v626
        %v644 = vadd.s32 %v640, %v627
        %v645 = vadd.s32 %v640, %v628
        %v646 = vadd.s32 %v640, %v629
        %v647 = vadd.s32 %v640, %v630
        %v648 = vadd.s32 %v640, %v631
        %v649 = vadd.s32 %v640, %v632
        %v650 = vadd.s32 %v640, %v633
        %v651 = vadd.s32 %v640, %v634
        %v652 = vadd.s32 %v640, %v635
        %v653 = vadd.s32 %v640, %v636
        %v654 = vadd.s32 %v640, %v637
        %v655 = vadd.s32 %v640, %v638
        %v656 = vadd.s32 %v640, %v639
        %vm657 = vcmp.lt.s32.totalorder %v641, 300
        %vm658 = vcmp.lt.s32.totalorder %v642, 300
        %vm659 = vcmp.lt.s32.totalorder %v643, 300
        %vm660 = vcmp.lt.s32.totalorder %v644, 300
        %vm661 = vcmp.lt.s32.totalorder %v645, 300
        %vm662 = vcmp.lt.s32.totalorder %v646, 300
        %vm663 = vcmp.lt.s32.totalorder %v647, 300
        %vm664 = vcmp.lt.s32.totalorder %v648, 300
        %vm665 = vcmp.lt.s32.totalorder %v649, 300
        %vm666 = vcmp.lt.s32.totalorder %v650, 300
        %vm667 = vcmp.lt.s32.totalorder %v651, 300
        %vm668 = vcmp.lt.s32.totalorder %v652, 300
        %vm669 = vcmp.lt.s32.totalorder %v653, 300
        %vm670 = vcmp.lt.s32.totalorder %v654, 300
        %vm671 = vcmp.lt.s32.totalorder %v655, 300
        %vm672 = vcmp.lt.s32.totalorder %v656, 300
        %v673 = vsel %vm657, 1, 0
        %v674 = vsel %vm658, 1, 0
        %v675 = vsel %vm659, 1, 0
        %v676 = vsel %vm660, 1, 0
        %v677 = vsel %vm661, 1, 0
        %v678 = vsel %vm662, 1, 0
        %v679 = vsel %vm663, 1, 0
        %v680 = vsel %vm664, 1, 0
        %v681 = vsel %vm665, 1, 0
        %v682 = vsel %vm666, 1, 0
        %v683 = vsel %vm667, 1, 0
        %v684 = vsel %vm668, 1, 0
        %v685 = vsel %vm669, 1, 0
        %v686 = vsel %vm670, 1, 0
        %v687 = vsel %vm671, 1, 0
        %v688 = vsel %vm672, 1, 0
        %vm689 = vcmp.eq.s32.totalorder %v673, 1
        %vm690 = vcmp.eq.s32.totalorder %v674, 1
        %vm691 = vcmp.eq.s32.totalorder %v675, 1
        %vm692 = vcmp.eq.s32.totalorder %v676, 1
        %vm693 = vcmp.eq.s32.totalorder %v677, 1
        %vm694 = vcmp.eq.s32.totalorder %v678, 1
        %vm695 = vcmp.eq.s32.totalorder %v679, 1
        %vm696 = vcmp.eq.s32.totalorder %v680, 1
        %vm697 = vcmp.eq.s32.totalorder %v681, 1
        %vm698 = vcmp.eq.s32.totalorder %v682, 1
        %vm699 = vcmp.eq.s32.totalorder %v683, 1
        %vm700 = vcmp.eq.s32.totalorder %v684, 1
        %vm701 = vcmp.eq.s32.totalorder %v685, 1
        %vm702 = vcmp.eq.s32.totalorder %v686, 1
        %vm703 = vcmp.eq.s32.totalorder %v687, 1
        %vm704 = vcmp.eq.s32.totalorder %v688, 1
        %vm705 = vmpackc.low %vm689, %vm689
        %vm706 = vmpackc.low %vm690, %vm690
        %vm707 = vmpackc.low %vm691, %vm691
        %vm708 = vmpackc.low %vm692, %vm692
        %vm709 = vmpackc.low %vm693, %vm693
        %vm710 = vmpackc.low %vm694, %vm694
        %vm711 = vmpackc.low %vm695, %vm695
        %vm712 = vmpackc.low %vm696, %vm696
        %vm713 = vmpackc.low %vm697, %vm697
        %vm714 = vmpackc.low %vm698, %vm698
        %vm715 = vmpackc.low %vm699, %vm699
        %vm716 = vmpackc.low %vm700, %vm700
        %vm717 = vmpackc.low %vm701, %vm701
        %vm718 = vmpackc.low %vm702, %vm702
        %vm719 = vmpackc.low %vm703, %vm703
        %vm720 = vmpackc.low %vm704, %vm704
        %v721 = vsel %vm705, 65537, 0
        %v722 = vsel %vm706, 65537, 0
        %v723 = vsel %vm707, 65537, 0
        %v724 = vsel %vm708, 65537, 0
        %v725 = vsel %vm709, 65537, 0
        %v726 = vsel %vm710, 65537, 0
        %v727 = vsel %vm711, 65537, 0
        %v728 = vsel %vm712, 65537, 0
        %v729 = vsel %vm713, 65537, 0
        %v730 = vsel %vm714, 65537, 0
        %v731 = vsel %vm715, 65537, 0
        %v732 = vsel %vm716, 65537, 0
        %v733 = vsel %vm717, 65537, 0
        %v734 = vsel %vm718, 65537, 0
        %v735 = vsel %vm719, 65537, 0
        %v736 = vsel %vm720, 65537, 0
        %v737 = vunpack.c.l.b16 %v721
        %v738 = vunpack.c.l.b16 %v722
        %v739 = vunpack.c.l.b16 %v723
        %v740 = vunpack.c.l.b16 %v724
        %v741 = vunpack.c.l.b16 %v725
        %v742 = vunpack.c.l.b16 %v726
        %v743 = vunpack.c.l.b16 %v727
        %v744 = vunpack.c.l.b16 %v728
        %v745 = vunpack.c.l.b16 %v729
        %v746 = vunpack.c.l.b16 %v730
        %v747 = vunpack.c.l.b16 %v731
        %v748 = vunpack.c.l.b16 %v732
        %v749 = vunpack.c.l.b16 %v733
        %v750 = vunpack.c.l.b16 %v734
        %v751 = vunpack.c.l.b16 %v735
        %v752 = vunpack.c.l.b16 %v736
        %v753 = vpack.c.b16 %v738, %v737
        %v754 = vpack.c.b16 %v740, %v739
        %v755 = vpack.c.b16 %v742, %v741
        %v756 = vpack.c.b16 %v744, %v743
        %v757 = vpack.c.b16 %v746, %v745
        %v758 = vpack.c.b16 %v748, %v747
        %v759 = vpack.c.b16 %v750, %v749
        %v760 = vpack.c.b16 %v752, %v751
        %vm761 = vcmp.ne.s16.totalorder %v753, 0
        %vm762 = vcmp.ne.s16.totalorder %v754, 0
        %vm763 = vcmp.ne.s16.totalorder %v755, 0
        %vm764 = vcmp.ne.s16.totalorder %v756, 0
        %vm765 = vcmp.ne.s16.totalorder %v757, 0
        %vm766 = vcmp.ne.s16.totalorder %v758, 0
        %vm767 = vcmp.ne.s16.totalorder %v759, 0
        %vm768 = vcmp.ne.s16.totalorder %v760, 0
        %v769 = vsel %vm761, %v607, 0
        %v770 = vsel %vm761, %v608, 0
        %v771 = vsel %vm762, %v609, 0
        %v772 = vsel %vm762, %v610, 0
        %v773 = vsel %vm763, %v611, 0
        %v774 = vsel %vm763, %v612, 0
        %v775 = vsel %vm764, %v613, 0
        %v776 = vsel %vm764, %v614, 0
        %v777 = vsel %vm765, %v615, 0
        %v778 = vsel %vm765, %v616, 0
        %v779 = vsel %vm766, %v617, 0
        %v780 = vsel %vm766, %v618, 0
        %v781 = vsel %vm767, %v619, 0
        %v782 = vsel %vm767, %v620, 0
        %v783 = vsel %vm768, %v621, 0
        %v784 = vsel %vm768, %v622, 0
        %v785 = vld [vmem:[#allocation4] sm:$0xff]
        %v786 = vld [vmem:[#allocation4 + $0x8] sm:$0xff]
        %v787 = vld [vmem:[#allocation4 + $0x10] sm:$0xff]
        %v788 = vld [vmem:[#allocation4 + $0x18] sm:$0xff]
        %v789 = vld [vmem:[#allocation4 + $0x20] sm:$0xff]
        %v790 = vld [vmem:[#allocation4 + $0x28] sm:$0xff]
        %v791 = vld [vmem:[#allocation4 + $0x30] sm:$0xff]
        %v792 = vld [vmem:[#allocation4 + $0x38] sm:$0xff]
        %v793 = vld [vmem:[#allocation4 + $0x40] sm:$0xff]
        %v794 = vld [vmem:[#allocation4 + $0x48] sm:$0xff]
        %v795 = vld [vmem:[#allocation4 + $0x50] sm:$0xff]
        %v796 = vld [vmem:[#allocation4 + $0x58] sm:$0xff]
        %v797 = vld [vmem:[#allocation4 + $0x60] sm:$0xff]
        %v798 = vld [vmem:[#allocation4 + $0x68] sm:$0xff]
        %v799 = vld [vmem:[#allocation4 + $0x70] sm:$0xff]
        %v800 = vld [vmem:[#allocation4 + $0x78] sm:$0xff]
        %v801 = vld [vmem:[#allocation4 + $0x80] sm:$0xff]
        %v802 = vld [vmem:[#allocation4 + $0x88] sm:$0xff]
        %v803 = vld [vmem:[#allocation4 + $0x90] sm:$0xff]
        %v804 = vld [vmem:[#allocation4 + $0x98] sm:$0xff]
        %v805 = vld [vmem:[#allocation4 + $0xa0] sm:$0xff]
        %v806 = vld [vmem:[#allocation4 + $0xa8] sm:$0xff]
        %v807 = vld [vmem:[#allocation4 + $0xb0] sm:$0xff]
        %v808 = vld [vmem:[#allocation4 + $0xb8] sm:$0xff]
        %v809 = vld [vmem:[#allocation4 + $0xc0] sm:$0xff]
        %v810 = vld [vmem:[#allocation4 + $0xc8] sm:$0xff]
        %v811 = vld [vmem:[#allocation4 + $0xd0] sm:$0xff]
        %v812 = vld [vmem:[#allocation4 + $0xd8] sm:$0xff]
        %v813 = vld [vmem:[#allocation4 + $0xe0] sm:$0xff]
        %v814 = vld [vmem:[#allocation4 + $0xe8] sm:$0xff]
        %v815 = vld [vmem:[#allocation4 + $0xf0] sm:$0xff]
        %v816 = vld [vmem:[#allocation4 + $0xf8] sm:$0xff]
        %v817 = vld [vmem:[#allocation4 + $0x100] sm:$0xff]
        %v818 = vld [vmem:[#allocation4 + $0x108] sm:$0xff]
        %v819 = vld [vmem:[#allocation4 + $0x110] sm:$0xff]
        %v820 = vld [vmem:[#allocation4 + $0x118] sm:$0xff]
        %v821 = vld [vmem:[#allocation4 + $0x120] sm:$0xff]
        %v822 = vld [vmem:[#allocation4 + $0x128] sm:$0xff]
        %v823 = vld [vmem:[#allocation4 + $0x130] sm:$0xff]
        %v824 = vld [vmem:[#allocation4 + $0x138] sm:$0xff]
        %v825 = vld [vmem:[#allocation4 + $0x140] sm:$0xff]
        %v826 = vld [vmem:[#allocation4 + $0x148] sm:$0xff]
        %v827 = vld [vmem:[#allocation4 + $0x150] sm:$0xff]
        %v828 = vld [vmem:[#allocation4 + $0x158] sm:$0xff]
        %v829 = vld [vmem:[#allocation4 + $0x160] sm:$0xff]
        %v830 = vld [vmem:[#allocation4 + $0x168] sm:$0xff]
        %v831 = vld [vmem:[#allocation4 + $0x170] sm:$0xff]
        %v832 = vld [vmem:[#allocation4 + $0x178] sm:$0xff]
        %v833 = vld [vmem:[#allocation4 + $0x180] sm:$0xff]
        %v834 = vld [vmem:[#allocation4 + $0x188] sm:$0xff]
        %v835 = vld [vmem:[#allocation4 + $0x190] sm:$0xff]
        %v836 = vld [vmem:[#allocation4 + $0x198] sm:$0xff]
        %v837 = vld [vmem:[#allocation4 + $0x1a0] sm:$0xff]
        %v838 = vld [vmem:[#allocation4 + $0x1a8] sm:$0xff]
        %v839 = vld [vmem:[#allocation4 + $0x1b0] sm:$0xff]
        %v840 = vld [vmem:[#allocation4 + $0x1b8] sm:$0xff]
        %v841 = vld [vmem:[#allocation4 + $0x1c0] sm:$0xff]
        %v842 = vld [vmem:[#allocation4 + $0x1c8] sm:$0xff]
        %v843 = vld [vmem:[#allocation4 + $0x1d0] sm:$0xff]
        %v844 = vld [vmem:[#allocation4 + $0x1d8] sm:$0xff]
        %v845 = vld [vmem:[#allocation4 + $0x1e0] sm:$0xff]
        %v846 = vld [vmem:[#allocation4 + $0x1e8] sm:$0xff]
        %v847 = vld [vmem:[#allocation4 + $0x1f0] sm:$0xff]
        %v848 = vld [vmem:[#allocation4 + $0x1f8] sm:$0xff]
        %v849 = vld [vmem:[%s2] sm:$0xf]
        %v851 = vlaneseq
        %v852 = vshrl.u32 %v851, 7
        %v853 = vsub.s32 0, %v852
        %v854 = vrot.slane %v849, %v853
        %v855 = vlaneseq
        %v856 = vshrl.u32 %v855, 7
        %v857 = vsub.s32 1, %v856
        %v858 = vrot.slane %v849, %v857
        %v859 = vlaneseq
        %v860 = vshrl.u32 %v859, 7
        %v861 = vsub.s32 2, %v860
        %v862 = vrot.slane %v849, %v861
        %v863 = vlaneseq
        %v864 = vshrl.u32 %v863, 7
        %v865 = vsub.s32 3, %v864
        %v866 = vrot.slane %v849, %v865
        %v935 = vunpack.c.l.b16 %v785
        %v936 = vunpack.c.h.b16 %v785
        %v937 = vunpack.c.l.b16 %v786
        %v938 = vunpack.c.h.b16 %v786
        %v939 = vunpack.c.l.b16 %v787
        %v940 = vunpack.c.h.b16 %v787
        %v941 = vunpack.c.l.b16 %v788
        %v942 = vunpack.c.h.b16 %v788
        %v943 = vunpack.c.l.b16 %v789
        %v944 = vunpack.c.h.b16 %v789
        %v945 = vunpack.c.l.b16 %v790
        %v946 = vunpack.c.h.b16 %v790
        %v947 = vunpack.c.l.b16 %v791
        %v948 = vunpack.c.h.b16 %v791
        %v949 = vunpack.c.l.b16 %v792
        %v950 = vunpack.c.h.b16 %v792
        %v951 = vunpack.c.l.b16 %v793
        %v952 = vunpack.c.h.b16 %v793
        %v953 = vunpack.c.l.b16 %v794
        %v954 = vunpack.c.h.b16 %v794
        %v955 = vunpack.c.l.b16 %v795
        %v956 = vunpack.c.h.b16 %v795
        %v957 = vunpack.c.l.b16 %v796
        %v958 = vunpack.c.h.b16 %v796
        %v959 = vunpack.c.l.b16 %v797
        %v960 = vunpack.c.h.b16 %v797
        %v961 = vunpack.c.l.b16 %v798
        %v962 = vunpack.c.h.b16 %v798
        %v963 = vunpack.c.l.b16 %v799
        %v964 = vunpack.c.h.b16 %v799
        %v965 = vunpack.c.l.b16 %v800
        %v966 = vunpack.c.h.b16 %v800
        %v967 = vunpack.c.l.b16 %v801
        %v968 = vunpack.c.h.b16 %v801
        %v969 = vunpack.c.l.b16 %v802
        %v970 = vunpack.c.h.b16 %v802
        %v971 = vunpack.c.l.b16 %v803
        %v972 = vunpack.c.h.b16 %v803
        %v973 = vunpack.c.l.b16 %v804
        %v974 = vunpack.c.h.b16 %v804
        %v975 = vunpack.c.l.b16 %v805
        %v976 = vunpack.c.h.b16 %v805
        %v977 = vunpack.c.l.b16 %v806
        %v978 = vunpack.c.h.b16 %v806
        %v979 = vunpack.c.l.b16 %v807
        %v980 = vunpack.c.h.b16 %v807
        %v981 = vunpack.c.l.b16 %v808
        %v982 = vunpack.c.h.b16 %v808
        %v983 = vunpack.c.l.b16 %v809
        %v984 = vunpack.c.h.b16 %v809
        %v985 = vunpack.c.l.b16 %v810
        %v986 = vunpack.c.h.b16 %v810
        %v987 = vunpack.c.l.b16 %v811
        %v988 = vunpack.c.h.b16 %v811
        %v989 = vunpack.c.l.b16 %v812
        %v990 = vunpack.c.h.b16 %v812
        %v991 = vunpack.c.l.b16 %v813
        %v992 = vunpack.c.h.b16 %v813
        %v993 = vunpack.c.l.b16 %v814
        %v994 = vunpack.c.h.b16 %v814
        %v995 = vunpack.c.l.b16 %v815
        %v996 = vunpack.c.h.b16 %v815
        %v997 = vunpack.c.l.b16 %v816
        %v998 = vunpack.c.h.b16 %v816
        %v999 = vunpack.c.l.b16 %v817
        %v1000 = vunpack.c.h.b16 %v817
        %v1001 = vunpack.c.l.b16 %v818
        %v1002 = vunpack.c.h.b16 %v818
        %v1003 = vunpack.c.l.b16 %v819
        %v1004 = vunpack.c.h.b16 %v819
        %v1005 = vunpack.c.l.b16 %v820
        %v1006 = vunpack.c.h.b16 %v820
        %v1007 = vunpack.c.l.b16 %v821
        %v1008 = vunpack.c.h.b16 %v821
        %v1009 = vunpack.c.l.b16 %v822
        %v1010 = vunpack.c.h.b16 %v822
        %v1011 = vunpack.c.l.b16 %v823
        %v1012 = vunpack.c.h.b16 %v823
        %v1013 = vunpack.c.l.b16 %v824
        %v1014 = vunpack.c.h.b16 %v824
        %v1015 = vunpack.c.l.b16 %v825
        %v1016 = vunpack.c.h.b16 %v825
        %v1017 = vunpack.c.l.b16 %v826
        %v1018 = vunpack.c.h.b16 %v826
        %v1019 = vunpack.c.l.b16 %v827
        %v1020 = vunpack.c.h.b16 %v827
        %v1021 = vunpack.c.l.b16 %v828
        %v1022 = vunpack.c.h.b16 %v828
        %v1023 = vunpack.c.l.b16 %v829
        %v1024 = vunpack.c.h.b16 %v829
        %v1025 = vunpack.c.l.b16 %v830
        %v1026 = vunpack.c.h.b16 %v830
        %v1027 = vunpack.c.l.b16 %v831
        %v1028 = vunpack.c.h.b16 %v831
        %v1029 = vunpack.c.l.b16 %v832
        %v1030 = vunpack.c.h.b16 %v832
        %v1031 = vunpack.c.l.b16 %v833
        %v1032 = vunpack.c.h.b16 %v833
        %v1033 = vunpack.c.l.b16 %v834
        %v1034 = vunpack.c.h.b16 %v834
        %v1035 = vunpack.c.l.b16 %v835
        %v1036 = vunpack.c.h.b16 %v835
        %v1037 = vunpack.c.l.b16 %v836
        %v1038 = vunpack.c.h.b16 %v836
        %v1039 = vunpack.c.l.b16 %v837
        %v1040 = vunpack.c.h.b16 %v837
        %v1041 = vunpack.c.l.b16 %v838
        %v1042 = vunpack.c.h.b16 %v838
        %v1043 = vunpack.c.l.b16 %v839
        %v1044 = vunpack.c.h.b16 %v839
        %v1045 = vunpack.c.l.b16 %v840
        %v1046 = vunpack.c.h.b16 %v840
        %v1047 = vunpack.c.l.b16 %v841
        %v1048 = vunpack.c.h.b16 %v841
        %v1049 = vunpack.c.l.b16 %v842
        %v1050 = vunpack.c.h.b16 %v842
        %v1051 = vunpack.c.l.b16 %v843
        %v1052 = vunpack.c.h.b16 %v843
        %v1053 = vunpack.c.l.b16 %v844
        %v1054 = vunpack.c.h.b16 %v844
        %v1055 = vunpack.c.l.b16 %v845
        %v1056 = vunpack.c.h.b16 %v845
        %v1057 = vunpack.c.l.b16 %v846
        %v1058 = vunpack.c.h.b16 %v846
        %v1059 = vunpack.c.l.b16 %v847
        %v1060 = vunpack.c.h.b16 %v847
        %v1061 = vunpack.c.l.b16 %v848
        %v1062 = vunpack.c.h.b16 %v848
        %v1063 = vpack.c.b16 %v939, %v935
        %v1064 = vpack.c.b16 %v940, %v936
        %v1065 = vpack.c.b16 %v941, %v937
        %v1066 = vpack.c.b16 %v942, %v938
        %v1067 = vpack.c.b16 %v947, %v943
        %v1068 = vpack.c.b16 %v948, %v944
        %v1069 = vpack.c.b16 %v949, %v945
        %v1070 = vpack.c.b16 %v950, %v946
        %v1071 = vpack.c.b16 %v955, %v951
        %v1072 = vpack.c.b16 %v956, %v952
        %v1073 = vpack.c.b16 %v957, %v953
        %v1074 = vpack.c.b16 %v958, %v954
        %v1075 = vpack.c.b16 %v963, %v959
        %v1076 = vpack.c.b16 %v964, %v960
        %v1077 = vpack.c.b16 %v965, %v961
        %v1078 = vpack.c.b16 %v966, %v962
        %v1079 = vpack.c.b16 %v971, %v967
        %v1080 = vpack.c.b16 %v972, %v968
        %v1081 = vpack.c.b16 %v973, %v969
        %v1082 = vpack.c.b16 %v974, %v970
        %v1083 = vpack.c.b16 %v979, %v975
        %v1084 = vpack.c.b16 %v980, %v976
        %v1085 = vpack.c.b16 %v981, %v977
        %v1086 = vpack.c.b16 %v982, %v978
        %v1087 = vpack.c.b16 %v987, %v983
        %v1088 = vpack.c.b16 %v988, %v984
        %v1089 = vpack.c.b16 %v989, %v985
        %v1090 = vpack.c.b16 %v990, %v986
        %v1091 = vpack.c.b16 %v995, %v991
        %v1092 = vpack.c.b16 %v996, %v992
        %v1093 = vpack.c.b16 %v997, %v993
        %v1094 = vpack.c.b16 %v998, %v994
        %v1095 = vpack.c.b16 %v1003, %v999
        %v1096 = vpack.c.b16 %v1004, %v1000
        %v1097 = vpack.c.b16 %v1005, %v1001
        %v1098 = vpack.c.b16 %v1006, %v1002
        %v1099 = vpack.c.b16 %v1011, %v1007
        %v1100 = vpack.c.b16 %v1012, %v1008
        %v1101 = vpack.c.b16 %v1013, %v1009
        %v1102 = vpack.c.b16 %v1014, %v1010
        %v1103 = vpack.c.b16 %v1019, %v1015
        %v1104 = vpack.c.b16 %v1020, %v1016
        %v1105 = vpack.c.b16 %v1021, %v1017
        %v1106 = vpack.c.b16 %v1022, %v1018
        %v1107 = vpack.c.b16 %v1027, %v1023
        %v1108 = vpack.c.b16 %v1028, %v1024
        %v1109 = vpack.c.b16 %v1029, %v1025
        %v1110 = vpack.c.b16 %v1030, %v1026
        %v1111 = vpack.c.b16 %v1035, %v1031
        %v1112 = vpack.c.b16 %v1036, %v1032
        %v1113 = vpack.c.b16 %v1037, %v1033
        %v1114 = vpack.c.b16 %v1038, %v1034
        %v1115 = vpack.c.b16 %v1043, %v1039
        %v1116 = vpack.c.b16 %v1044, %v1040
        %v1117 = vpack.c.b16 %v1045, %v1041
        %v1118 = vpack.c.b16 %v1046, %v1042
        %v1119 = vpack.c.b16 %v1051, %v1047
        %v1120 = vpack.c.b16 %v1052, %v1048
        %v1121 = vpack.c.b16 %v1053, %v1049
        %v1122 = vpack.c.b16 %v1054, %v1050
        %v1123 = vpack.c.b16 %v1059, %v1055
        %v1124 = vpack.c.b16 %v1060, %v1056
        %v1125 = vpack.c.b16 %v1061, %v1057
        %v1126 = vpack.c.b16 %v1062, %v1058
        %1191 = vmatprep.subr.bf16.mxu0 %v1064
        %1192 = vmatpush1.bf16.msra.mxu0 %v1063
        %1193 = vmatprep.subr.bf16.mxu0 %v1068
        %1194 = vmatpush1.bf16.msra.mxu0 %v1067
        %1195 = vmatprep.subr.bf16.mxu0 %v1072
        %1196 = vmatpush1.bf16.msra.mxu0 %v1071
        %1197 = vmatprep.subr.bf16.mxu0 %v1076
        %1198 = vmatpush1.bf16.msra.mxu0 %v1075
        %1199 = vmatprep.subr.bf16.mxu0 %v1080
        %1200 = vmatpush1.bf16.msra.mxu0 %v1079
        %1201 = vmatprep.subr.bf16.mxu0 %v1084
        %1202 = vmatpush1.bf16.msra.mxu0 %v1083
        %1203 = vmatprep.subr.bf16.mxu0 %v1088
        %1204 = vmatpush1.bf16.msra.mxu0 %v1087
        %1205 = vmatprep.subr.bf16.mxu0 %v1092
        %1206 = vmatpush1.bf16.msra.mxu0 %v1091
        %1207 = vmatprep.subr.bf16.mxu0 %v1096
        %1208 = vmatpush1.bf16.msra.mxu0 %v1095
        %1209 = vmatprep.subr.bf16.mxu0 %v1100
        %1210 = vmatpush1.bf16.msra.mxu0 %v1099
        %1211 = vmatprep.subr.bf16.mxu0 %v1104
        %1212 = vmatpush1.bf16.msra.mxu0 %v1103
        %1213 = vmatprep.subr.bf16.mxu0 %v1108
        %1214 = vmatpush1.bf16.msra.mxu0 %v1107
        %1215 = vmatprep.subr.bf16.mxu0 %v1112
        %1216 = vmatpush1.bf16.msra.mxu0 %v1111
        %1217 = vmatprep.subr.bf16.mxu0 %v1116
        %1218 = vmatpush1.bf16.msra.mxu0 %v1115
        %1219 = vmatprep.subr.bf16.mxu0 %v1120
        %1220 = vmatpush1.bf16.msra.mxu0 %v1119
        %1221 = vmatprep.subr.bf16.mxu0 %v1124
        %1222 = vmatpush1.bf16.msra.mxu0 %v1123
        %1223 = vmatprep.mubr.bf16.mxu0 %v770
        %1224 = vmatmul.mubr.bf16.gmra.mrb[0].mxu0 %v769
        %v1225 = vpop.f32.mrb[0].mxu0
        %v1226 = vadd.f32 %v854, %v1225
        %v1227 = vpop.f32.mrb[0].mxu0
        %v1228 = vadd.f32 %v858, %v1227
        %v1229 = vpop.f32.mrb[0].mxu0
        %v1230 = vadd.f32 %v854, %v1229
        %v1231 = vpop.f32.mrb[0].mxu0
        %v1232 = vadd.f32 %v858, %v1231
        %1233 = vmatprep.mubr.bf16.mxu0 %v772
        %1234 = vmatmul.mubr.bf16.gmra.mrb[0].mxu0 %v771
        %v1235 = vpop.f32.mrb[0].mxu0
        %v1236 = vadd.f32 %v854, %v1235
        %v1237 = vpop.f32.mrb[0].mxu0
        %v1238 = vadd.f32 %v858, %v1237
        %v1239 = vpop.f32.mrb[0].mxu0
        %v1240 = vadd.f32 %v854, %v1239
        %v1241 = vpop.f32.mrb[0].mxu0
        %v1242 = vadd.f32 %v858, %v1241
        %1243 = vmatprep.mubr.bf16.mxu0 %v774
        %1244 = vmatmul.mubr.bf16.gmra.mrb[0].mxu0 %v773
        %v1245 = vpop.f32.mrb[0].mxu0
        %v1246 = vadd.f32 %v854, %v1245
        %v1247 = vpop.f32.mrb[0].mxu0
        %v1248 = vadd.f32 %v858, %v1247
        %v1249 = vpop.f32.mrb[0].mxu0
        %v1250 = vadd.f32 %v854, %v1249
        %v1251 = vpop.f32.mrb[0].mxu0
        %v1252 = vadd.f32 %v858, %v1251
        %1253 = vmatprep.mubr.bf16.mxu0 %v776
        %1254 = vmatmul.mubr.bf16.gmra.mrb[0].mxu0 %v775
        %v1255 = vpop.f32.mrb[0].mxu0
        %v1256 = vadd.f32 %v854, %v1255
        %v1257 = vpop.f32.mrb[0].mxu0
        %v1258 = vadd.f32 %v858, %v1257
        %v1259 = vpop.f32.mrb[0].mxu0
        %v1260 = vadd.f32 %v854, %v1259
        %v1261 = vpop.f32.mrb[0].mxu0
        %v1262 = vadd.f32 %v858, %v1261
        %1263 = vmatprep.mubr.bf16.mxu0 %v778
        %1264 = vmatmul.mubr.bf16.gmra.mrb[0].mxu0 %v777
        %v1265 = vpop.f32.mrb[0].mxu0
        %v1266 = vadd.f32 %v854, %v1265
        %v1267 = vpop.f32.mrb[0].mxu0
        %v1268 = vadd.f32 %v858, %v1267
        %v1269 = vpop.f32.mrb[0].mxu0
        %v1270 = vadd.f32 %v854, %v1269
        %v1271 = vpop.f32.mrb[0].mxu0
        %v1272 = vadd.f32 %v858, %v1271
        %1273 = vmatprep.mubr.bf16.mxu0 %v780
        %1274 = vmatmul.mubr.bf16.gmra.mrb[0].mxu0 %v779
        %v1275 = vpop.f32.mrb[0].mxu0
        %v1276 = vadd.f32 %v854, %v1275
        %v1277 = vpop.f32.mrb[0].mxu0
        %v1278 = vadd.f32 %v858, %v1277
        %v1279 = vpop.f32.mrb[0].mxu0
        %v1280 = vadd.f32 %v854, %v1279
        %v1281 = vpop.f32.mrb[0].mxu0
        %v1282 = vadd.f32 %v858, %v1281
        %1283 = vmatprep.mubr.bf16.mxu0 %v782
        %1284 = vmatmul.mubr.bf16.gmra.mrb[0].mxu0 %v781
        %v1285 = vpop.f32.mrb[0].mxu0
        %v1286 = vadd.f32 %v854, %v1285
        %v1287 = vpop.f32.mrb[0].mxu0
        %v1288 = vadd.f32 %v858, %v1287
        %v1289 = vpop.f32.mrb[0].mxu0
        %v1290 = vadd.f32 %v854, %v1289
        %v1291 = vpop.f32.mrb[0].mxu0
        %v1292 = vadd.f32 %v858, %v1291
        %1293 = vmatprep.mubr.bf16.mxu0 %v784
        %1294 = vmatmul.mubr.bf16.gmra.mrb[0].mxu0 %v783
        %v1295 = vpop.f32.mrb[0].mxu0
        %v1296 = vadd.f32 %v854, %v1295
        %v1297 = vpop.f32.mrb[0].mxu0
        %v1298 = vadd.f32 %v858, %v1297
        %v1299 = vpop.f32.mrb[0].mxu0
        %v1300 = vadd.f32 %v854, %v1299
        %v1301 = vpop.f32.mrb[0].mxu0
        %v1302 = vadd.f32 %v858, %v1301
        %1303 = vdwg.mxu0
        %1304 = vmatprep.subr.bf16.mxu0 %v1066
        %1305 = vmatpush1.bf16.msra.mxu0 %v1065
        %1306 = vmatprep.subr.bf16.mxu0 %v1070
        %1307 = vmatpush1.bf16.msra.mxu0 %v1069
        %1308 = vmatprep.subr.bf16.mxu0 %v1074
        %1309 = vmatpush1.bf16.msra.mxu0 %v1073
        %1310 = vmatprep.subr.bf16.mxu0 %v1078
        %1311 = vmatpush1.bf16.msra.mxu0 %v1077
        %1312 = vmatprep.subr.bf16.mxu0 %v1082
        %1313 = vmatpush1.bf16.msra.mxu0 %v1081
        %1314 = vmatprep.subr.bf16.mxu0 %v1086
        %1315 = vmatpush1.bf16.msra.mxu0 %v1085
        %1316 = vmatprep.subr.bf16.mxu0 %v1090
        %1317 = vmatpush1.bf16.msra.mxu0 %v1089
        %1318 = vmatprep.subr.bf16.mxu0 %v1094
        %1319 = vmatpush1.bf16.msra.mxu0 %v1093
        %1320 = vmatprep.subr.bf16.mxu0 %v1098
        %1321 = vmatpush1.bf16.msra.mxu0 %v1097
        %1322 = vmatprep.subr.bf16.mxu0 %v1102
        %1323 = vmatpush1.bf16.msra.mxu0 %v1101
        %1324 = vmatprep.subr.bf16.mxu0 %v1106
        %1325 = vmatpush1.bf16.msra.mxu0 %v1105
        %1326 = vmatprep.subr.bf16.mxu0 %v1110
        %1327 = vmatpush1.bf16.msra.mxu0 %v1109
        %1328 = vmatprep.subr.bf16.mxu0 %v1114
        %1329 = vmatpush1.bf16.msra.mxu0 %v1113
        %1330 = vmatprep.subr.bf16.mxu0 %v1118
        %1331 = vmatpush1.bf16.msra.mxu0 %v1117
        %1332 = vmatprep.subr.bf16.mxu0 %v1122
        %1333 = vmatpush1.bf16.msra.mxu0 %v1121
        %1334 = vmatprep.subr.bf16.mxu0 %v1126
        %1335 = vmatpush1.bf16.msra.mxu0 %v1125
        %1336 = vmatprep.mubr.bf16.mxu0 %v770
        %1337 = vmatmul.mubr.bf16.gmra.mrb[0].mxu0 %v769
        %v1338 = vpop.f32.mrb[0].mxu0
        %v1339 = vadd.f32 %v862, %v1338
        %v1340 = vpop.f32.mrb[0].mxu0
        %v1341 = vadd.f32 %v866, %v1340
        %v1342 = vpop.f32.mrb[0].mxu0
        %v1343 = vadd.f32 %v862, %v1342
        %v1344 = vpop.f32.mrb[0].mxu0
        %v1345 = vadd.f32 %v866, %v1344
        %1346 = vmatprep.mubr.bf16.mxu0 %v772
        %1347 = vmatmul.mubr.bf16.gmra.mrb[0].mxu0 %v771
        %v1348 = vpop.f32.mrb[0].mxu0
        %v1349 = vadd.f32 %v862, %v1348
        %v1350 = vpop.f32.mrb[0].mxu0
        %v1351 = vadd.f32 %v866, %v1350
        %v1352 = vpop.f32.mrb[0].mxu0
        %v1353 = vadd.f32 %v862, %v1352
        %v1354 = vpop.f32.mrb[0].mxu0
        %v1355 = vadd.f32 %v866, %v1354
        %1356 = vmatprep.mubr.bf16.mxu0 %v774
        %1357 = vmatmul.mubr.bf16.gmra.mrb[0].mxu0 %v773
        %v1358 = vpop.f32.mrb[0].mxu0
        %v1359 = vadd.f32 %v862, %v1358
        %v1360 = vpop.f32.mrb[0].mxu0
        %v1361 = vadd.f32 %v866, %v1360
        %v1362 = vpop.f32.mrb[0].mxu0
        %v1363 = vadd.f32 %v862, %v1362
        %v1364 = vpop.f32.mrb[0].mxu0
        %v1365 = vadd.f32 %v866, %v1364
        %1366 = vmatprep.mubr.bf16.mxu0 %v776
        %1367 = vmatmul.mubr.bf16.gmra.mrb[0].mxu0 %v775
        %v1368 = vpop.f32.mrb[0].mxu0
        %v1369 = vadd.f32 %v862, %v1368
        %v1370 = vpop.f32.mrb[0].mxu0
        %v1371 = vadd.f32 %v866, %v1370
        %v1372 = vpop.f32.mrb[0].mxu0
        %v1373 = vadd.f32 %v862, %v1372
        %v1374 = vpop.f32.mrb[0].mxu0
        %v1375 = vadd.f32 %v866, %v1374
        %1376 = vmatprep.mubr.bf16.mxu0 %v778
        %1377 = vmatmul.mubr.bf16.gmra.mrb[0].mxu0 %v777
        %v1378 = vpop.f32.mrb[0].mxu0
        %v1379 = vadd.f32 %v862, %v1378
        %v1380 = vpop.f32.mrb[0].mxu0
        %v1381 = vadd.f32 %v866, %v1380
        %v1382 = vpop.f32.mrb[0].mxu0
        %v1383 = vadd.f32 %v862, %v1382
        %v1384 = vpop.f32.mrb[0].mxu0
        %v1385 = vadd.f32 %v866, %v1384
        %1386 = vmatprep.mubr.bf16.mxu0 %v780
        %1387 = vmatmul.mubr.bf16.gmra.mrb[0].mxu0 %v779
        %v1388 = vpop.f32.mrb[0].mxu0
        %v1389 = vadd.f32 %v862, %v1388
        %v1390 = vpop.f32.mrb[0].mxu0
        %v1391 = vadd.f32 %v866, %v1390
        %v1392 = vpop.f32.mrb[0].mxu0
        %v1393 = vadd.f32 %v862, %v1392
        %v1394 = vpop.f32.mrb[0].mxu0
        %v1395 = vadd.f32 %v866, %v1394
        %1396 = vmatprep.mubr.bf16.mxu0 %v782
        %1397 = vmatmul.mubr.bf16.gmra.mrb[0].mxu0 %v781
        %v1398 = vpop.f32.mrb[0].mxu0
        %v1399 = vadd.f32 %v862, %v1398
        %v1400 = vpop.f32.mrb[0].mxu0
        %v1401 = vadd.f32 %v866, %v1400
        %v1402 = vpop.f32.mrb[0].mxu0
        %v1403 = vadd.f32 %v862, %v1402
        %v1404 = vpop.f32.mrb[0].mxu0
        %v1405 = vadd.f32 %v866, %v1404
        %1406 = vmatprep.mubr.bf16.mxu0 %v784
        %1407 = vmatmul.mubr.bf16.gmra.mrb[0].mxu0 %v783
        %v1408 = vpop.f32.mrb[0].mxu0
        %v1409 = vadd.f32 %v862, %v1408
        %v1410 = vpop.f32.mrb[0].mxu0
        %v1411 = vadd.f32 %v866, %v1410
        %v1412 = vpop.f32.mrb[0].mxu0
        %v1413 = vadd.f32 %v862, %v1412
        %v1414 = vpop.f32.mrb[0].mxu0
        %v1415 = vadd.f32 %v866, %v1414
        %1416 = vdwg.mxu0
        %v1417 = vmax.f32 %v1226, 0.0
        %v1418 = vmax.f32 %v1228, 0.0
        %v1419 = vmax.f32 %v1339, 0.0
        %v1420 = vmax.f32 %v1341, 0.0
        %v1421 = vmax.f32 %v1230, 0.0
        %v1422 = vmax.f32 %v1232, 0.0
        %v1423 = vmax.f32 %v1343, 0.0
        %v1424 = vmax.f32 %v1345, 0.0
        %v1425 = vmax.f32 %v1236, 0.0
        %v1426 = vmax.f32 %v1238, 0.0
        %v1427 = vmax.f32 %v1349, 0.0
        %v1428 = vmax.f32 %v1351, 0.0
        %v1429 = vmax.f32 %v1240, 0.0
        %v1430 = vmax.f32 %v1242, 0.0
        %v1431 = vmax.f32 %v1353, 0.0
        %v1432 = vmax.f32 %v1355, 0.0
        %v1433 = vmax.f32 %v1246, 0.0
        %v1434 = vmax.f32 %v1248, 0.0
        %v1435 = vmax.f32 %v1359, 0.0
        %v1436 = vmax.f32 %v1361, 0.0
        %v1437 = vmax.f32 %v1250, 0.0
        %v1438 = vmax.f32 %v1252, 0.0
        %v1439 = vmax.f32 %v1363, 0.0
        %v1440 = vmax.f32 %v1365, 0.0
        %v1441 = vmax.f32 %v1256, 0.0
        %v1442 = vmax.f32 %v1258, 0.0
        %v1443 = vmax.f32 %v1369, 0.0
        %v1444 = vmax.f32 %v1371, 0.0
        %v1445 = vmax.f32 %v1260, 0.0
        %v1446 = vmax.f32 %v1262, 0.0
        %v1447 = vmax.f32 %v1373, 0.0
        %v1448 = vmax.f32 %v1375, 0.0
        %v1449 = vmax.f32 %v1266, 0.0
        %v1450 = vmax.f32 %v1268, 0.0
        %v1451 = vmax.f32 %v1379, 0.0
        %v1452 = vmax.f32 %v1381, 0.0
        %v1453 = vmax.f32 %v1270, 0.0
        %v1454 = vmax.f32 %v1272, 0.0
        %v1455 = vmax.f32 %v1383, 0.0
        %v1456 = vmax.f32 %v1385, 0.0
        %v1457 = vmax.f32 %v1276, 0.0
        %v1458 = vmax.f32 %v1278, 0.0
        %v1459 = vmax.f32 %v1389, 0.0
        %v1460 = vmax.f32 %v1391, 0.0
        %v1461 = vmax.f32 %v1280, 0.0
        %v1462 = vmax.f32 %v1282, 0.0
        %v1463 = vmax.f32 %v1393, 0.0
        %v1464 = vmax.f32 %v1395, 0.0
        %v1465 = vmax.f32 %v1286, 0.0
        %v1466 = vmax.f32 %v1288, 0.0
        %v1467 = vmax.f32 %v1399, 0.0
        %v1468 = vmax.f32 %v1401, 0.0
        %v1469 = vmax.f32 %v1290, 0.0
        %v1470 = vmax.f32 %v1292, 0.0
        %v1471 = vmax.f32 %v1403, 0.0
        %v1472 = vmax.f32 %v1405, 0.0
        %v1473 = vmax.f32 %v1296, 0.0
        %v1474 = vmax.f32 %v1298, 0.0
        %v1475 = vmax.f32 %v1409, 0.0
        %v1476 = vmax.f32 %v1411, 0.0
        %v1477 = vmax.f32 %v1300, 0.0
        %v1478 = vmax.f32 %v1302, 0.0
        %v1479 = vmax.f32 %v1413, 0.0
        %v1480 = vmax.f32 %v1415, 0.0
        %v1481 = vpack.c.bf16 %v1421, %v1417
        %v1482 = vpack.c.bf16 %v1422, %v1418
        %v1483 = vpack.c.bf16 %v1423, %v1419
        %v1484 = vpack.c.bf16 %v1424, %v1420
        %v1485 = vpack.c.bf16 %v1429, %v1425
        %v1486 = vpack.c.bf16 %v1430, %v1426
        %v1487 = vpack.c.bf16 %v1431, %v1427
        %v1488 = vpack.c.bf16 %v1432, %v1428
        %v1489 = vpack.c.bf16 %v1437, %v1433
        %v1490 = vpack.c.bf16 %v1438, %v1434
        %v1491 = vpack.c.bf16 %v1439, %v1435
        %v1492 = vpack.c.bf16 %v1440, %v1436
        %v1493 = vpack.c.bf16 %v1445, %v1441
        %v1494 = vpack.c.bf16 %v1446, %v1442
        %v1495 = vpack.c.bf16 %v1447, %v1443
        %v1496 = vpack.c.bf16 %v1448, %v1444
        %v1497 = vpack.c.bf16 %v1453, %v1449
        %v1498 = vpack.c.bf16 %v1454, %v1450
        %v1499 = vpack.c.bf16 %v1455, %v1451
        %v1500 = vpack.c.bf16 %v1456, %v1452
        %v1501 = vpack.c.bf16 %v1461, %v1457
        %v1502 = vpack.c.bf16 %v1462, %v1458
        %v1503 = vpack.c.bf16 %v1463, %v1459
        %v1504 = vpack.c.bf16 %v1464, %v1460
        %v1505 = vpack.c.bf16 %v1469, %v1465
        %v1506 = vpack.c.bf16 %v1470, %v1466
        %v1507 = vpack.c.bf16 %v1471, %v1467
        %v1508 = vpack.c.bf16 %v1472, %v1468
        %v1509 = vpack.c.bf16 %v1477, %v1473
        %v1510 = vpack.c.bf16 %v1478, %v1474
        %v1511 = vpack.c.bf16 %v1479, %v1475
        %v1512 = vpack.c.bf16 %v1480, %v1476
        %v1513 = vld [vmem:[#allocation6] sm:$0xff]
        %v1514 = vld [vmem:[#allocation6 + $0x8] sm:$0xff]
        %v1515 = vld [vmem:[#allocation6 + $0x10] sm:$0xff]
        %v1516 = vld [vmem:[#allocation6 + $0x18] sm:$0xff]
        %v1517 = vld [vmem:[#allocation6 + $0x20] sm:$0xff]
        %v1518 = vld [vmem:[#allocation6 + $0x28] sm:$0xff]
        %v1519 = vld [vmem:[#allocation6 + $0x30] sm:$0xff]
        %v1520 = vld [vmem:[#allocation6 + $0x38] sm:$0xff]
        %v1521 = vld [vmem:[#allocation6 + $0x40] sm:$0xff]
        %v1522 = vld [vmem:[#allocation6 + $0x48] sm:$0xff]
        %v1523 = vld [vmem:[#allocation6 + $0x50] sm:$0xff]
        %v1524 = vld [vmem:[#allocation6 + $0x58] sm:$0xff]
        %v1525 = vld [vmem:[#allocation6 + $0x60] sm:$0xff]
        %v1526 = vld [vmem:[#allocation6 + $0x68] sm:$0xff]
        %v1527 = vld [vmem:[#allocation6 + $0x70] sm:$0xff]
        %v1528 = vld [vmem:[#allocation6 + $0x78] sm:$0xff]
        %v1529 = vld [vmem:[#allocation6 + $0x80] sm:$0xff]
        %v1530 = vld [vmem:[#allocation6 + $0x88] sm:$0xff]
        %v1531 = vld [vmem:[#allocation6 + $0x90] sm:$0xff]
        %v1532 = vld [vmem:[#allocation6 + $0x98] sm:$0xff]
        %v1533 = vld [vmem:[#allocation6 + $0xa0] sm:$0xff]
        %v1534 = vld [vmem:[#allocation6 + $0xa8] sm:$0xff]
        %v1535 = vld [vmem:[#allocation6 + $0xb0] sm:$0xff]
        %v1536 = vld [vmem:[#allocation6 + $0xb8] sm:$0xff]
        %v1537 = vld [vmem:[#allocation6 + $0xc0] sm:$0xff]
        %v1538 = vld [vmem:[#allocation6 + $0xc8] sm:$0xff]
        %v1539 = vld [vmem:[#allocation6 + $0xd0] sm:$0xff]
        %v1540 = vld [vmem:[#allocation6 + $0xd8] sm:$0xff]
        %v1541 = vld [vmem:[#allocation6 + $0xe0] sm:$0xff]
        %v1542 = vld [vmem:[#allocation6 + $0xe8] sm:$0xff]
        %v1543 = vld [vmem:[#allocation6 + $0xf0] sm:$0xff]
        %v1544 = vld [vmem:[#allocation6 + $0xf8] sm:$0xff]
        %v1545 = vld [vmem:[#allocation6 + $0x100] sm:$0xff]
        %v1546 = vld [vmem:[#allocation6 + $0x108] sm:$0xff]
        %v1547 = vld [vmem:[#allocation6 + $0x110] sm:$0xff]
        %v1548 = vld [vmem:[#allocation6 + $0x118] sm:$0xff]
        %v1549 = vld [vmem:[#allocation6 + $0x120] sm:$0xff]
        %v1550 = vld [vmem:[#allocation6 + $0x128] sm:$0xff]
        %v1551 = vld [vmem:[#allocation6 + $0x130] sm:$0xff]
        %v1552 = vld [vmem:[#allocation6 + $0x138] sm:$0xff]
        %v1553 = vld [vmem:[#allocation6 + $0x140] sm:$0xff]
        %v1554 = vld [vmem:[#allocation6 + $0x148] sm:$0xff]
        %v1555 = vld [vmem:[#allocation6 + $0x150] sm:$0xff]
        %v1556 = vld [vmem:[#allocation6 + $0x158] sm:$0xff]
        %v1557 = vld [vmem:[#allocation6 + $0x160] sm:$0xff]
        %v1558 = vld [vmem:[#allocation6 + $0x168] sm:$0xff]
        %v1559 = vld [vmem:[#allocation6 + $0x170] sm:$0xff]
        %v1560 = vld [vmem:[#allocation6 + $0x178] sm:$0xff]
        %v1561 = vld [vmem:[#allocation6 + $0x180] sm:$0xff]
        %v1562 = vld [vmem:[#allocation6 + $0x188] sm:$0xff]
        %v1563 = vld [vmem:[#allocation6 + $0x190] sm:$0xff]
        %v1564 = vld [vmem:[#allocation6 + $0x198] sm:$0xff]
        %v1565 = vld [vmem:[#allocation6 + $0x1a0] sm:$0xff]
        %v1566 = vld [vmem:[#allocation6 + $0x1a8] sm:$0xff]
        %v1567 = vld [vmem:[#allocation6 + $0x1b0] sm:$0xff]
        %v1568 = vld [vmem:[#allocation6 + $0x1b8] sm:$0xff]
        %v1569 = vld [vmem:[#allocation6 + $0x1c0] sm:$0xff]
        %v1570 = vld [vmem:[#allocation6 + $0x1c8] sm:$0xff]
        %v1571 = vld [vmem:[#allocation6 + $0x1d0] sm:$0xff]
        %v1572 = vld [vmem:[#allocation6 + $0x1d8] sm:$0xff]
        %v1573 = vld [vmem:[#allocation6 + $0x1e0] sm:$0xff]
        %v1574 = vld [vmem:[#allocation6 + $0x1e8] sm:$0xff]
        %v1575 = vld [vmem:[#allocation6 + $0x1f0] sm:$0xff]
        %v1576 = vld [vmem:[#allocation6 + $0x1f8] sm:$0xff]
        %v1577 = vld [vmem:[%s4] sm:$0x3]
        %v1579 = vlaneseq
        %v1580 = vshrl.u32 %v1579, 7
        %v1581 = vsub.s32 0, %v1580
        %v1582 = vrot.slane %v1577, %v1581
        %v1583 = vlaneseq
        %v1584 = vshrl.u32 %v1583, 7
        %v1585 = vsub.s32 1, %v1584
        %v1586 = vrot.slane %v1577, %v1585
        %v1653 = vunpack.c.l.b16 %v1513
        %v1654 = vunpack.c.h.b16 %v1513
        %v1655 = vunpack.c.l.b16 %v1514
        %v1656 = vunpack.c.h.b16 %v1514
        %v1657 = vunpack.c.l.b16 %v1515
        %v1658 = vunpack.c.h.b16 %v1515
        %v1659 = vunpack.c.l.b16 %v1516
        %v1660 = vunpack.c.h.b16 %v1516
        %v1661 = vunpack.c.l.b16 %v1517
        %v1662 = vunpack.c.h.b16 %v1517
        %v1663 = vunpack.c.l.b16 %v1518
        %v1664 = vunpack.c.h.b16 %v1518
        %v1665 = vunpack.c.l.b16 %v1519
        %v1666 = vunpack.c.h.b16 %v1519
        %v1667 = vunpack.c.l.b16 %v1520
        %v1668 = vunpack.c.h.b16 %v1520
        %v1669 = vunpack.c.l.b16 %v1521
        %v1670 = vunpack.c.h.b16 %v1521
        %v1671 = vunpack.c.l.b16 %v1522
        %v1672 = vunpack.c.h.b16 %v1522
        %v1673 = vunpack.c.l.b16 %v1523
        %v1674 = vunpack.c.h.b16 %v1523
        %v1675 = vunpack.c.l.b16 %v1524
        %v1676 = vunpack.c.h.b16 %v1524
        %v1677 = vunpack.c.l.b16 %v1525
        %v1678 = vunpack.c.h.b16 %v1525
        %v1679 = vunpack.c.l.b16 %v1526
        %v1680 = vunpack.c.h.b16 %v1526
        %v1681 = vunpack.c.l.b16 %v1527
        %v1682 = vunpack.c.h.b16 %v1527
        %v1683 = vunpack.c.l.b16 %v1528
        %v1684 = vunpack.c.h.b16 %v1528
        %v1685 = vunpack.c.l.b16 %v1529
        %v1686 = vunpack.c.h.b16 %v1529
        %v1687 = vunpack.c.l.b16 %v1530
        %v1688 = vunpack.c.h.b16 %v1530
        %v1689 = vunpack.c.l.b16 %v1531
        %v1690 = vunpack.c.h.b16 %v1531
        %v1691 = vunpack.c.l.b16 %v1532
        %v1692 = vunpack.c.h.b16 %v1532
        %v1693 = vunpack.c.l.b16 %v1533
        %v1694 = vunpack.c.h.b16 %v1533
        %v1695 = vunpack.c.l.b16 %v1534
        %v1696 = vunpack.c.h.b16 %v1534
        %v1697 = vunpack.c.l.b16 %v1535
        %v1698 = vunpack.c.h.b16 %v1535
        %v1699 = vunpack.c.l.b16 %v1536
        %v1700 = vunpack.c.h.b16 %v1536
        %v1701 = vunpack.c.l.b16 %v1537
        %v1702 = vunpack.c.h.b16 %v1537
        %v1703 = vunpack.c.l.b16 %v1538
        %v1704 = vunpack.c.h.b16 %v1538
        %v1705 = vunpack.c.l.b16 %v1539
        %v1706 = vunpack.c.h.b16 %v1539
        %v1707 = vunpack.c.l.b16 %v1540
        %v1708 = vunpack.c.h.b16 %v1540
        %v1709 = vunpack.c.l.b16 %v1541
        %v1710 = vunpack.c.h.b16 %v1541
        %v1711 = vunpack.c.l.b16 %v1542
        %v1712 = vunpack.c.h.b16 %v1542
        %v1713 = vunpack.c.l.b16 %v1543
        %v1714 = vunpack.c.h.b16 %v1543
        %v1715 = vunpack.c.l.b16 %v1544
        %v1716 = vunpack.c.h.b16 %v1544
        %v1717 = vunpack.c.l.b16 %v1545
        %v1718 = vunpack.c.h.b16 %v1545
        %v1719 = vunpack.c.l.b16 %v1546
        %v1720 = vunpack.c.h.b16 %v1546
        %v1721 = vunpack.c.l.b16 %v1547
        %v1722 = vunpack.c.h.b16 %v1547
        %v1723 = vunpack.c.l.b16 %v1548
        %v1724 = vunpack.c.h.b16 %v1548
        %v1725 = vunpack.c.l.b16 %v1549
        %v1726 = vunpack.c.h.b16 %v1549
        %v1727 = vunpack.c.l.b16 %v1550
        %v1728 = vunpack.c.h.b16 %v1550
        %v1729 = vunpack.c.l.b16 %v1551
        %v1730 = vunpack.c.h.b16 %v1551
        %v1731 = vunpack.c.l.b16 %v1552
        %v1732 = vunpack.c.h.b16 %v1552
        %v1733 = vunpack.c.l.b16 %v1553
        %v1734 = vunpack.c.h.b16 %v1553
        %v1735 = vunpack.c.l.b16 %v1554
        %v1736 = vunpack.c.h.b16 %v1554
        %v1737 = vunpack.c.l.b16 %v1555
        %v1738 = vunpack.c.h.b16 %v1555
        %v1739 = vunpack.c.l.b16 %v1556
        %v1740 = vunpack.c.h.b16 %v1556
        %v1741 = vunpack.c.l.b16 %v1557
        %v1742 = vunpack.c.h.b16 %v1557
        %v1743 = vunpack.c.l.b16 %v1558
        %v1744 = vunpack.c.h.b16 %v1558
        %v1745 = vunpack.c.l.b16 %v1559
        %v1746 = vunpack.c.h.b16 %v1559
        %v1747 = vunpack.c.l.b16 %v1560
        %v1748 = vunpack.c.h.b16 %v1560
        %v1749 = vunpack.c.l.b16 %v1561
        %v1750 = vunpack.c.h.b16 %v1561
        %v1751 = vunpack.c.l.b16 %v1562
        %v1752 = vunpack.c.h.b16 %v1562
        %v1753 = vunpack.c.l.b16 %v1563
        %v1754 = vunpack.c.h.b16 %v1563
        %v1755 = vunpack.c.l.b16 %v1564
        %v1756 = vunpack.c.h.b16 %v1564
        %v1757 = vunpack.c.l.b16 %v1565
        %v1758 = vunpack.c.h.b16 %v1565
        %v1759 = vunpack.c.l.b16 %v1566
        %v1760 = vunpack.c.h.b16 %v1566
        %v1761 = vunpack.c.l.b16 %v1567
        %v1762 = vunpack.c.h.b16 %v1567
        %v1763 = vunpack.c.l.b16 %v1568
        %v1764 = vunpack.c.h.b16 %v1568
        %v1765 = vunpack.c.l.b16 %v1569
        %v1766 = vunpack.c.h.b16 %v1569
        %v1767 = vunpack.c.l.b16 %v1570
        %v1768 = vunpack.c.h.b16 %v1570
        %v1769 = vunpack.c.l.b16 %v1571
        %v1770 = vunpack.c.h.b16 %v1571
        %v1771 = vunpack.c.l.b16 %v1572
        %v1772 = vunpack.c.h.b16 %v1572
        %v1773 = vunpack.c.l.b16 %v1573
        %v1774 = vunpack.c.h.b16 %v1573
        %v1775 = vunpack.c.l.b16 %v1574
        %v1776 = vunpack.c.h.b16 %v1574
        %v1777 = vunpack.c.l.b16 %v1575
        %v1778 = vunpack.c.h.b16 %v1575
        %v1779 = vunpack.c.l.b16 %v1576
        %v1780 = vunpack.c.h.b16 %v1576
        %v1781 = vpack.c.b16 %v1655, %v1653
        %v1782 = vpack.c.b16 %v1656, %v1654
        %v1783 = vpack.c.b16 %v1659, %v1657
        %v1784 = vpack.c.b16 %v1660, %v1658
        %v1785 = vpack.c.b16 %v1663, %v1661
        %v1786 = vpack.c.b16 %v1664, %v1662
        %v1787 = vpack.c.b16 %v1667, %v1665
        %v1788 = vpack.c.b16 %v1668, %v1666
        %v1789 = vpack.c.b16 %v1671, %v1669
        %v1790 = vpack.c.b16 %v1672, %v1670
        %v1791 = vpack.c.b16 %v1675, %v1673
        %v1792 = vpack.c.b16 %v1676, %v1674
        %v1793 = vpack.c.b16 %v1679, %v1677
        %v1794 = vpack.c.b16 %v1680, %v1678
        %v1795 = vpack.c.b16 %v1683, %v1681
        %v1796 = vpack.c.b16 %v1684, %v1682
        %v1797 = vpack.c.b16 %v1687, %v1685
        %v1798 = vpack.c.b16 %v1688, %v1686
        %v1799 = vpack.c.b16 %v1691, %v1689
        %v1800 = vpack.c.b16 %v1692, %v1690
        %v1801 = vpack.c.b16 %v1695, %v1693
        %v1802 = vpack.c.b16 %v1696, %v1694
        %v1803 = vpack.c.b16 %v1699, %v1697
        %v1804 = vpack.c.b16 %v1700, %v1698
        %v1805 = vpack.c.b16 %v1703, %v1701
        %v1806 = vpack.c.b16 %v1704, %v1702
        %v1807 = vpack.c.b16 %v1707, %v1705
        %v1808 = vpack.c.b16 %v1708, %v1706
        %v1809 = vpack.c.b16 %v1711, %v1709
        %v1810 = vpack.c.b16 %v1712, %v1710
        %v1811 = vpack.c.b16 %v1715, %v1713
        %v1812 = vpack.c.b16 %v1716, %v1714
        %v1813 = vpack.c.b16 %v1719, %v1717
        %v1814 = vpack.c.b16 %v1720, %v1718
        %v1815 = vpack.c.b16 %v1723, %v1721
        %v1816 = vpack.c.b16 %v1724, %v1722
        %v1817 = vpack.c.b16 %v1727, %v1725
        %v1818 = vpack.c.b16 %v1728, %v1726
        %v1819 = vpack.c.b16 %v1731, %v1729
        %v1820 = vpack.c.b16 %v1732, %v1730
        %v1821 = vpack.c.b16 %v1735, %v1733
        %v1822 = vpack.c.b16 %v1736, %v1734
        %v1823 = vpack.c.b16 %v1739, %v1737
        %v1824 = vpack.c.b16 %v1740, %v1738
        %v1825 = vpack.c.b16 %v1743, %v1741
        %v1826 = vpack.c.b16 %v1744, %v1742
        %v1827 = vpack.c.b16 %v1747, %v1745
        %v1828 = vpack.c.b16 %v1748, %v1746
        %v1829 = vpack.c.b16 %v1751, %v1749
        %v1830 = vpack.c.b16 %v1752, %v1750
        %v1831 = vpack.c.b16 %v1755, %v1753
        %v1832 = vpack.c.b16 %v1756, %v1754
        %v1833 = vpack.c.b16 %v1759, %v1757
        %v1834 = vpack.c.b16 %v1760, %v1758
        %v1835 = vpack.c.b16 %v1763, %v1761
        %v1836 = vpack.c.b16 %v1764, %v1762
        %v1837 = vpack.c.b16 %v1767, %v1765
        %v1838 = vpack.c.b16 %v1768, %v1766
        %v1839 = vpack.c.b16 %v1771, %v1769
        %v1840 = vpack.c.b16 %v1772, %v1770
        %v1841 = vpack.c.b16 %v1775, %v1773
        %v1842 = vpack.c.b16 %v1776, %v1774
        %v1843 = vpack.c.b16 %v1779, %v1777
        %v1844 = vpack.c.b16 %v1780, %v1778
        %1909 = vmatprep.subr.bf16.mxu0 %v1782
        %1910 = vmatpush1.bf16.msra.mxu0 %v1781
        %1911 = vmatprep.subr.bf16.mxu0 %v1784
        %1912 = vmatpush1.bf16.msra.mxu0 %v1783
        %1913 = vmatprep.subr.bf16.mxu0 %v1786
        %1914 = vmatpush1.bf16.msra.mxu0 %v1785
        %1915 = vmatprep.subr.bf16.mxu0 %v1788
        %1916 = vmatpush1.bf16.msra.mxu0 %v1787
        %1917 = vmatprep.subr.bf16.mxu0 %v1790
        %1918 = vmatpush1.bf16.msra.mxu0 %v1789
        %1919 = vmatprep.subr.bf16.mxu0 %v1792
        %1920 = vmatpush1.bf16.msra.mxu0 %v1791
        %1921 = vmatprep.subr.bf16.mxu0 %v1794
        %1922 = vmatpush1.bf16.msra.mxu0 %v1793
        %1923 = vmatprep.subr.bf16.mxu0 %v1796
        %1924 = vmatpush1.bf16.msra.mxu0 %v1795
        %1925 = vmatprep.subr.bf16.mxu0 %v1798
        %1926 = vmatpush1.bf16.msra.mxu0 %v1797
        %1927 = vmatprep.subr.bf16.mxu0 %v1800
        %1928 = vmatpush1.bf16.msra.mxu0 %v1799
        %1929 = vmatprep.subr.bf16.mxu0 %v1802
        %1930 = vmatpush1.bf16.msra.mxu0 %v1801
        %1931 = vmatprep.subr.bf16.mxu0 %v1804
        %1932 = vmatpush1.bf16.msra.mxu0 %v1803
        %1933 = vmatprep.subr.bf16.mxu0 %v1806
        %1934 = vmatpush1.bf16.msra.mxu0 %v1805
        %1935 = vmatprep.subr.bf16.mxu0 %v1808
        %1936 = vmatpush1.bf16.msra.mxu0 %v1807
        %1937 = vmatprep.subr.bf16.mxu0 %v1810
        %1938 = vmatpush1.bf16.msra.mxu0 %v1809
        %1939 = vmatprep.subr.bf16.mxu0 %v1812
        %1940 = vmatpush1.bf16.msra.mxu0 %v1811
        %1941 = vmatprep.mubr.bf16.mxu0 %v1482
        %1942 = vmatmul.mubr.bf16.gmra.mrb[0].mxu0 %v1481
        %v1943 = vpop.f32.mrb[0].mxu0
        %v1944 = vadd.f32 %v1582, %v1943
        %v1945 = vpop.f32.mrb[0].mxu0
        %v1946 = vadd.f32 %v1586, %v1945
        %v1947 = vpop.f32.mrb[0].mxu0
        %v1948 = vadd.f32 %v1582, %v1947
        %v1949 = vpop.f32.mrb[0].mxu0
        %v1950 = vadd.f32 %v1586, %v1949
        %1951 = vmatprep.mubr.bf16.mxu0 %v1486
        %1952 = vmatmul.mubr.bf16.gmra.mrb[0].mxu0 %v1485
        %v1953 = vpop.f32.mrb[0].mxu0
        %v1954 = vadd.f32 %v1582, %v1953
        %v1955 = vpop.f32.mrb[0].mxu0
        %v1956 = vadd.f32 %v1586, %v1955
        %v1957 = vpop.f32.mrb[0].mxu0
        %v1958 = vadd.f32 %v1582, %v1957
        %v1959 = vpop.f32.mrb[0].mxu0
        %v1960 = vadd.f32 %v1586, %v1959
        %1961 = vmatprep.mubr.bf16.mxu0 %v1490
        %1962 = vmatmul.mubr.bf16.gmra.mrb[0].mxu0 %v1489
        %v1963 = vpop.f32.mrb[0].mxu0
        %v1964 = vadd.f32 %v1582, %v1963
        %v1965 = vpop.f32.mrb[0].mxu0
        %v1966 = vadd.f32 %v1586, %v1965
        %v1967 = vpop.f32.mrb[0].mxu0
        %v1968 = vadd.f32 %v1582, %v1967
        %v1969 = vpop.f32.mrb[0].mxu0
        %v1970 = vadd.f32 %v1586, %v1969
        %1971 = vmatprep.mubr.bf16.mxu0 %v1494
        %1972 = vmatmul.mubr.bf16.gmra.mrb[0].mxu0 %v1493
        %v1973 = vpop.f32.mrb[0].mxu0
        %v1974 = vadd.f32 %v1582, %v1973
        %v1975 = vpop.f32.mrb[0].mxu0
        %v1976 = vadd.f32 %v1586, %v1975
        %v1977 = vpop.f32.mrb[0].mxu0
        %v1978 = vadd.f32 %v1582, %v1977
        %v1979 = vpop.f32.mrb[0].mxu0
        %v1980 = vadd.f32 %v1586, %v1979
        %1981 = vmatprep.mubr.bf16.mxu0 %v1498
        %1982 = vmatmul.mubr.bf16.gmra.mrb[0].mxu0 %v1497
        %v1983 = vpop.f32.mrb[0].mxu0
        %v1984 = vadd.f32 %v1582, %v1983
        %v1985 = vpop.f32.mrb[0].mxu0
        %v1986 = vadd.f32 %v1586, %v1985
        %v1987 = vpop.f32.mrb[0].mxu0
        %v1988 = vadd.f32 %v1582, %v1987
        %v1989 = vpop.f32.mrb[0].mxu0
        %v1990 = vadd.f32 %v1586, %v1989
        %1991 = vmatprep.mubr.bf16.mxu0 %v1502
        %1992 = vmatmul.mubr.bf16.gmra.mrb[0].mxu0 %v1501
        %v1993 = vpop.f32.mrb[0].mxu0
        %v1994 = vadd.f32 %v1582, %v1993
        %v1995 = vpop.f32.mrb[0].mxu0
        %v1996 = vadd.f32 %v1586, %v1995
        %v1997 = vpop.f32.mrb[0].mxu0
        %v1998 = vadd.f32 %v1582, %v1997
        %v1999 = vpop.f32.mrb[0].mxu0
        %v2000 = vadd.f32 %v1586, %v1999
        %2001 = vmatprep.mubr.bf16.mxu0 %v1506
        %2002 = vmatmul.mubr.bf16.gmra.mrb[0].mxu0 %v1505
        %v2003 = vpop.f32.mrb[0].mxu0
        %v2004 = vadd.f32 %v1582, %v2003
        %v2005 = vpop.f32.mrb[0].mxu0
        %v2006 = vadd.f32 %v1586, %v2005
        %v2007 = vpop.f32.mrb[0].mxu0
        %v2008 = vadd.f32 %v1582, %v2007
        %v2009 = vpop.f32.mrb[0].mxu0
        %v2010 = vadd.f32 %v1586, %v2009
        %2011 = vmatprep.mubr.bf16.mxu0 %v1510
        %2012 = vmatmul.mubr.bf16.gmra.mrb[0].mxu0 %v1509
        %v2013 = vpop.f32.mrb[0].mxu0
        %v2014 = vadd.f32 %v1582, %v2013
        %v2015 = vpop.f32.mrb[0].mxu0
        %v2016 = vadd.f32 %v1586, %v2015
        %v2017 = vpop.f32.mrb[0].mxu0
        %v2018 = vadd.f32 %v1582, %v2017
        %v2019 = vpop.f32.mrb[0].mxu0
        %v2020 = vadd.f32 %v1586, %v2019
        %2021 = vdwg.mxu0
        %2022 = vmatprep.subr.bf16.mxu0 %v1814
        %2023 = vmatpush1.bf16.msra.mxu0 %v1813
        %2024 = vmatprep.subr.bf16.mxu0 %v1816
        %2025 = vmatpush1.bf16.msra.mxu0 %v1815
        %2026 = vmatprep.subr.bf16.mxu0 %v1818
        %2027 = vmatpush1.bf16.msra.mxu0 %v1817
        %2028 = vmatprep.subr.bf16.mxu0 %v1820
        %2029 = vmatpush1.bf16.msra.mxu0 %v1819
        %2030 = vmatprep.subr.bf16.mxu0 %v1822
        %2031 = vmatpush1.bf16.msra.mxu0 %v1821
        %2032 = vmatprep.subr.bf16.mxu0 %v1824
        %2033 = vmatpush1.bf16.msra.mxu0 %v1823
        %2034 = vmatprep.subr.bf16.mxu0 %v1826
        %2035 = vmatpush1.bf16.msra.mxu0 %v1825
        %2036 = vmatprep.subr.bf16.mxu0 %v1828
        %2037 = vmatpush1.bf16.msra.mxu0 %v1827
        %2038 = vmatprep.subr.bf16.mxu0 %v1830
        %2039 = vmatpush1.bf16.msra.mxu0 %v1829
        %2040 = vmatprep.subr.bf16.mxu0 %v1832
        %2041 = vmatpush1.bf16.msra.mxu0 %v1831
        %2042 = vmatprep.subr.bf16.mxu0 %v1834
        %2043 = vmatpush1.bf16.msra.mxu0 %v1833
        %2044 = vmatprep.subr.bf16.mxu0 %v1836
        %2045 = vmatpush1.bf16.msra.mxu0 %v1835
        %2046 = vmatprep.subr.bf16.mxu0 %v1838
        %2047 = vmatpush1.bf16.msra.mxu0 %v1837
        %2048 = vmatprep.subr.bf16.mxu0 %v1840
        %2049 = vmatpush1.bf16.msra.mxu0 %v1839
        %2050 = vmatprep.subr.bf16.mxu0 %v1842
        %2051 = vmatpush1.bf16.msra.mxu0 %v1841
        %2052 = vmatprep.subr.bf16.mxu0 %v1844
        %2053 = vmatpush1.bf16.msra.mxu0 %v1843
        %2054 = vmatprep.mubr.bf16.mxu0 %v1484
        %2055 = vmatmul.mubr.bf16.gmra.mrb[0].mxu0 %v1483
        %v2056 = vpop.f32.mrb[0].mxu0
        %v2057 = vadd.f32 %v1944, %v2056
        %v2058 = vpop.f32.mrb[0].mxu0
        %v2059 = vadd.f32 %v1946, %v2058
        %v2060 = vpop.f32.mrb[0].mxu0
        %v2061 = vadd.f32 %v1948, %v2060
        %v2062 = vpop.f32.mrb[0].mxu0
        %v2063 = vadd.f32 %v1950, %v2062
        %2064 = vmatprep.mubr.bf16.mxu0 %v1488
        %2065 = vmatmul.mubr.bf16.gmra.mrb[0].mxu0 %v1487
        %v2066 = vpop.f32.mrb[0].mxu0
        %v2067 = vadd.f32 %v1954, %v2066
        %v2068 = vpop.f32.mrb[0].mxu0
        %v2069 = vadd.f32 %v1956, %v2068
        %v2070 = vpop.f32.mrb[0].mxu0
        %v2071 = vadd.f32 %v1958, %v2070
        %v2072 = vpop.f32.mrb[0].mxu0
        %v2073 = vadd.f32 %v1960, %v2072
        %2074 = vmatprep.mubr.bf16.mxu0 %v1492
        %2075 = vmatmul.mubr.bf16.gmra.mrb[0].mxu0 %v1491
        %v2076 = vpop.f32.mrb[0].mxu0
        %v2077 = vadd.f32 %v1964, %v2076
        %v2078 = vpop.f32.mrb[0].mxu0
        %v2079 = vadd.f32 %v1966, %v2078
        %v2080 = vpop.f32.mrb[0].mxu0
        %v2081 = vadd.f32 %v1968, %v2080
        %v2082 = vpop.f32.mrb[0].mxu0
        %v2083 = vadd.f32 %v1970, %v2082
        %2084 = vmatprep.mubr.bf16.mxu0 %v1496
        %2085 = vmatmul.mubr.bf16.gmra.mrb[0].mxu0 %v1495
        %v2086 = vpop.f32.mrb[0].mxu0
        %v2087 = vadd.f32 %v1974, %v2086
        %v2088 = vpop.f32.mrb[0].mxu0
        %v2089 = vadd.f32 %v1976, %v2088
        %v2090 = vpop.f32.mrb[0].mxu0
        %v2091 = vadd.f32 %v1978, %v2090
        %v2092 = vpop.f32.mrb[0].mxu0
        %v2093 = vadd.f32 %v1980, %v2092
        %2094 = vmatprep.mubr.bf16.mxu0 %v1500
        %2095 = vmatmul.mubr.bf16.gmra.mrb[0].mxu0 %v1499
        %v2096 = vpop.f32.mrb[0].mxu0
        %v2097 = vadd.f32 %v1984, %v2096
        %v2098 = vpop.f32.mrb[0].mxu0
        %v2099 = vadd.f32 %v1986, %v2098
        %v2100 = vpop.f32.mrb[0].mxu0
        %v2101 = vadd.f32 %v1988, %v2100
        %v2102 = vpop.f32.mrb[0].mxu0
        %v2103 = vadd.f32 %v1990, %v2102
        %2104 = vmatprep.mubr.bf16.mxu0 %v1504
        %2105 = vmatmul.mubr.bf16.gmra.mrb[0].mxu0 %v1503
        %v2106 = vpop.f32.mrb[0].mxu0
        %v2107 = vadd.f32 %v1994, %v2106
        %v2108 = vpop.f32.mrb[0].mxu0
        %v2109 = vadd.f32 %v1996, %v2108
        %v2110 = vpop.f32.mrb[0].mxu0
        %v2111 = vadd.f32 %v1998, %v2110
        %v2112 = vpop.f32.mrb[0].mxu0
        %v2113 = vadd.f32 %v2000, %v2112
        %2114 = vmatprep.mubr.bf16.mxu0 %v1508
        %2115 = vmatmul.mubr.bf16.gmra.mrb[0].mxu0 %v1507
        %v2116 = vpop.f32.mrb[0].mxu0
        %v2117 = vadd.f32 %v2004, %v2116
        %v2118 = vpop.f32.mrb[0].mxu0
        %v2119 = vadd.f32 %v2006, %v2118
        %v2120 = vpop.f32.mrb[0].mxu0
        %v2121 = vadd.f32 %v2008, %v2120
        %v2122 = vpop.f32.mrb[0].mxu0
        %v2123 = vadd.f32 %v2010, %v2122
        %2124 = vmatprep.mubr.bf16.mxu0 %v1512
        %2125 = vmatmul.mubr.bf16.gmra.mrb[0].mxu0 %v1511
        %v2126 = vpop.f32.mrb[0].mxu0
        %v2127 = vadd.f32 %v2014, %v2126
        %v2128 = vpop.f32.mrb[0].mxu0
        %v2129 = vadd.f32 %v2016, %v2128
        %v2130 = vpop.f32.mrb[0].mxu0
        %v2131 = vadd.f32 %v2018, %v2130
        %v2132 = vpop.f32.mrb[0].mxu0
        %v2133 = vadd.f32 %v2020, %v2132
        %2134 = vdwg.mxu0
        %v2135 = vtanh.pop %v2057
        %v2136 = vtanh.pop %v2059
        %v2137 = vtanh.pop %v2061
        %v2138 = vtanh.pop %v2063
        %v2139 = vtanh.pop %v2067
        %v2140 = vtanh.pop %v2069
        %v2141 = vtanh.pop %v2071
        %v2142 = vtanh.pop %v2073
        %v2143 = vtanh.pop %v2077
        %v2144 = vtanh.pop %v2079
        %v2145 = vtanh.pop %v2081
        %v2146 = vtanh.pop %v2083
        %v2147 = vtanh.pop %v2087
        %v2148 = vtanh.pop %v2089
        %v2149 = vtanh.pop %v2091
        %v2150 = vtanh.pop %v2093
        %v2151 = vtanh.pop %v2097
        %v2152 = vtanh.pop %v2099
        %v2153 = vtanh.pop %v2101
        %v2154 = vtanh.pop %v2103
        %v2155 = vtanh.pop %v2107
        %v2156 = vtanh.pop %v2109
        %v2157 = vtanh.pop %v2111
        %v2158 = vtanh.pop %v2113
        %v2159 = vtanh.pop %v2117
        %v2160 = vtanh.pop %v2119
        %v2161 = vtanh.pop %v2121
        %v2162 = vtanh.pop %v2123
        %v2163 = vtanh.pop %v2127
        %v2164 = vtanh.pop %v2129
        %v2165 = vtanh.pop %v2131
        %v2166 = vtanh.pop %v2133
        %v2167 = vld [vmem:[#allocation7] sm:$0xff]
        %v2168 = vld [vmem:[#allocation7 + $0x8] sm:$0xff]
        %v2169 = vld [vmem:[#allocation7 + $0x10] sm:$0xff]
        %v2170 = vld [vmem:[#allocation7 + $0x18] sm:$0xff]
        %v2171 = vld [vmem:[#allocation7 + $0x20] sm:$0xff]
        %v2172 = vld [vmem:[#allocation7 + $0x28] sm:$0xff]
        %v2173 = vld [vmem:[#allocation7 + $0x30] sm:$0xff]
        %v2174 = vld [vmem:[#allocation7 + $0x38] sm:$0xff]
        %v2175 = vld [vmem:[#allocation7 + $0x40] sm:$0xff]
        %v2176 = vld [vmem:[#allocation7 + $0x48] sm:$0xff]
        %v2177 = vld [vmem:[#allocation7 + $0x50] sm:$0xff]
        %v2178 = vld [vmem:[#allocation7 + $0x58] sm:$0xff]
        %v2179 = vld [vmem:[#allocation7 + $0x60] sm:$0xff]
        %v2180 = vld [vmem:[#allocation7 + $0x68] sm:$0xff]
        %v2181 = vld [vmem:[#allocation7 + $0x70] sm:$0xff]
        %v2182 = vld [vmem:[#allocation7 + $0x78] sm:$0xff]
        %v2183 = vld [vmem:[#allocation7 + $0x80] sm:$0xff]
        %v2184 = vld [vmem:[#allocation7 + $0x88] sm:$0xff]
        %v2185 = vld [vmem:[#allocation7 + $0x90] sm:$0xff]
        %v2186 = vld [vmem:[#allocation7 + $0x98] sm:$0xff]
        %v2187 = vld [vmem:[#allocation7 + $0xa0] sm:$0xff]
        %v2188 = vld [vmem:[#allocation7 + $0xa8] sm:$0xff]
        %v2189 = vld [vmem:[#allocation7 + $0xb0] sm:$0xff]
        %v2190 = vld [vmem:[#allocation7 + $0xb8] sm:$0xff]
        %v2191 = vld [vmem:[#allocation7 + $0xc0] sm:$0xff]
        %v2192 = vld [vmem:[#allocation7 + $0xc8] sm:$0xff]
        %v2193 = vld [vmem:[#allocation7 + $0xd0] sm:$0xff]
        %v2194 = vld [vmem:[#allocation7 + $0xd8] sm:$0xff]
        %v2195 = vld [vmem:[#allocation7 + $0xe0] sm:$0xff]
        %v2196 = vld [vmem:[#allocation7 + $0xe8] sm:$0xff]
        %v2197 = vld [vmem:[#allocation7 + $0xf0] sm:$0xff]
        %v2198 = vld [vmem:[#allocation7 + $0xf8] sm:$0xff]
        %v2199 = vld [vmem:[#allocation7 + $0x100] sm:$0xff]
        %v2200 = vld [vmem:[#allocation7 + $0x108] sm:$0xff]
        %v2201 = vld [vmem:[#allocation7 + $0x110] sm:$0xff]
        %v2202 = vld [vmem:[#allocation7 + $0x118] sm:$0xff]
        %v2203 = vld [vmem:[#allocation7 + $0x120] sm:$0xff]
        %v2204 = vld [vmem:[#allocation7 + $0x128] sm:$0xff]
        %v2205 = vld [vmem:[#allocation7 + $0x130] sm:$0xff]
        %v2206 = vld [vmem:[#allocation7 + $0x138] sm:$0xff]
        %v2207 = vld [vmem:[#allocation7 + $0x140] sm:$0xff]
        %v2208 = vld [vmem:[#allocation7 + $0x148] sm:$0xff]
        %v2209 = vld [vmem:[#allocation7 + $0x150] sm:$0xff]
        %v2210 = vld [vmem:[#allocation7 + $0x158] sm:$0xff]
        %v2211 = vld [vmem:[#allocation7 + $0x160] sm:$0xff]
        %v2212 = vld [vmem:[#allocation7 + $0x168] sm:$0xff]
        %v2213 = vld [vmem:[#allocation7 + $0x170] sm:$0xff]
        %v2214 = vld [vmem:[#allocation7 + $0x178] sm:$0xff]
        %v2215 = vld [vmem:[#allocation7 + $0x180] sm:$0xff]
        %v2216 = vld [vmem:[#allocation7 + $0x188] sm:$0xff]
        %v2217 = vld [vmem:[#allocation7 + $0x190] sm:$0xff]
        %v2218 = vld [vmem:[#allocation7 + $0x198] sm:$0xff]
        %v2219 = vld [vmem:[#allocation7 + $0x1a0] sm:$0xff]
        %v2220 = vld [vmem:[#allocation7 + $0x1a8] sm:$0xff]
        %v2221 = vld [vmem:[#allocation7 + $0x1b0] sm:$0xff]
        %v2222 = vld [vmem:[#allocation7 + $0x1b8] sm:$0xff]
        %v2223 = vld [vmem:[#allocation7 + $0x1c0] sm:$0xff]
        %v2224 = vld [vmem:[#allocation7 + $0x1c8] sm:$0xff]
        %v2225 = vld [vmem:[#allocation7 + $0x1d0] sm:$0xff]
        %v2226 = vld [vmem:[#allocation7 + $0x1d8] sm:$0xff]
        %v2227 = vld [vmem:[#allocation7 + $0x1e0] sm:$0xff]
        %v2228 = vld [vmem:[#allocation7 + $0x1e8] sm:$0xff]
        %v2229 = vld [vmem:[#allocation7 + $0x1f0] sm:$0xff]
        %v2230 = vld [vmem:[#allocation7 + $0x1f8] sm:$0xff]
        %v2231 = vld [vmem:[%s6] sm:$0x3]
        %v2233 = vlaneseq
        %v2234 = vshrl.u32 %v2233, 7
        %v2235 = vsub.s32 0, %v2234
        %v2236 = vrot.slane %v2231, %v2235
        %v2237 = vlaneseq
        %v2238 = vshrl.u32 %v2237, 7
        %v2239 = vsub.s32 1, %v2238
        %v2240 = vrot.slane %v2231, %v2239
        %v2307 = vunpack.c.l.b16 %v2167
        %v2308 = vunpack.c.h.b16 %v2167
        %v2309 = vunpack.c.l.b16 %v2168
        %v2310 = vunpack.c.h.b16 %v2168
        %v2311 = vunpack.c.l.b16 %v2169
        %v2312 = vunpack.c.h.b16 %v2169
        %v2313 = vunpack.c.l.b16 %v2170
        %v2314 = vunpack.c.h.b16 %v2170
        %v2315 = vunpack.c.l.b16 %v2171
        %v2316 = vunpack.c.h.b16 %v2171
        %v2317 = vunpack.c.l.b16 %v2172
        %v2318 = vunpack.c.h.b16 %v2172
        %v2319 = vunpack.c.l.b16 %v2173
        %v2320 = vunpack.c.h.b16 %v2173
        %v2321 = vunpack.c.l.b16 %v2174
        %v2322 = vunpack.c.h.b16 %v2174
        %v2323 = vunpack.c.l.b16 %v2175
        %v2324 = vunpack.c.h.b16 %v2175
        %v2325 = vunpack.c.l.b16 %v2176
        %v2326 = vunpack.c.h.b16 %v2176
        %v2327 = vunpack.c.l.b16 %v2177
        %v2328 = vunpack.c.h.b16 %v2177
        %v2329 = vunpack.c.l.b16 %v2178
        %v2330 = vunpack.c.h.b16 %v2178
        %v2331 = vunpack.c.l.b16 %v2179
        %v2332 = vunpack.c.h.b16 %v2179
        %v2333 = vunpack.c.l.b16 %v2180
        %v2334 = vunpack.c.h.b16 %v2180
        %v2335 = vunpack.c.l.b16 %v2181
        %v2336 = vunpack.c.h.b16 %v2181
        %v2337 = vunpack.c.l.b16 %v2182
        %v2338 = vunpack.c.h.b16 %v2182
        %v2339 = vunpack.c.l.b16 %v2183
        %v2340 = vunpack.c.h.b16 %v2183
        %v2341 = vunpack.c.l.b16 %v2184
        %v2342 = vunpack.c.h.b16 %v2184
        %v2343 = vunpack.c.l.b16 %v2185
        %v2344 = vunpack.c.h.b16 %v2185
        %v2345 = vunpack.c.l.b16 %v2186
        %v2346 = vunpack.c.h.b16 %v2186
        %v2347 = vunpack.c.l.b16 %v2187
        %v2348 = vunpack.c.h.b16 %v2187
        %v2349 = vunpack.c.l.b16 %v2188
        %v2350 = vunpack.c.h.b16 %v2188
        %v2351 = vunpack.c.l.b16 %v2189
        %v2352 = vunpack.c.h.b16 %v2189
        %v2353 = vunpack.c.l.b16 %v2190
        %v2354 = vunpack.c.h.b16 %v2190
        %v2355 = vunpack.c.l.b16 %v2191
        %v2356 = vunpack.c.h.b16 %v2191
        %v2357 = vunpack.c.l.b16 %v2192
        %v2358 = vunpack.c.h.b16 %v2192
        %v2359 = vunpack.c.l.b16 %v2193
        %v2360 = vunpack.c.h.b16 %v2193
        %v2361 = vunpack.c.l.b16 %v2194
        %v2362 = vunpack.c.h.b16 %v2194
        %v2363 = vunpack.c.l.b16 %v2195
        %v2364 = vunpack.c.h.b16 %v2195
        %v2365 = vunpack.c.l.b16 %v2196
        %v2366 = vunpack.c.h.b16 %v2196
        %v2367 = vunpack.c.l.b16 %v2197
        %v2368 = vunpack.c.h.b16 %v2197
        %v2369 = vunpack.c.l.b16 %v2198
        %v2370 = vunpack.c.h.b16 %v2198
        %v2371 = vunpack.c.l.b16 %v2199
        %v2372 = vunpack.c.h.b16 %v2199
        %v2373 = vunpack.c.l.b16 %v2200
        %v2374 = vunpack.c.h.b16 %v2200
        %v2375 = vunpack.c.l.b16 %v2201
        %v2376 = vunpack.c.h.b16 %v2201
        %v2377 = vunpack.c.l.b16 %v2202
        %v2378 = vunpack.c.h.b16 %v2202
        %v2379 = vunpack.c.l.b16 %v2203
        %v2380 = vunpack.c.h.b16 %v2203
        %v2381 = vunpack.c.l.b16 %v2204
        %v2382 = vunpack.c.h.b16 %v2204
        %v2383 = vunpack.c.l.b16 %v2205
        %v2384 = vunpack.c.h.b16 %v2205
        %v2385 = vunpack.c.l.b16 %v2206
        %v2386 = vunpack.c.h.b16 %v2206
        %v2387 = vunpack.c.l.b16 %v2207
        %v2388 = vunpack.c.h.b16 %v2207
        %v2389 = vunpack.c.l.b16 %v2208
        %v2390 = vunpack.c.h.b16 %v2208
        %v2391 = vunpack.c.l.b16 %v2209
        %v2392 = vunpack.c.h.b16 %v2209
        %v2393 = vunpack.c.l.b16 %v2210
        %v2394 = vunpack.c.h.b16 %v2210
        %v2395 = vunpack.c.l.b16 %v2211
        %v2396 = vunpack.c.h.b16 %v2211
        %v2397 = vunpack.c.l.b16 %v2212
        %v2398 = vunpack.c.h.b16 %v2212
        %v2399 = vunpack.c.l.b16 %v2213
        %v2400 = vunpack.c.h.b16 %v2213
        %v2401 = vunpack.c.l.b16 %v2214
        %v2402 = vunpack.c.h.b16 %v2214
        %v2403 = vunpack.c.l.b16 %v2215
        %v2404 = vunpack.c.h.b16 %v2215
        %v2405 = vunpack.c.l.b16 %v2216
        %v2406 = vunpack.c.h.b16 %v2216
        %v2407 = vunpack.c.l.b16 %v2217
        %v2408 = vunpack.c.h.b16 %v2217
        %v2409 = vunpack.c.l.b16 %v2218
        %v2410 = vunpack.c.h.b16 %v2218
        %v2411 = vunpack.c.l.b16 %v2219
        %v2412 = vunpack.c.h.b16 %v2219
        %v2413 = vunpack.c.l.b16 %v2220
        %v2414 = vunpack.c.h.b16 %v2220
        %v2415 = vunpack.c.l.b16 %v2221
        %v2416 = vunpack.c.h.b16 %v2221
        %v2417 = vunpack.c.l.b16 %v2222
        %v2418 = vunpack.c.h.b16 %v2222
        %v2419 = vunpack.c.l.b16 %v2223
        %v2420 = vunpack.c.h.b16 %v2223
        %v2421 = vunpack.c.l.b16 %v2224
        %v2422 = vunpack.c.h.b16 %v2224
        %v2423 = vunpack.c.l.b16 %v2225
        %v2424 = vunpack.c.h.b16 %v2225
        %v2425 = vunpack.c.l.b16 %v2226
        %v2426 = vunpack.c.h.b16 %v2226
        %v2427 = vunpack.c.l.b16 %v2227
        %v2428 = vunpack.c.h.b16 %v2227
        %v2429 = vunpack.c.l.b16 %v2228
        %v2430 = vunpack.c.h.b16 %v2228
        %v2431 = vunpack.c.l.b16 %v2229
        %v2432 = vunpack.c.h.b16 %v2229
        %v2433 = vunpack.c.l.b16 %v2230
        %v2434 = vunpack.c.h.b16 %v2230
        %v2435 = vpack.c.b16 %v2309, %v2307
        %v2436 = vpack.c.b16 %v2310, %v2308
        %v2437 = vpack.c.b16 %v2313, %v2311
        %v2438 = vpack.c.b16 %v2314, %v2312
        %v2439 = vpack.c.b16 %v2317, %v2315
        %v2440 = vpack.c.b16 %v2318, %v2316
        %v2441 = vpack.c.b16 %v2321, %v2319
        %v2442 = vpack.c.b16 %v2322, %v2320
        %v2443 = vpack.c.b16 %v2325, %v2323
        %v2444 = vpack.c.b16 %v2326, %v2324
        %v2445 = vpack.c.b16 %v2329, %v2327
        %v2446 = vpack.c.b16 %v2330, %v2328
        %v2447 = vpack.c.b16 %v2333, %v2331
        %v2448 = vpack.c.b16 %v2334, %v2332
        %v2449 = vpack.c.b16 %v2337, %v2335
        %v2450 = vpack.c.b16 %v2338, %v2336
        %v2451 = vpack.c.b16 %v2341, %v2339
        %v2452 = vpack.c.b16 %v2342, %v2340
        %v2453 = vpack.c.b16 %v2345, %v2343
        %v2454 = vpack.c.b16 %v2346, %v2344
        %v2455 = vpack.c.b16 %v2349, %v2347
        %v2456 = vpack.c.b16 %v2350, %v2348
        %v2457 = vpack.c.b16 %v2353, %v2351
        %v2458 = vpack.c.b16 %v2354, %v2352
        %v2459 = vpack.c.b16 %v2357, %v2355
        %v2460 = vpack.c.b16 %v2358, %v2356
        %v2461 = vpack.c.b16 %v2361, %v2359
        %v2462 = vpack.c.b16 %v2362, %v2360
        %v2463 = vpack.c.b16 %v2365, %v2363
        %v2464 = vpack.c.b16 %v2366, %v2364
        %v2465 = vpack.c.b16 %v2369, %v2367
        %v2466 = vpack.c.b16 %v2370, %v2368
        %v2467 = vpack.c.b16 %v2373, %v2371
        %v2468 = vpack.c.b16 %v2374, %v2372
        %v2469 = vpack.c.b16 %v2377, %v2375
        %v2470 = vpack.c.b16 %v2378, %v2376
        %v2471 = vpack.c.b16 %v2381, %v2379
        %v2472 = vpack.c.b16 %v2382, %v2380
        %v2473 = vpack.c.b16 %v2385, %v2383
        %v2474 = vpack.c.b16 %v2386, %v2384
        %v2475 = vpack.c.b16 %v2389, %v2387
        %v2476 = vpack.c.b16 %v2390, %v2388
        %v2477 = vpack.c.b16 %v2393, %v2391
        %v2478 = vpack.c.b16 %v2394, %v2392
        %v2479 = vpack.c.b16 %v2397, %v2395
        %v2480 = vpack.c.b16 %v2398, %v2396
        %v2481 = vpack.c.b16 %v2401, %v2399
        %v2482 = vpack.c.b16 %v2402, %v2400
        %v2483 = vpack.c.b16 %v2405, %v2403
        %v2484 = vpack.c.b16 %v2406, %v2404
        %v2485 = vpack.c.b16 %v2409, %v2407
        %v2486 = vpack.c.b16 %v2410, %v2408
        %v2487 = vpack.c.b16 %v2413, %v2411
        %v2488 = vpack.c.b16 %v2414, %v2412
        %v2489 = vpack.c.b16 %v2417, %v2415
        %v2490 = vpack.c.b16 %v2418, %v2416
        %v2491 = vpack.c.b16 %v2421, %v2419
        %v2492 = vpack.c.b16 %v2422, %v2420
        %v2493 = vpack.c.b16 %v2425, %v2423
        %v2494 = vpack.c.b16 %v2426, %v2424
        %v2495 = vpack.c.b16 %v2429, %v2427
        %v2496 = vpack.c.b16 %v2430, %v2428
        %v2497 = vpack.c.b16 %v2433, %v2431
        %v2498 = vpack.c.b16 %v2434, %v2432
        %2563 = vmatprep.subr.bf16.mxu0 %v2436
        %2564 = vmatpush1.bf16.msra.mxu0 %v2435
        %2565 = vmatprep.subr.bf16.mxu0 %v2438
        %2566 = vmatpush1.bf16.msra.mxu0 %v2437
        %2567 = vmatprep.subr.bf16.mxu0 %v2440
        %2568 = vmatpush1.bf16.msra.mxu0 %v2439
        %2569 = vmatprep.subr.bf16.mxu0 %v2442
        %2570 = vmatpush1.bf16.msra.mxu0 %v2441
        %2571 = vmatprep.subr.bf16.mxu0 %v2444
        %2572 = vmatpush1.bf16.msra.mxu0 %v2443
        %2573 = vmatprep.subr.bf16.mxu0 %v2446
        %2574 = vmatpush1.bf16.msra.mxu0 %v2445
        %2575 = vmatprep.subr.bf16.mxu0 %v2448
        %2576 = vmatpush1.bf16.msra.mxu0 %v2447
        %2577 = vmatprep.subr.bf16.mxu0 %v2450
        %2578 = vmatpush1.bf16.msra.mxu0 %v2449
        %2579 = vmatprep.subr.bf16.mxu0 %v2452
        %2580 = vmatpush1.bf16.msra.mxu0 %v2451
        %2581 = vmatprep.subr.bf16.mxu0 %v2454
        %2582 = vmatpush1.bf16.msra.mxu0 %v2453
        %2583 = vmatprep.subr.bf16.mxu0 %v2456
        %2584 = vmatpush1.bf16.msra.mxu0 %v2455
        %2585 = vmatprep.subr.bf16.mxu0 %v2458
        %2586 = vmatpush1.bf16.msra.mxu0 %v2457
        %2587 = vmatprep.subr.bf16.mxu0 %v2460
        %2588 = vmatpush1.bf16.msra.mxu0 %v2459
        %2589 = vmatprep.subr.bf16.mxu0 %v2462
        %2590 = vmatpush1.bf16.msra.mxu0 %v2461
        %2591 = vmatprep.subr.bf16.mxu0 %v2464
        %2592 = vmatpush1.bf16.msra.mxu0 %v2463
        %2593 = vmatprep.subr.bf16.mxu0 %v2466
        %2594 = vmatpush1.bf16.msra.mxu0 %v2465
        %2595 = vmatprep.mubr.bf16.mxu0 %v1482
        %2596 = vmatmul.mubr.bf16.gmra.mrb[0].mxu0 %v1481
        %v2597 = vpop.f32.mrb[0].mxu0
        %v2598 = vadd.f32 %v2236, %v2597
        %v2599 = vpop.f32.mrb[0].mxu0
        %v2600 = vadd.f32 %v2240, %v2599
        %v2601 = vpop.f32.mrb[0].mxu0
        %v2602 = vadd.f32 %v2236, %v2601
        %v2603 = vpop.f32.mrb[0].mxu0
        %v2604 = vadd.f32 %v2240, %v2603
        %2605 = vmatprep.mubr.bf16.mxu0 %v1486
        %2606 = vmatmul.mubr.bf16.gmra.mrb[0].mxu0 %v1485
        %v2607 = vpop.f32.mrb[0].mxu0
        %v2608 = vadd.f32 %v2236, %v2607
        %v2609 = vpop.f32.mrb[0].mxu0
        %v2610 = vadd.f32 %v2240, %v2609
        %v2611 = vpop.f32.mrb[0].mxu0
        %v2612 = vadd.f32 %v2236, %v2611
        %v2613 = vpop.f32.mrb[0].mxu0
        %v2614 = vadd.f32 %v2240, %v2613
        %2615 = vmatprep.mubr.bf16.mxu0 %v1490
        %2616 = vmatmul.mubr.bf16.gmra.mrb[0].mxu0 %v1489
        %v2617 = vpop.f32.mrb[0].mxu0
        %v2618 = vadd.f32 %v2236, %v2617
        %v2619 = vpop.f32.mrb[0].mxu0
        %v2620 = vadd.f32 %v2240, %v2619
        %v2621 = vpop.f32.mrb[0].mxu0
        %v2622 = vadd.f32 %v2236, %v2621
        %v2623 = vpop.f32.mrb[0].mxu0
        %v2624 = vadd.f32 %v2240, %v2623
        %2625 = vmatprep.mubr.bf16.mxu0 %v1494
        %2626 = vmatmul.mubr.bf16.gmra.mrb[0].mxu0 %v1493
        %v2627 = vpop.f32.mrb[0].mxu0
        %v2628 = vadd.f32 %v2236, %v2627
        %v2629 = vpop.f32.mrb[0].mxu0
        %v2630 = vadd.f32 %v2240, %v2629
        %v2631 = vpop.f32.mrb[0].mxu0
        %v2632 = vadd.f32 %v2236, %v2631
        %v2633 = vpop.f32.mrb[0].mxu0
        %v2634 = vadd.f32 %v2240, %v2633
        %2635 = vmatprep.mubr.bf16.mxu0 %v1498
        %2636 = vmatmul.mubr.bf16.gmra.mrb[0].mxu0 %v1497
        %v2637 = vpop.f32.mrb[0].mxu0
        %v2638 = vadd.f32 %v2236, %v2637
        %v2639 = vpop.f32.mrb[0].mxu0
        %v2640 = vadd.f32 %v2240, %v2639
        %v2641 = vpop.f32.mrb[0].mxu0
        %v2642 = vadd.f32 %v2236, %v2641
        %v2643 = vpop.f32.mrb[0].mxu0
        %v2644 = vadd.f32 %v2240, %v2643
        %2645 = vmatprep.mubr.bf16.mxu0 %v1502
        %2646 = vmatmul.mubr.bf16.gmra.mrb[0].mxu0 %v1501
        %v2647 = vpop.f32.mrb[0].mxu0
        %v2648 = vadd.f32 %v2236, %v2647
        %v2649 = vpop.f32.mrb[0].mxu0
        %v2650 = vadd.f32 %v2240, %v2649
        %v2651 = vpop.f32.mrb[0].mxu0
        %v2652 = vadd.f32 %v2236, %v2651
        %v2653 = vpop.f32.mrb[0].mxu0
        %v2654 = vadd.f32 %v2240, %v2653
        %2655 = vmatprep.mubr.bf16.mxu0 %v1506
        %2656 = vmatmul.mubr.bf16.gmra.mrb[0].mxu0 %v1505
        %v2657 = vpop.f32.mrb[0].mxu0
        %v2658 = vadd.f32 %v2236, %v2657
        %v2659 = vpop.f32.mrb[0].mxu0
        %v2660 = vadd.f32 %v2240, %v2659
        %v2661 = vpop.f32.mrb[0].mxu0
        %v2662 = vadd.f32 %v2236, %v2661
        %v2663 = vpop.f32.mrb[0].mxu0
        %v2664 = vadd.f32 %v2240, %v2663
        %2665 = vmatprep.mubr.bf16.mxu0 %v1510
        %2666 = vmatmul.mubr.bf16.gmra.mrb[0].mxu0 %v1509
        %v2667 = vpop.f32.mrb[0].mxu0
        %v2668 = vadd.f32 %v2236, %v2667
        %v2669 = vpop.f32.mrb[0].mxu0
        %v2670 = vadd.f32 %v2240, %v2669
        %v2671 = vpop.f32.mrb[0].mxu0
        %v2672 = vadd.f32 %v2236, %v2671
        %v2673 = vpop.f32.mrb[0].mxu0
        %v2674 = vadd.f32 %v2240, %v2673
        %2675 = vdwg.mxu0
        %2676 = vmatprep.subr.bf16.mxu0 %v2468
        %2677 = vmatpush1.bf16.msra.mxu0 %v2467
        %2678 = vmatprep.subr.bf16.mxu0 %v2470
        %2679 = vmatpush1.bf16.msra.mxu0 %v2469
        %2680 = vmatprep.subr.bf16.mxu0 %v2472
        %2681 = vmatpush1.bf16.msra.mxu0 %v2471
        %2682 = vmatprep.subr.bf16.mxu0 %v2474
        %2683 = vmatpush1.bf16.msra.mxu0 %v2473
        %2684 = vmatprep.subr.bf16.mxu0 %v2476
        %2685 = vmatpush1.bf16.msra.mxu0 %v2475
        %2686 = vmatprep.subr.bf16.mxu0 %v2478
        %2687 = vmatpush1.bf16.msra.mxu0 %v2477
        %2688 = vmatprep.subr.bf16.mxu0 %v2480
        %2689 = vmatpush1.bf16.msra.mxu0 %v2479
        %2690 = vmatprep.subr.bf16.mxu0 %v2482
        %2691 = vmatpush1.bf16.msra.mxu0 %v2481
        %2692 = vmatprep.subr.bf16.mxu0 %v2484
        %2693 = vmatpush1.bf16.msra.mxu0 %v2483
        %2694 = vmatprep.subr.bf16.mxu0 %v2486
        %2695 = vmatpush1.bf16.msra.mxu0 %v2485
        %2696 = vmatprep.subr.bf16.mxu0 %v2488
        %2697 = vmatpush1.bf16.msra.mxu0 %v2487
        %2698 = vmatprep.subr.bf16.mxu0 %v2490
        %2699 = vmatpush1.bf16.msra.mxu0 %v2489
        %2700 = vmatprep.subr.bf16.mxu0 %v2492
        %2701 = vmatpush1.bf16.msra.mxu0 %v2491
        %2702 = vmatprep.subr.bf16.mxu0 %v2494
        %2703 = vmatpush1.bf16.msra.mxu0 %v2493
        %2704 = vmatprep.subr.bf16.mxu0 %v2496
        %2705 = vmatpush1.bf16.msra.mxu0 %v2495
        %2706 = vmatprep.subr.bf16.mxu0 %v2498
        %2707 = vmatpush1.bf16.msra.mxu0 %v2497
        %2708 = vmatprep.mubr.bf16.mxu0 %v1484
        %2709 = vmatmul.mubr.bf16.gmra.mrb[0].mxu0 %v1483
        %v2710 = vpop.f32.mrb[0].mxu0
        %v2711 = vadd.f32 %v2598, %v2710
        %v2712 = vpop.f32.mrb[0].mxu0
        %v2713 = vadd.f32 %v2600, %v2712
        %v2714 = vpop.f32.mrb[0].mxu0
        %v2715 = vadd.f32 %v2602, %v2714
        %v2716 = vpop.f32.mrb[0].mxu0
        %v2717 = vadd.f32 %v2604, %v2716
        %2718 = vmatprep.mubr.bf16.mxu0 %v1488
        %2719 = vmatmul.mubr.bf16.gmra.mrb[0].mxu0 %v1487
        %v2720 = vpop.f32.mrb[0].mxu0
        %v2721 = vadd.f32 %v2608, %v2720
        %v2722 = vpop.f32.mrb[0].mxu0
        %v2723 = vadd.f32 %v2610, %v2722
        %v2724 = vpop.f32.mrb[0].mxu0
        %v2725 = vadd.f32 %v2612, %v2724
        %v2726 = vpop.f32.mrb[0].mxu0
        %v2727 = vadd.f32 %v2614, %v2726
        %2728 = vmatprep.mubr.bf16.mxu0 %v1492
        %2729 = vmatmul.mubr.bf16.gmra.mrb[0].mxu0 %v1491
        %v2730 = vpop.f32.mrb[0].mxu0
        %v2731 = vadd.f32 %v2618, %v2730
        %v2732 = vpop.f32.mrb[0].mxu0
        %v2733 = vadd.f32 %v2620, %v2732
        %v2734 = vpop.f32.mrb[0].mxu0
        %v2735 = vadd.f32 %v2622, %v2734
        %v2736 = vpop.f32.mrb[0].mxu0
        %v2737 = vadd.f32 %v2624, %v2736
        %2738 = vmatprep.mubr.bf16.mxu0 %v1496
        %2739 = vmatmul.mubr.bf16.gmra.mrb[0].mxu0 %v1495
        %v2740 = vpop.f32.mrb[0].mxu0
        %v2741 = vadd.f32 %v2628, %v2740
        %v2742 = vpop.f32.mrb[0].mxu0
        %v2743 = vadd.f32 %v2630, %v2742
        %v2744 = vpop.f32.mrb[0].mxu0
        %v2745 = vadd.f32 %v2632, %v2744
        %v2746 = vpop.f32.mrb[0].mxu0
        %v2747 = vadd.f32 %v2634, %v2746
        %2748 = vmatprep.mubr.bf16.mxu0 %v1500
        %2749 = vmatmul.mubr.bf16.gmra.mrb[0].mxu0 %v1499
        %v2750 = vpop.f32.mrb[0].mxu0
        %v2751 = vadd.f32 %v2638, %v2750
        %v2752 = vpop.f32.mrb[0].mxu0
        %v2753 = vadd.f32 %v2640, %v2752
        %v2754 = vpop.f32.mrb[0].mxu0
        %v2755 = vadd.f32 %v2642, %v2754
        %v2756 = vpop.f32.mrb[0].mxu0
        %v2757 = vadd.f32 %v2644, %v2756
        %2758 = vmatprep.mubr.bf16.mxu0 %v1504
        %2759 = vmatmul.mubr.bf16.gmra.mrb[0].mxu0 %v1503
        %v2760 = vpop.f32.mrb[0].mxu0
        %v2761 = vadd.f32 %v2648, %v2760
        %v2762 = vpop.f32.mrb[0].mxu0
        %v2763 = vadd.f32 %v2650, %v2762
        %v2764 = vpop.f32.mrb[0].mxu0
        %v2765 = vadd.f32 %v2652, %v2764
        %v2766 = vpop.f32.mrb[0].mxu0
        %v2767 = vadd.f32 %v2654, %v2766
        %2768 = vmatprep.mubr.bf16.mxu0 %v1508
        %2769 = vmatmul.mubr.bf16.gmra.mrb[0].mxu0 %v1507
        %v2770 = vpop.f32.mrb[0].mxu0
        %v2771 = vadd.f32 %v2658, %v2770
        %v2772 = vpop.f32.mrb[0].mxu0
        %v2773 = vadd.f32 %v2660, %v2772
        %v2774 = vpop.f32.mrb[0].mxu0
        %v2775 = vadd.f32 %v2662, %v2774
        %v2776 = vpop.f32.mrb[0].mxu0
        %v2777 = vadd.f32 %v2664, %v2776
        %2778 = vmatprep.mubr.bf16.mxu0 %v1512
        %2779 = vmatmul.mubr.bf16.gmra.mrb[0].mxu0 %v1511
        %v2780 = vpop.f32.mrb[0].mxu0
        %v2781 = vadd.f32 %v2668, %v2780
        %v2782 = vpop.f32.mrb[0].mxu0
        %v2783 = vadd.f32 %v2670, %v2782
        %v2784 = vpop.f32.mrb[0].mxu0
        %v2785 = vadd.f32 %v2672, %v2784
        %v2786 = vpop.f32.mrb[0].mxu0
        %v2787 = vadd.f32 %v2674, %v2786
        %2788 = vdwg.mxu0
        %v2789 = vxor.u32 %v2711, 2147483648
        %v2790 = vxor.u32 %v2713, 2147483648
        %v2791 = vxor.u32 %v2715, 2147483648
        %v2792 = vxor.u32 %v2717, 2147483648
        %v2793 = vxor.u32 %v2721, 2147483648
        %v2794 = vxor.u32 %v2723, 2147483648
        %v2795 = vxor.u32 %v2725, 2147483648
        %v2796 = vxor.u32 %v2727, 2147483648
        %v2797 = vxor.u32 %v2731, 2147483648
        %v2798 = vxor.u32 %v2733, 2147483648
        %v2799 = vxor.u32 %v2735, 2147483648
        %v2800 = vxor.u32 %v2737, 2147483648
        %v2801 = vxor.u32 %v2741, 2147483648
        %v2802 = vxor.u32 %v2743, 2147483648
        %v2803 = vxor.u32 %v2745, 2147483648
        %v2804 = vxor.u32 %v2747, 2147483648
        %v2805 = vxor.u32 %v2751, 2147483648
        %v2806 = vxor.u32 %v2753, 2147483648
        %v2807 = vxor.u32 %v2755, 2147483648
        %v2808 = vxor.u32 %v2757, 2147483648
        %v2809 = vxor.u32 %v2761, 2147483648
        %v2810 = vxor.u32 %v2763, 2147483648
        %v2811 = vxor.u32 %v2765, 2147483648
        %v2812 = vxor.u32 %v2767, 2147483648
        %v2813 = vxor.u32 %v2771, 2147483648
        %v2814 = vxor.u32 %v2773, 2147483648
        %v2815 = vxor.u32 %v2775, 2147483648
        %v2816 = vxor.u32 %v2777, 2147483648
        %v2817 = vxor.u32 %v2781, 2147483648
        %v2818 = vxor.u32 %v2783, 2147483648
        %v2819 = vxor.u32 %v2785, 2147483648
        %v2820 = vxor.u32 %v2787, 2147483648
        %v2821 = vmul.f32 %v2789, 1.442695
        %v2822 = vpow.pop %v2821
        %v2823 = vmul.f32 %v2790, 1.442695
        %v2824 = vpow.pop %v2823
        %v2825 = vmul.f32 %v2791, 1.442695
        %v2826 = vpow.pop %v2825
        %v2827 = vmul.f32 %v2792, 1.442695
        %v2828 = vpow.pop %v2827
        %v2829 = vmul.f32 %v2793, 1.442695
        %v2830 = vpow.pop %v2829
        %v2831 = vmul.f32 %v2794, 1.442695
        %v2832 = vpow.pop %v2831
        %v2833 = vmul.f32 %v2795, 1.442695
        %v2834 = vpow.pop %v2833
        %v2835 = vmul.f32 %v2796, 1.442695
        %v2836 = vpow.pop %v2835
        %v2837 = vmul.f32 %v2797, 1.442695
        %v2838 = vpow.pop %v2837
        %v2839 = vmul.f32 %v2798, 1.442695
        %v2840 = vpow.pop %v2839
        %v2841 = vmul.f32 %v2799, 1.442695
        %v2842 = vpow.pop %v2841
        %v2843 = vmul.f32 %v2800, 1.442695
        %v2844 = vpow.pop %v2843
        %v2845 = vmul.f32 %v2801, 1.442695
        %v2846 = vpow.pop %v2845
        %v2847 = vmul.f32 %v2802, 1.442695
        %v2848 = vpow.pop %v2847
        %v2849 = vmul.f32 %v2803, 1.442695
        %v2850 = vpow.pop %v2849
        %v2851 = vmul.f32 %v2804, 1.442695
        %v2852 = vpow.pop %v2851
        %v2853 = vmul.f32 %v2805, 1.442695
        %v2854 = vpow.pop %v2853
        %v2855 = vmul.f32 %v2806, 1.442695
        %v2856 = vpow.pop %v2855
        %v2857 = vmul.f32 %v2807, 1.442695
        %v2858 = vpow.pop %v2857
        %v2859 = vmul.f32 %v2808, 1.442695
        %v2860 = vpow.pop %v2859
        %v2861 = vmul.f32 %v2809, 1.442695
        %v2862 = vpow.pop %v2861
        %v2863 = vmul.f32 %v2810, 1.442695
        %v2864 = vpow.pop %v2863
        %v2865 = vmul.f32 %v2811, 1.442695
        %v2866 = vpow.pop %v2865
        %v2867 = vmul.f32 %v2812, 1.442695
        %v2868 = vpow.pop %v2867
        %v2869 = vmul.f32 %v2813, 1.442695
        %v2870 = vpow.pop %v2869
        %v2871 = vmul.f32 %v2814, 1.442695
        %v2872 = vpow.pop %v2871
        %v2873 = vmul.f32 %v2815, 1.442695
        %v2874 = vpow.pop %v2873
        %v2875 = vmul.f32 %v2816, 1.442695
        %v2876 = vpow.pop %v2875
        %v2877 = vmul.f32 %v2817, 1.442695
        %v2878 = vpow.pop %v2877
        %v2879 = vmul.f32 %v2818, 1.442695
        %v2880 = vpow.pop %v2879
        %v2881 = vmul.f32 %v2819, 1.442695
        %v2882 = vpow.pop %v2881
        %v2883 = vmul.f32 %v2820, 1.442695
        %v2884 = vpow.pop %v2883
        %v2885 = vadd.f32 %v2822, 1.0
        %v2886 = vadd.f32 %v2824, 1.0
        %v2887 = vadd.f32 %v2826, 1.0
        %v2888 = vadd.f32 %v2828, 1.0
        %v2889 = vadd.f32 %v2830, 1.0
        %v2890 = vadd.f32 %v2832, 1.0
        %v2891 = vadd.f32 %v2834, 1.0
        %v2892 = vadd.f32 %v2836, 1.0
        %v2893 = vadd.f32 %v2838, 1.0
        %v2894 = vadd.f32 %v2840, 1.0
        %v2895 = vadd.f32 %v2842, 1.0
        %v2896 = vadd.f32 %v2844, 1.0
        %v2897 = vadd.f32 %v2846, 1.0
        %v2898 = vadd.f32 %v2848, 1.0
        %v2899 = vadd.f32 %v2850, 1.0
        %v2900 = vadd.f32 %v2852, 1.0
        %v2901 = vadd.f32 %v2854, 1.0
        %v2902 = vadd.f32 %v2856, 1.0
        %v2903 = vadd.f32 %v2858, 1.0
        %v2904 = vadd.f32 %v2860, 1.0
        %v2905 = vadd.f32 %v2862, 1.0
        %v2906 = vadd.f32 %v2864, 1.0
        %v2907 = vadd.f32 %v2866, 1.0
        %v2908 = vadd.f32 %v2868, 1.0
        %v2909 = vadd.f32 %v2870, 1.0
        %v2910 = vadd.f32 %v2872, 1.0
        %v2911 = vadd.f32 %v2874, 1.0
        %v2912 = vadd.f32 %v2876, 1.0
        %v2913 = vadd.f32 %v2878, 1.0
        %v2914 = vadd.f32 %v2880, 1.0
        %v2915 = vadd.f32 %v2882, 1.0
        %v2916 = vadd.f32 %v2884, 1.0
        %v2917 = vrcp.pop %v2885
        %v2918 = vmul.f32 1.0, %v2917
        %v2919 = vrcp.pop %v2886
        %v2920 = vmul.f32 1.0, %v2919
        %v2921 = vrcp.pop %v2887
        %v2922 = vmul.f32 1.0, %v2921
        %v2923 = vrcp.pop %v2888
        %v2924 = vmul.f32 1.0, %v2923
        %v2925 = vrcp.pop %v2889
        %v2926 = vmul.f32 1.0, %v2925
        %v2927 = vrcp.pop %v2890
        %v2928 = vmul.f32 1.0, %v2927
        %v2929 = vrcp.pop %v2891
        %v2930 = vmul.f32 1.0, %v2929
        %v2931 = vrcp.pop %v2892
        %v2932 = vmul.f32 1.0, %v2931
        %v2933 = vrcp.pop %v2893
        %v2934 = vmul.f32 1.0, %v2933
        %v2935 = vrcp.pop %v2894
        %v2936 = vmul.f32 1.0, %v2935
        %v2937 = vrcp.pop %v2895
        %v2938 = vmul.f32 1.0, %v2937
        %v2939 = vrcp.pop %v2896
        %v2940 = vmul.f32 1.0, %v2939
        %v2941 = vrcp.pop %v2897
        %v2942 = vmul.f32 1.0, %v2941
        %v2943 = vrcp.pop %v2898
        %v2944 = vmul.f32 1.0, %v2943
        %v2945 = vrcp.pop %v2899
        %v2946 = vmul.f32 1.0, %v2945
        %v2947 = vrcp.pop %v2900
        %v2948 = vmul.f32 1.0, %v2947
        %v2949 = vrcp.pop %v2901
        %v2950 = vmul.f32 1.0, %v2949
        %v2951 = vrcp.pop %v2902
        %v2952 = vmul.f32 1.0, %v2951
        %v2953 = vrcp.pop %v2903
        %v2954 = vmul.f32 1.0, %v2953
        %v2955 = vrcp.pop %v2904
        %v2956 = vmul.f32 1.0, %v2955
        %v2957 = vrcp.pop %v2905
        %v2958 = vmul.f32 1.0, %v2957
        %v2959 = vrcp.pop %v2906
        %v2960 = vmul.f32 1.0, %v2959
        %v2961 = vrcp.pop %v2907
        %v2962 = vmul.f32 1.0, %v2961
        %v2963 = vrcp.pop %v2908
        %v2964 = vmul.f32 1.0, %v2963
        %v2965 = vrcp.pop %v2909
        %v2966 = vmul.f32 1.0, %v2965
        %v2967 = vrcp.pop %v2910
        %v2968 = vmul.f32 1.0, %v2967
        %v2969 = vrcp.pop %v2911
        %v2970 = vmul.f32 1.0, %v2969
        %v2971 = vrcp.pop %v2912
        %v2972 = vmul.f32 1.0, %v2971
        %v2973 = vrcp.pop %v2913
        %v2974 = vmul.f32 1.0, %v2973
        %v2975 = vrcp.pop %v2914
        %v2976 = vmul.f32 1.0, %v2975
        %v2977 = vrcp.pop %v2915
        %v2978 = vmul.f32 1.0, %v2977
        %v2979 = vrcp.pop %v2916
        %v2980 = vmul.f32 1.0, %v2979
        %v2981 = vmul.f32 %v2135, %v2918
        %v2982 = vmul.f32 %v2136, %v2920
        %v2983 = vmul.f32 %v2137, %v2922
        %v2984 = vmul.f32 %v2138, %v2924
        %v2985 = vmul.f32 %v2139, %v2926
        %v2986 = vmul.f32 %v2140, %v2928
        %v2987 = vmul.f32 %v2141, %v2930
        %v2988 = vmul.f32 %v2142, %v2932
        %v2989 = vmul.f32 %v2143, %v2934
        %v2990 = vmul.f32 %v2144, %v2936
        %v2991 = vmul.f32 %v2145, %v2938
        %v2992 = vmul.f32 %v2146, %v2940
        %v2993 = vmul.f32 %v2147, %v2942
        %v2994 = vmul.f32 %v2148, %v2944
        %v2995 = vmul.f32 %v2149, %v2946
        %v2996 = vmul.f32 %v2150, %v2948
        %v2997 = vmul.f32 %v2151, %v2950
        %v2998 = vmul.f32 %v2152, %v2952
        %v2999 = vmul.f32 %v2153, %v2954
        %v3000 = vmul.f32 %v2154, %v2956
        %v3001 = vmul.f32 %v2155, %v2958
        %v3002 = vmul.f32 %v2156, %v2960
        %v3003 = vmul.f32 %v2157, %v2962
        %v3004 = vmul.f32 %v2158, %v2964
        %v3005 = vmul.f32 %v2159, %v2966
        %v3006 = vmul.f32 %v2160, %v2968
        %v3007 = vmul.f32 %v2161, %v2970
        %v3008 = vmul.f32 %v2162, %v2972
        %v3009 = vmul.f32 %v2163, %v2974
        %v3010 = vmul.f32 %v2164, %v2976
        %v3011 = vmul.f32 %v2165, %v2978
        %v3012 = vmul.f32 %v2166, %v2980
        %v3013 = vpack.c.bf16 %v2983, %v2981
        %v3014 = vpack.c.bf16 %v2984, %v2982
        %v3015 = vpack.c.bf16 %v2987, %v2985
        %v3016 = vpack.c.bf16 %v2988, %v2986
        %v3017 = vpack.c.bf16 %v2991, %v2989
        %v3018 = vpack.c.bf16 %v2992, %v2990
        %v3019 = vpack.c.bf16 %v2995, %v2993
        %v3020 = vpack.c.bf16 %v2996, %v2994
        %v3021 = vpack.c.bf16 %v2999, %v2997
        %v3022 = vpack.c.bf16 %v3000, %v2998
        %v3023 = vpack.c.bf16 %v3003, %v3001
        %v3024 = vpack.c.bf16 %v3004, %v3002
        %v3025 = vpack.c.bf16 %v3007, %v3005
        %v3026 = vpack.c.bf16 %v3008, %v3006
        %v3027 = vpack.c.bf16 %v3011, %v3009
        %v3028 = vpack.c.bf16 %v3012, %v3010
        %v3029 = vld [vmem:[%s7] sm:$0x3]
        %v3030 = vld [vmem:[%s8] sm:$0x3]
        %3032 = vset.pattern.permute.xlu0 0
        %3033 = vperm.xlu0 %3032, %v3030
        %v3034 = vpop.permute.xlu0 %3033
        %v3038 = vunpack.c.l.s4 1966171168
        %v3039 = vunpack.c.0.s8 %v3038
        %v3040 = vlaneseq
        %v3041 = vshrl.u32 %v3040, 7
        %v3042 = vsub.s32 %v3039, %v3041
        %v3043 = vrot.slane %v3029, %v3042
        %v3044 = vcombine.high %v3043, %v3043
        %v3046 = vunpack.c.l.s4 1966171168
        %v3047 = vunpack.c.0.s8 %v3046
        %v3048 = vlaneseq
        %v3049 = vshrl.u32 %v3048, 7
        %v3050 = vsub.s32 %v3047, %v3049
        %v3051 = vrot.slane %v3043, %v3050
        %v3053 = vunpack.c.l.s4 1966171168
        %v3054 = vunpack.c.0.s8 %v3053
        %v3055 = vlaneseq
        %v3056 = vshrl.u32 %v3055, 7
        %v3057 = vsub.s32 %v3054, %v3056
        %v3058 = vrot.slane %v3044, %v3057
        %3061 = vmatprep.subr.bf16.mxu0 %v3014
        %3062 = vmatpush1.bf16.xpose.msra.mxu0 %v3013
        %3063 = vmatprep.subr.bf16.mxu0 %v3016
        %3064 = vmatpush1.bf16.xpose.msra.mxu0 %v3015
        %3065 = vmatprep.subr.bf16.mxu0 %v3018
        %3066 = vmatpush1.bf16.xpose.msra.mxu0 %v3017
        %3067 = vmatprep.subr.bf16.mxu0 %v3020
        %3068 = vmatpush1.bf16.xpose.msra.mxu0 %v3019
        %3069 = vmatprep.subr.bf16.mxu0 %v3022
        %3070 = vmatpush1.bf16.xpose.msra.mxu0 %v3021
        %3071 = vmatprep.subr.bf16.mxu0 %v3024
        %3072 = vmatpush1.bf16.xpose.msra.mxu0 %v3023
        %3073 = vmatprep.subr.bf16.mxu0 %v3026
        %3074 = vmatpush1.bf16.xpose.msra.mxu0 %v3025
        %3075 = vmatprep.subr.bf16.mxu0 %v3028
        %3076 = vmatpush1.bf16.xpose.msra.mxu0 %v3027
        %3077 = vmatprep.subr.bf16.mxu0 0
        %3078 = vmatpush1.bf16.xpose.msra.mxu0 0
        %3079 = vmatprep.subr.bf16.mxu0 0
        %3080 = vmatpush1.bf16.xpose.msra.mxu0 0
        %3081 = vmatprep.subr.bf16.mxu0 0
        %3082 = vmatpush1.bf16.xpose.msra.mxu0 0
        %3083 = vmatprep.subr.bf16.mxu0 0
        %3084 = vmatpush1.bf16.xpose.msra.mxu0 0
        %3085 = vmatprep.subr.bf16.mxu0 0
        %3086 = vmatpush1.bf16.xpose.msra.mxu0 0
        %3087 = vmatprep.subr.bf16.mxu0 0
        %3088 = vmatpush1.bf16.xpose.msra.mxu0 0
        %3089 = vmatprep.subr.bf16.mxu0 0
        %3090 = vmatpush1.bf16.xpose.msra.mxu0 0
        %3091 = vmatprep.subr.bf16.mxu0 0
        %3092 = vmatpush1.bf16.xpose.msra.mxu0 0
        %3093 = vmatprep.mubr.bf16.mxu0 %v3058
        %3094 = vmatmul.mubr.bf16.gmra.mrb[0].mxu0 %v3051
        %v3095 = vpop.f32.mrb[0].mxu0
        %v3096 = vadd.f32 %v3034, %v3095
        %v3097 = vpop.f32.mrb[0].mxu0
        %v3098 = vpop.f32.mrb[0].mxu0
        %v3099 = vpop.f32.mrb[0].mxu0
        %3100 = vdwg.mxu0
        %3101 = vst [vmem:[%s545] sm:$0x3] %v3096
        %v3102 = vlaneseq
        %v3103 = vand.u32 %v3102, 127
        %v3104 = vadd.s32 %v640, %v3103
        %vm3105 = vcmp.lt.s32.totalorder %v3104, 300
        %v3106 = vsel %vm3105, %v3096, -1e+30
        %v3107 = vld [vmem:[%s551] sm:$0x3]
        %vm3108 = vcmask 1041408
        %v3109 = vsel %vm3108, %v3106, -inf
        %3110 = vmax.xlane.f32.xlu0 %v3109
        %v3111 = vpop.xlane.xlu0 %3110
        %v3112 = vmax.f32 %v3107, %v3111
        %v3113 = vsub.f32 %v3107, %v3112
        %v3114 = vmul.f32 %v3113, 1.442695
        %v3115 = vpow.pop %v3114
        %3117 = vset.pattern.permute.xlu0 0
        %3118 = vperm.xlu0 %3117, %v3112
        %v3119 = vpop.permute.xlu0 %3118
        %v3121 = vsub.f32 %v3106, %v3119
        %v3122 = vmul.f32 %v3121, 1.442695
        %v3123 = vpow.pop %v3122
        %v3124 = vld [vmem:[%s555] sm:$0x3]
        %v3125 = vmul.f32 %v3115, %v3124
        %v3126 = vsel %vm3108, %v3123, 0.0
        %3127 = vadd.xlane.f32.xlu0 %v3126
        %v3128 = vpop.xlane.xlu0 %3127
        %v3129 = vadd.f32 %v3125, %v3128
        %vm3130 = vcmask 1024
        %3131 = vst.msk [vmem:[%s555] sm:$0x3] %vm3130, %v3129
        %v3132 = vld [vmem:[%s560] sm:$0xff]
        %3134 = vset.pattern.permute.xlu0 0
        %3135 = vperm.xlu0 %3134, %v3115
        %v3136 = vpop.permute.xlu0 %3135
        %v3139 = vcombine.high %v3132, %v3132
        %v3141 = vunpack.c.l.s4 1983009808
        %v3142 = vunpack.c.0.s8 %v3141
        %v3143 = vlaneseq
        %v3144 = vshrl.u32 %v3143, 7
        %v3145 = vsub.s32 %v3142, %v3144
        %v3146 = vrot.slane %v3132, %v3145
        %v3148 = vunpack.c.l.s4 1983009808
        %v3149 = vunpack.c.0.s8 %v3148
        %v3150 = vlaneseq
        %v3151 = vshrl.u32 %v3150, 7
        %v3152 = vsub.s32 %v3149, %v3151
        %v3153 = vrot.slane %v3139, %v3152
        %v3154 = vcombine.high %v3146, %v3146
        %v3155 = vcombine.high %v3153, %v3153
        %v3160 = vmul.f32 %v3136, %v3146
        %v3161 = vmul.f32 %v3136, %v3154
        %v3162 = vmul.f32 %v3136, %v3153
        %v3163 = vmul.f32 %v3136, %v3155
        %v3164 = vpack.c.bf16 %v3123, %v3123
        %3165 = vmatprep.subr.bf16.mxu0 %v1482
        %3166 = vmatpush1.bf16.msra.mxu0 %v1481
        %3167 = vmatprep.subr.bf16.mxu0 %v1486
        %3168 = vmatpush1.bf16.msra.mxu0 %v1485
        %3169 = vmatprep.subr.bf16.mxu0 %v1490
        %3170 = vmatpush1.bf16.msra.mxu0 %v1489
        %3171 = vmatprep.subr.bf16.mxu0 %v1494
        %3172 = vmatpush1.bf16.msra.mxu0 %v1493
        %3173 = vmatprep.subr.bf16.mxu0 %v1498
        %3174 = vmatpush1.bf16.msra.mxu0 %v1497
        %3175 = vmatprep.subr.bf16.mxu0 %v1502
        %3176 = vmatpush1.bf16.msra.mxu0 %v1501
        %3177 = vmatprep.subr.bf16.mxu0 %v1506
        %3178 = vmatpush1.bf16.msra.mxu0 %v1505
        %3179 = vmatprep.subr.bf16.mxu0 %v1510
        %3180 = vmatpush1.bf16.msra.mxu0 %v1509
        %3181 = vmatprep.subr.bf16.mxu0 0
        %3182 = vmatpush1.bf16.msra.mxu0 0
        %3183 = vmatprep.subr.bf16.mxu0 0
        %3184 = vmatpush1.bf16.msra.mxu0 0
        %3185 = vmatprep.subr.bf16.mxu0 0
        %3186 = vmatpush1.bf16.msra.mxu0 0
        %3187 = vmatprep.subr.bf16.mxu0 0
        %3188 = vmatpush1.bf16.msra.mxu0 0
        %3189 = vmatprep.subr.bf16.mxu0 0
        %3190 = vmatpush1.bf16.msra.mxu0 0
        %3191 = vmatprep.subr.bf16.mxu0 0
        %3192 = vmatpush1.bf16.msra.mxu0 0
        %3193 = vmatprep.subr.bf16.mxu0 0
        %3194 = vmatpush1.bf16.msra.mxu0 0
        %3195 = vmatprep.subr.bf16.mxu0 0
        %3196 = vmatpush1.bf16.msra.mxu0 0
        %3197 = vmatprep.mubr.bf16.mxu0 0
        %3198 = vmatmul.mubr.bf16.gmra.mrb[0].mxu0 %v3164
        %v3199 = vpop.f32.mrb[0].mxu0
        %v3200 = vadd.f32 0.0, %v3199
        %v3201 = vpop.f32.mrb[0].mxu0
        %v3202 = vadd.f32 0.0, %v3201
        %v3203 = vpop.f32.mrb[0].mxu0
        %v3204 = vpop.f32.mrb[0].mxu0
        %3205 = vdwg.mxu0
        %3206 = vmatprep.subr.bf16.mxu0 %v1484
        %3207 = vmatpush1.bf16.msra.mxu0 %v1483
        %3208 = vmatprep.subr.bf16.mxu0 %v1488
        %3209 = vmatpush1.bf16.msra.mxu0 %v1487
        %3210 = vmatprep.subr.bf16.mxu0 %v1492
        %3211 = vmatpush1.bf16.msra.mxu0 %v1491
        %3212 = vmatprep.subr.bf16.mxu0 %v1496
        %3213 = vmatpush1.bf16.msra.mxu0 %v1495
        %3214 = vmatprep.subr.bf16.mxu0 %v1500
        %3215 = vmatpush1.bf16.msra.mxu0 %v1499
        %3216 = vmatprep.subr.bf16.mxu0 %v1504
        %3217 = vmatpush1.bf16.msra.mxu0 %v1503
        %3218 = vmatprep.subr.bf16.mxu0 %v1508
        %3219 = vmatpush1.bf16.msra.mxu0 %v1507
        %3220 = vmatprep.subr.bf16.mxu0 %v1512
        %3221 = vmatpush1.bf16.msra.mxu0 %v1511
        %3222 = vmatprep.subr.bf16.mxu0 0
        %3223 = vmatpush1.bf16.msra.mxu0 0
        %3224 = vmatprep.subr.bf16.mxu0 0
        %3225 = vmatpush1.bf16.msra.mxu0 0
        %3226 = vmatprep.subr.bf16.mxu0 0
        %3227 = vmatpush1.bf16.msra.mxu0 0
        %3228 = vmatprep.subr.bf16.mxu0 0
        %3229 = vmatpush1.bf16.msra.mxu0 0
        %3230 = vmatprep.subr.bf16.mxu0 0
        %3231 = vmatpush1.bf16.msra.mxu0 0
        %3232 = vmatprep.subr.bf16.mxu0 0
        %3233 = vmatpush1.bf16.msra.mxu0 0
        %3234 = vmatprep.subr.bf16.mxu0 0
        %3235 = vmatpush1.bf16.msra.mxu0 0
        %3236 = vmatprep.subr.bf16.mxu0 0
        %3237 = vmatpush1.bf16.msra.mxu0 0
        %3238 = vmatprep.mubr.bf16.mxu0 0
        %3239 = vmatmul.mubr.bf16.gmra.mrb[0].mxu0 %v3164
        %v3240 = vpop.f32.mrb[0].mxu0
        %v3241 = vadd.f32 0.0, %v3240
        %v3242 = vpop.f32.mrb[0].mxu0
        %v3243 = vadd.f32 0.0, %v3242
        %v3244 = vpop.f32.mrb[0].mxu0
        %v3245 = vpop.f32.mrb[0].mxu0
        %3246 = vdwg.mxu0
        %v3247 = vadd.f32 %v3160, %v3200
        %v3248 = vadd.f32 %v3161, %v3202
        %v3249 = vadd.f32 %v3162, %v3241
        %v3250 = vadd.f32 %v3163, %v3243
        %v3255 = vcombine.low %v3247, %v3248
        %v3256 = vcombine.low %v3249, %v3250
        %v3258 = vunpack.c.l.s4 1983009808
        %v3259 = vunpack.c.0.s8 %v3258
        %v3260 = vlaneseq
        %v3261 = vshrl.u32 %v3260, 7
        %v3262 = vsub.s32 %v3259, %v3261
        %v3263 = vrot.slane %v3255, %v3262
        %v3265 = vunpack.c.l.s4 1983009808
        %v3266 = vunpack.c.0.s8 %v3265
        %v3267 = vlaneseq
        %v3268 = vshrl.u32 %v3267, 7
        %v3269 = vsub.s32 %v3266, %v3268
        %v3270 = vrot.slane %v3256, %v3269
        %v3271 = vcombine.low %v3263, %v3270
        %3273 = vst [vmem:[%s560] sm:$0xff] %v3271
        %3274 = vst.msk [vmem:[%s551] sm:$0x3] %vm3130, %v3112
        %s3275 = smul.u32 %s33, 2
        %s3276 = sadd.s32 %s3275, %s34
        %p3277 = scmp.lt.s32.totalorder %s3276, 3
        %s3278 = scalar_select %p3277, %s3276, 3
        %s3279 = smul.addr %s3278, 2
        %s3280 = scalar_lea.vmem %s9, %s3279
        %p3281 = scmp.lt.s32.totalorder %s33, 1
        %s3282 = scalar_select %p3281, %s33, 1
        %s3283 = smul.addr %s3282, 2
        %s3284 = scalar_lea.vmem %s10, %s3283
        %p3285 = scmp.lt.s32.totalorder %s33, 1
        %s3286 = scalar_select %p3285, %s33, 1
        %s3287 = smul.addr %s3286, 2
        %s3288 = scalar_lea.vmem %s11, %s3287
        %p3289 = scmp.lt.s32.totalorder %s33, 1
        %s3290 = scalar_select %p3289, %s33, 1
        %s3291 = smul.addr %s3290, 4
        %s3292 = smul.addr %s3291, 2
        %s3293 = scalar_lea.vmem %s12, %s3292
        // Predicated region
        $region77: #{clam_mb_forward.1} parent=55 // pred_check
          %p3294 = pneg %p265
        $region78: #{clam_mb_forward.1} parent=55 // pred_check_branch
          %3296 = sbr.rel (%p3294) target = $region80
        $region79: #{clam_mb_forward.1} parent=55 // pred_region
          %s3297 = smul.u32 %s33, 2
          %s3298 = sadd.s32 %s3297, %s34
        $region80: #{clam_mb_forward.1} parent=55 // pred_fallthru
          _
        // Predicated region
        $region81: #{clam_mb_forward.1} parent=55 // pred_check
          %p3299 = pneg %p291
        $region82: #{clam_mb_forward.1} parent=55 // pred_check_branch
          %3301 = sbr.rel (%p3299) target = $region84
        $region83: #{clam_mb_forward.1} parent=55 // pred_region
          _
        $region84: #{clam_mb_forward.1} parent=55 // pred_fallthru
          _
        // Predicated region
        $region85: #{clam_mb_forward.1} parent=55 // pred_check
          %p3302 = pneg %p317
        $region86: #{clam_mb_forward.1} parent=55 // pred_check_branch
          %3304 = sbr.rel (%p3302) target = $region88
        $region87: #{clam_mb_forward.1} parent=55 // pred_region
          _
        $region88: #{clam_mb_forward.1} parent=55 // pred_fallthru
          _
        // Predicated region
        $region89: #{clam_mb_forward.1} parent=55 // pred_check
          %p3305 = pneg %p343
        $region90: #{clam_mb_forward.1} parent=55 // pred_check_branch
          %3307 = sbr.rel (%p3305) target = $region92
        $region91: #{clam_mb_forward.1} parent=55 // pred_region
          _
        $region92: #{clam_mb_forward.1} parent=55 // pred_fallthru
          _
      $region56: #{clam_mb_forward.1} parent=5 // pred_fallthru
        _
      %p3308 = scmp.le.s32.totalorder 2, %s24
      // Predicated region
      $region93: #{clam_mb_forward.1} parent=5 // pred_check
        %p3309 = pneg %p3308
      $region94: #{clam_mb_forward.1} parent=5 // pred_check_branch
        %3311 = sbr.rel (%p3309) target = $region96
      $region95: #{clam_mb_forward.1} parent=5 // pred_region
        %s3312 = ssub.s32 %s24, 2
        // Predicated region
        $region97: #{clam_mb_forward.1} parent=95 // pred_check
          %p3313 = pneg %p271
        $region98: #{clam_mb_forward.1} parent=95 // pred_check_branch
          %3315 = sbr.rel (%p3313) target = $region100
        $region99: #{clam_mb_forward.1} parent=95 // pred_region
          %s3316 = smul.u32 %s35, 2
          %s3317 = sadd.s32 %s3316, %s36
          %p3318 = scmp.lt.s32.totalorder %s3317, 3
          %s3319 = scalar_select %p3318, %s3317, 3
          %s3320 = smul.addr %s3319, 2
          %s3321 = scalar_lea.vmem %s9, %s3320
        $region100: #{clam_mb_forward.1} parent=95 // pred_fallthru
          _
        // Predicated region
        $region101: #{clam_mb_forward.1} parent=95 // pred_check
          %p3322 = pneg %p297
        $region102: #{clam_mb_forward.1} parent=95 // pred_check_branch
          %3324 = sbr.rel (%p3322) target = $region104
        $region103: #{clam_mb_forward.1} parent=95 // pred_region
          %p3325 = scmp.lt.s32.totalorder %s35, 1
          %s3326 = scalar_select %p3325, %s35, 1
          %s3327 = smul.addr %s3326, 2
          %s3328 = scalar_lea.vmem %s10, %s3327
        $region104: #{clam_mb_forward.1} parent=95 // pred_fallthru
          _
        // Predicated region
        $region105: #{clam_mb_forward.1} parent=95 // pred_check
          %p3329 = pneg %p323
        $region106: #{clam_mb_forward.1} parent=95 // pred_check_branch
          %3331 = sbr.rel (%p3329) target = $region108
        $region107: #{clam_mb_forward.1} parent=95 // pred_region
          %p3332 = scmp.lt.s32.totalorder %s35, 1
          %s3333 = scalar_select %p3332, %s35, 1
          %s3334 = smul.addr %s3333, 2
          %s3335 = scalar_lea.vmem %s11, %s3334
        $region108: #{clam_mb_forward.1} parent=95 // pred_fallthru
          _
        // Predicated region
        $region109: #{clam_mb_forward.1} parent=95 // pred_check
          %p3336 = pneg %p349
        $region110: #{clam_mb_forward.1} parent=95 // pred_check_branch
          %3338 = sbr.rel (%p3336) target = $region112
        $region111: #{clam_mb_forward.1} parent=95 // pred_region
          %p3339 = scmp.lt.s32.totalorder %s35, 1
          %s3340 = scalar_select %p3339, %s35, 1
          %s3341 = smul.addr %s3340, 4
          %s3342 = smul.addr %s3341, 2
          %s3343 = scalar_lea.vmem %s12, %s3342
        $region112: #{clam_mb_forward.1} parent=95 // pred_fallthru
          _
      $region96: #{clam_mb_forward.1} parent=5 // pred_fallthru
        _
    $region6: #{clam_mb_forward.1} parent=1 // loop_footer
      %s28 = sadd.s32 1, %s24
    $region7: #{clam_mb_forward.1} parent=1 // loop_footer_branch
      %23 = sbr.rel target = $region3
    $region8: #{clam_mb_forward.1} parent=1 // loop_exit
      _
    %3344 = vsyncpa [#allocation3], 1
    %s3345 = scalar_lea.sflag [#allocation3], 1
    %3346 = vsyncpa %s3345, 1
    %3347 = vsyncpa [#allocation5], 1
    %3348 = vsyncpa [#allocation8], 1

</llo_original>
